<compile_context>
chip_gen: v6e
topology: v6e:2x2x1
jax: 0.10.0
libtpu: 0.0.40
codegen_flags: <defaults>
</compile_context>

<pallas_src>
import functools
import math

import jax
import jax.numpy as jnp
from jax.experimental import pallas as pl
from jax.experimental.pallas import tpu as pltpu


_TARGET_TILE = 512          # sweet spot for mem-bound relayout (per perf sweep)
_MAX_BLOCK_BYTES = 8 << 20  # 8 MiB per block -> 4 buffers = 32 MiB worst case


def _permute_kernel(x_ref, o_ref, *, dims):
    # Input block shape permuted by `dims` equals the output block shape.
    o_ref[...] = jnp.transpose(x_ref[...], dims)


def _pick_tile(length, align, target, max_elems):
    """Largest tile that divides `length`, is a multiple of `align`, and is
    <= min(target, max_elems); falls back to the full axis (always legal)."""
    cap = min(target, max_elems)
    if length <= cap:
        return length
    cap = min(max(cap, align), length)
    for t in range(cap, 0, -1):
        if t % align == 0 and length % t == 0:
            return t
    return length


def permute_pallas(x, dims):
    dims = tuple(int(d) for d in dims)
    ndim = x.ndim
    assert sorted(dims) == list(range(ndim)), "dims must be a permutation"

    # Degenerate cases: nothing to tile.
    if ndim <= 1 or x.size == 0:
        return jnp.transpose(x, dims)

    in_shape = x.shape
    out_shape = tuple(in_shape[d] for d in dims)
    itemsize = jnp.dtype(x.dtype).itemsize
    sublane_mult = {4: 8, 2: 16, 1: 32}.get(itemsize, 8)

    # Tile along the output's leading axis, which is input axis dims[0].
    in_axis = dims[0]
    length = in_shape[in_axis]

    # Alignment required for a *partial* tile along that axis
    # (a full-axis tile is always legal regardless).
    align = 1
    if in_axis == ndim - 1:              # input lane axis
        align = 128
    elif in_axis == ndim - 2:            # input sublane axis
        align = max(align, sublane_mult)
    if ndim == 1:                        # output axis 0 would be the lane axis
        align = max(align, 128)
    elif ndim == 2:                      # output axis 0 is the sublane axis
        align = max(align, sublane_mult)

    # Cap block bytes so double-buffered in+out blocks fit scoped VMEM.
    other_elems = max(1, x.size // length)
    max_elems = max(1, _MAX_BLOCK_BYTES // (other_elems * itemsize))
    tile = _pick_tile(length, align, _TARGET_TILE, max_elems)

    grid = (length // tile,)

    # Input block: `tile` along the tiled axis, full extent elsewhere
    # (last-two dims are either full or 128/8-aligned -> legal).
    in_block = tuple(tile if ax == in_axis else in_shape[ax]
                     for ax in range(ndim))

    def in_index_map(i):
        return tuple(i if ax == in_axis else 0 for ax in range(ndim))

    # Output block: `tile` along output axis 0, full extent elsewhere ->
    # last two dims are full-extent -> dense, unmasked stores.
    out_block = (tile,) + out_shape[1:]

    def out_index_map(i):
        return (i,) + (0,) * (ndim - 1)

    # VMEM budget: input + output blocks, each double-buffered.
    block_bytes = math.prod(in_block) * itemsize
    vmem_needed = 4 * block_bytes
    cp_kwargs = dict(dimension_semantics=("parallel",))
    if vmem_needed > (32 << 20):
        cp_kwargs["vmem_limit_bytes"] = int(min(vmem_needed + (2 << 20),
                                                128 << 20))

    nbytes = x.size * itemsize
    cost = pl.CostEstimate(flops=0, transcendentals=0,
                           bytes_accessed=2 * nbytes)

    return pl.pallas_call(
        functools.partial(_permute_kernel, dims=dims),
        out_shape=jax.ShapeDtypeStruct(out_shape, x.dtype),
        grid_spec=pltpu.PrefetchScalarGridSpec(
            num_scalar_prefetch=0,
            grid=grid,
            in_specs=[pl.BlockSpec(in_block, in_index_map)],
            out_specs=pl.BlockSpec(out_block, out_index_map),
        ),
        compiler_params=pltpu.CompilerParams(**cp_kwargs),
        cost_estimate=cost,
    )(x)


class Permute:
    """JAX/Pallas mirror of bonito's Permute module."""

    def __init__(self, dims):
        self.dims = tuple(dims)

    def __call__(self, x):
        return permute_pallas(x, self.dims)

    def to_dict(self, include_weights=False):
        return {"dims": list(self.dims)}


if __name__ == "__main__":
    key = jax.random.PRNGKey(0)
    # (N, C, T) -> permute(2, 0, 1) -> (T, N, C), as used in bonito encoders.
    # T=1024 keeps the array tiny but exercises the 512-wide tiling (2 steps).
    N, C, T = 2, 4, 1024
    x = jax.random.normal(key, (N, C, T), dtype=jnp.float32)

    mod = Permute((2, 0, 1))
    y = jax.block_until_ready(mod(x))
    ref = jnp.transpose(x, (2, 0, 1))
    assert y.shape == (T, N, C), y.shape
    assert y.dtype == x.dtype
    assert jnp.array_equal(y, ref), "permute mismatch vs jnp.transpose reference"

    # A dims pattern that previously risked a lane-width-1 output block:
    # input axis 0 goes to the output's last axis. Falls back to a full-axis
    # tile (single dense block) and stays correct.
    mod2 = Permute((1, 2, 0))
    y2 = jax.block_until_ready(mod2(x))
    ref2 = jnp.transpose(x, (1, 2, 0))
    assert y2.shape == (C, T, N), y2.shape
    assert jnp.array_equal(y2, ref2), "permute mismatch for dims=(1,2,0)"

    print("KERNEL_OK")
</pallas_src>

<mosaic_0001>
module attributes {stable_mosaic.version = 11 : i64} {
  func.func @_permute_kernel(%arg0: i32, %arg1: memref<2x4x512xf32, #tpu.memory_space<vmem>>, %arg2: memref<512x2x4xf32, #tpu.memory_space<vmem>>) attributes {dimension_semantics = [#tpu.dimension_semantics<parallel>], iteration_bounds = array<i64: 2>, scalar_prefetch = 0 : i64, scratch_operands = 0 : i64, tpu.core_type = #tpu.core_type<tc>, window_params = [{transform_indices = @transform_0, window_bounds = array<i64: 2, 4, 512>}, {transform_indices = @transform_1, window_bounds = array<i64: 512, 2, 4>}]} {
    %c0 = arith.constant 0 : index
    %c0_0 = arith.constant 0 : index
    %c0_1 = arith.constant 0 : index
    %0 = vector.load %arg1[%c0, %c0_0, %c0_1] : memref<2x4x512xf32, #tpu.memory_space<vmem>>, vector<2x4x512xf32>
    %1 = tpu.transpose %0, [2, 0, 1] : vector<2x4x512xf32> -> vector<512x2x4xf32>
    %c0_2 = arith.constant 0 : index
    %c0_3 = arith.constant 0 : index
    %c0_4 = arith.constant 0 : index
    %2 = vector.load %arg2[%c0_2, %c0_3, %c0_4] : memref<512x2x4xf32, #tpu.memory_space<vmem>>, vector<512x2x4xf32>
    tpu.vector_store %arg2[%c0_2, %c0_3, %c0_4], %1 {strides = array<i32>} : memref<512x2x4xf32, #tpu.memory_space<vmem>>, vector<512x2x4xf32>,
    return
  }
  func.func @transform_0(%arg0: i32) -> (i32, i32, i32) {
    %c0_i32 = arith.constant 0 : i32
    %c0_i32_0 = arith.constant 0 : i32
    %c0_i32_1 = arith.constant 0 : i32
    return %c0_i32, %c0_i32_0, %arg0 : i32, i32, i32
  }
  func.func @transform_1(%arg0: i32) -> (i32, i32, i32) {
    %c0_i32 = arith.constant 0 : i32
    %c0_i32_0 = arith.constant 0 : i32
    %c0_i32_1 = arith.constant 0 : i32
    return %arg0, %c0_i32, %c0_i32_0 : i32, i32, i32
  }
}

</mosaic_0001>

<llo_original>
// kernel: tpu_custom_call.1
$region0: #{tpu_custom_call.1}
  #allocation0 [shape = 'u32[]', space=smem, size = 0x4, offset = 0x4, fixed_abs, tag = 'smem constant byte address 0x4 - core index']
  #allocation1 [shape = 'u32[144,128]{1,0:T(1,128)}', space=vmem, size = 0x12000, scoped, tag = 'internal scratch']
  %s0 = inlined_call_operand.hbm [shape: f32[2,4,1024], index: 0, kind: input, shape index: {}]
  %s1 = inlined_call_operand.vmem [shape: f32[1024,2,4], index: 1, kind: output, shape index: {}]
  %s2 = sld [smem:[#allocation0]]
  $region41: #{tpu_custom_call.1} parent=0
    _
  %s4 = ssub.s32 1, %s2
  %s5 = scalar_select 0, %s4, %s2
  $region1: #{tpu_custom_call.1} parent=0
    #allocation2 [shape = 'u8[32768]{0}', space=vmem, size = 0x8000, scoped, tag = 'input window, operand 0']
    #allocation3 [shape = 's32[2]{0}', space=sflag, size = 0x8, scoped, tag = 'scoped memory for tpu_custom_call.1']
    %6 = vsyncpa [#allocation3], 0
    %s7 = scalar_lea.sflag [#allocation3], 1
    %8 = vsyncpa %s7, 0
    loop: start=0, step=1, limit=4
    $region2: #{tpu_custom_call.1} parent=1 // loop_pre_header
      _
    $region3: #{tpu_custom_call.1} parent=1 // loop_header
      %s10 = sphi 0, %s14
      %p11 = scmp.ge.s32.totalorder %s10, 4
      %s20 = sphi 0, %s22
      %s23 = sphi 0, %s20
      %s24 = sphi 0, %s23
      %s40 = sphi 0, %s24
      %s46 = sphi 0, %s48
      %s49 = sphi 0, %s46
      %s50 = sphi 0, %s49
      %s66 = sphi 0, %s50
    $region4: #{tpu_custom_call.1} parent=1 // loop_header_branch
      %13 = sbr.rel (%p11) target = $region8
    $region5: #{tpu_custom_call.1} parent=1 // loop_body
      %s15 = ssub.s32 %s10, 1
      %s16 = ssub.s32 %s10, 2
      %s17 = sadd.s32 %s10, 1
      %s18 = ssub.s32 %s10, %s17
      %p19 = scmp.eq.s32.totalorder %s18, 0
      %s21 = sadd.s32 %s20, 1
      %s22 = scalar_select %p19, %s20, %s21
      %p25 = pneg %p19
      %p26 = scmp.eq.s32.totalorder %s10, 1
      %p27 = por %p25, %p26
      %p28 = scmp.ne.s32.totalorder %s20, %s23
      %p29 = scmp.eq.s32.totalorder %s10, 0
      %p30 = por %p28, %p29
      %p31 = scmp.ne.s32.totalorder %s20, %s23
      %p32 = scmp.eq.s32.totalorder %s15, 1
      %p33 = por %p31, %p32
      %p34 = scmp.ne.s32.totalorder %s23, %s24
      %p35 = scmp.eq.s32.totalorder %s15, 0
      %p36 = por %p34, %p35
      %p37 = scmp.ne.s32.totalorder %s23, %s24
      %p38 = scmp.eq.s32.totalorder %s16, 1
      %p39 = por %p37, %p38
      %p41 = scmp.ne.s32.totalorder %s24, %s40
      %p42 = scmp.eq.s32.totalorder %s16, 0
      %p43 = por %p41, %p42
      %s44 = ssub.s32 %s10, %s17
      %p45 = scmp.eq.s32.totalorder %s44, 0
      %s47 = sadd.s32 %s46, 1
      %s48 = scalar_select %p45, %s46, %s47
      %p51 = pneg %p45
      %p52 = scmp.eq.s32.totalorder %s10, 1
      %p53 = por %p51, %p52
      %p54 = scmp.ne.s32.totalorder %s46, %s49
      %p55 = scmp.eq.s32.totalorder %s10, 0
      %p56 = por %p54, %p55
      %p57 = scmp.ne.s32.totalorder %s46, %s49
      %p58 = scmp.eq.s32.totalorder %s15, 1
      %p59 = por %p57, %p58
      %p60 = scmp.ne.s32.totalorder %s49, %s50
      %p61 = scmp.eq.s32.totalorder %s15, 0
      %p62 = por %p60, %p61
      %p63 = scmp.ne.s32.totalorder %s49, %s50
      %p64 = scmp.eq.s32.totalorder %s16, 1
      %p65 = por %p63, %p64
      %p67 = scmp.ne.s32.totalorder %s50, %s66
      %p68 = scmp.eq.s32.totalorder %s16, 0
      %p69 = por %p67, %p68
      %p70 = scmp.le.s32.totalorder 1, %s10
      %p71 = scmp.lt.s32.totalorder %s10, 3
      %p72 = pnand %p70, %p71
      %p73 = pneg %p72
      // Predicated region
      $region9: #{tpu_custom_call.1} parent=5 // pred_check
        _
      $region10: #{tpu_custom_call.1} parent=5 // pred_check_branch
        %75 = sbr.rel (%p72) target = $region12
      $region11: #{tpu_custom_call.1} parent=5 // pred_region
        %s76 = ssub.s32 %s10, 1
      $region12: #{tpu_custom_call.1} parent=5 // pred_fallthru
        _
      %p77 = scmp.lt.s32.totalorder %s10, 2
      // Predicated region
      $region13: #{tpu_custom_call.1} parent=5 // pred_check
        %p78 = pneg %p77
      $region14: #{tpu_custom_call.1} parent=5 // pred_check_branch
        %80 = sbr.rel (%p78) target = $region16
      $region15: #{tpu_custom_call.1} parent=5 // pred_region
        // Predicated region
        $region17: #{tpu_custom_call.1} parent=15 // pred_check
          %p81 = pneg %p30
        $region18: #{tpu_custom_call.1} parent=15 // pred_check_branch
          %83 = sbr.rel (%p81) target = $region20
        $region19: #{tpu_custom_call.1} parent=15 // pred_region
          %s84 = sand.u32 %s20, 1
          %s85 = scalar_lea.sflag [#allocation3], %s84
          %s86 = sand.u32 %s20, 1
          %s87 = smul.addr %s86, 32
          %s88 = scalar_lea.vmem [#allocation2], %s87
          %s89 = smul.u32 4, %s10
          %s91 = ssub.s32 512, 512
          %92 = vsyncadd %s85, %s91
          %s93 = smul.addr %s89, 64
          %s94 = scalar_lea.hbm %s0, %s93
          %s95 = sshll.u32 %s88, 4
          %s96 = int_to_ptr.vmem [resolvable:$true] %s95
          %101 = dma.hbm_to_vmem [thread:$0]  %s94, 512, %s96, %s85, 512, 256, 16
        $region20: #{tpu_custom_call.1} parent=15 // pred_fallthru
          _
      $region16: #{tpu_custom_call.1} parent=5 // pred_fallthru
        _
      %p102 = scmp.le.s32.totalorder 1, %s10
      %p103 = scmp.lt.s32.totalorder %s10, 3
      %p104 = pnand %p102, %p103
      %p105 = pneg %p104
      // Predicated region
      $region21: #{tpu_custom_call.1} parent=5 // pred_check
        _
      $region22: #{tpu_custom_call.1} parent=5 // pred_check_branch
        %107 = sbr.rel (%p104) target = $region24
      $region23: #{tpu_custom_call.1} parent=5 // pred_region
        %s108 = ssub.s32 %s10, 1
        %s109 = sand.u32 %s23, 1
        %s110 = scalar_lea.sflag [#allocation3], %s109
        %s111 = sand.u32 %s23, 1
        %s112 = smul.addr %s111, 32
        %s113 = scalar_lea.vmem [#allocation2], %s112
        // Predicated region
        $region25: #{tpu_custom_call.1} parent=23 // pred_check
          %p114 = pneg %p36
        $region26: #{tpu_custom_call.1} parent=23 // pred_check_branch
          %116 = sbr.rel (%p114) target = $region28
        $region27: #{tpu_custom_call.1} parent=23 // pred_region
          %117 = dma.done %s110, 512
        $region28: #{tpu_custom_call.1} parent=23 // pred_fallthru
          _
        %s118 = sand.u32 %s23, 1
        %s119 = scalar_lea.sflag [#allocation3], %s118
        %s120 = sand.u32 %s23, 1
        %s121 = smul.addr %s120, 32
        %s122 = scalar_lea.vmem [#allocation2], %s121
        %p123 = pneg %p36
        %p124 = pneg %p33
        %p125 = pneg %p62
        %p126 = pneg %p59
        %s127 = smul.u32 512, %s15
        %p128 = scmp.lt.s32.totalorder %s127, 1023
        %s129 = scalar_select %p128, %s127, 1023
        %s130 = smul.addr %s129, 2
        %s131 = scalar_lea.vmem %s1, %s130
        %s132 = smul.u32 4, %s15
        %s133 = smul.u32 512, %s15
        %p134 = scmp.lt.s32.totalorder %s133, 1023
        %s135 = scalar_select %p134, %s133, 1023
        %s136 = smul.addr %s135, 2
        %s137 = scalar_lea.vmem %s1, %s136
        %s138 = smul.u32 512, %s15
        %v139 = vld [vmem:[%s113] sm:$0xff]
        %v140 = vld [vmem:[%s113 + $0x8] sm:$0xff]
        %v141 = vld [vmem:[%s113 + $0x10] sm:$0xff]
        %v142 = vld [vmem:[%s113 + $0x18] sm:$0xff]
        %v147 = vcombine.high %v139, %v139
        %v148 = vcombine.high %v140, %v140
        %v149 = vcombine.high %v141, %v141
        %v150 = vcombine.high %v142, %v142
        %155 = vxpose.xlu0.b32.start [1/16] %v139, 128
        %156 = vxpose.xlu0.b32.cont [2/16] 0.0, 128
        %157 = vxpose.xlu0.b32.cont [3/16] 0.0, 128
        %158 = vxpose.xlu0.b32.cont [4/16] 0.0, 128
        %159 = vxpose.xlu0.b32.cont [5/16] 0.0, 128
        %160 = vxpose.xlu0.b32.cont [6/16] 0.0, 128
        %161 = vxpose.xlu0.b32.cont [7/16] 0.0, 128
        %162 = vxpose.xlu0.b32.cont [8/16] 0.0, 128
        %163 = vxpose.xlu0.b32.cont [9/16] 0.0, 128
        %164 = vxpose.xlu0.b32.cont [10/16] 0.0, 128
        %165 = vxpose.xlu0.b32.cont [11/16] 0.0, 128
        %166 = vxpose.xlu0.b32.cont [12/16] 0.0, 128
        %167 = vxpose.xlu0.b32.cont [13/16] 0.0, 128
        %168 = vxpose.xlu0.b32.cont [14/16] 0.0, 128
        %169 = vxpose.xlu0.b32.cont [15/16] 0.0, 128
        %170 = vxpose.xlu0.b32.end [16/16] 0.0, 128
        %v171 = vpop.trf.xlu0
        %v172 = vpop.trf.xlu0
        %v173 = vpop.trf.xlu0
        %v174 = vpop.trf.xlu0
        %v175 = vpop.trf.xlu0
        %v176 = vpop.trf.xlu0
        %v177 = vpop.trf.xlu0
        %v178 = vpop.trf.xlu0
        %v179 = vpop.trf.xlu0
        %v180 = vpop.trf.xlu0
        %v181 = vpop.trf.xlu0
        %v182 = vpop.trf.xlu0
        %v183 = vpop.trf.xlu0
        %v184 = vpop.trf.xlu0
        %v185 = vpop.trf.xlu0
        %v186 = vpop.trf.xlu0
        %187 = vxpose.xlu0.b32.start [1/16] %v147, 128
        %188 = vxpose.xlu0.b32.cont [2/16] 0.0, 128
        %189 = vxpose.xlu0.b32.cont [3/16] 0.0, 128
        %190 = vxpose.xlu0.b32.cont [4/16] 0.0, 128
        %191 = vxpose.xlu0.b32.cont [5/16] 0.0, 128
        %192 = vxpose.xlu0.b32.cont [6/16] 0.0, 128
        %193 = vxpose.xlu0.b32.cont [7/16] 0.0, 128
        %194 = vxpose.xlu0.b32.cont [8/16] 0.0, 128
        %195 = vxpose.xlu0.b32.cont [9/16] 0.0, 128
        %196 = vxpose.xlu0.b32.cont [10/16] 0.0, 128
        %197 = vxpose.xlu0.b32.cont [11/16] 0.0, 128
        %198 = vxpose.xlu0.b32.cont [12/16] 0.0, 128
        %199 = vxpose.xlu0.b32.cont [13/16] 0.0, 128
        %200 = vxpose.xlu0.b32.cont [14/16] 0.0, 128
        %201 = vxpose.xlu0.b32.cont [15/16] 0.0, 128
        %202 = vxpose.xlu0.b32.end [16/16] 0.0, 128
        %v203 = vpop.trf.xlu0
        %v204 = vpop.trf.xlu0
        %v205 = vpop.trf.xlu0
        %v206 = vpop.trf.xlu0
        %v207 = vpop.trf.xlu0
        %v208 = vpop.trf.xlu0
        %v209 = vpop.trf.xlu0
        %v210 = vpop.trf.xlu0
        %v211 = vpop.trf.xlu0
        %v212 = vpop.trf.xlu0
        %v213 = vpop.trf.xlu0
        %v214 = vpop.trf.xlu0
        %v215 = vpop.trf.xlu0
        %v216 = vpop.trf.xlu0
        %v217 = vpop.trf.xlu0
        %v218 = vpop.trf.xlu0
        %219 = vxpose.xlu0.b32.start [1/16] %v140, 128
        %220 = vxpose.xlu0.b32.cont [2/16] 0.0, 128
        %221 = vxpose.xlu0.b32.cont [3/16] 0.0, 128
        %222 = vxpose.xlu0.b32.cont [4/16] 0.0, 128
        %223 = vxpose.xlu0.b32.cont [5/16] 0.0, 128
        %224 = vxpose.xlu0.b32.cont [6/16] 0.0, 128
        %225 = vxpose.xlu0.b32.cont [7/16] 0.0, 128
        %226 = vxpose.xlu0.b32.cont [8/16] 0.0, 128
        %227 = vxpose.xlu0.b32.cont [9/16] 0.0, 128
        %228 = vxpose.xlu0.b32.cont [10/16] 0.0, 128
        %229 = vxpose.xlu0.b32.cont [11/16] 0.0, 128
        %230 = vxpose.xlu0.b32.cont [12/16] 0.0, 128
        %231 = vxpose.xlu0.b32.cont [13/16] 0.0, 128
        %232 = vxpose.xlu0.b32.cont [14/16] 0.0, 128
        %233 = vxpose.xlu0.b32.cont [15/16] 0.0, 128
        %234 = vxpose.xlu0.b32.end [16/16] 0.0, 128
        %v235 = vpop.trf.xlu0
        %v236 = vpop.trf.xlu0
        %v237 = vpop.trf.xlu0
        %v238 = vpop.trf.xlu0
        %v239 = vpop.trf.xlu0
        %v240 = vpop.trf.xlu0
        %v241 = vpop.trf.xlu0
        %v242 = vpop.trf.xlu0
        %v243 = vpop.trf.xlu0
        %v244 = vpop.trf.xlu0
        %v245 = vpop.trf.xlu0
        %v246 = vpop.trf.xlu0
        %v247 = vpop.trf.xlu0
        %v248 = vpop.trf.xlu0
        %v249 = vpop.trf.xlu0
        %v250 = vpop.trf.xlu0
        %251 = vxpose.xlu0.b32.start [1/16] %v148, 128
        %252 = vxpose.xlu0.b32.cont [2/16] 0.0, 128
        %253 = vxpose.xlu0.b32.cont [3/16] 0.0, 128
        %254 = vxpose.xlu0.b32.cont [4/16] 0.0, 128
        %255 = vxpose.xlu0.b32.cont [5/16] 0.0, 128
        %256 = vxpose.xlu0.b32.cont [6/16] 0.0, 128
        %257 = vxpose.xlu0.b32.cont [7/16] 0.0, 128
        %258 = vxpose.xlu0.b32.cont [8/16] 0.0, 128
        %259 = vxpose.xlu0.b32.cont [9/16] 0.0, 128
        %260 = vxpose.xlu0.b32.cont [10/16] 0.0, 128
        %261 = vxpose.xlu0.b32.cont [11/16] 0.0, 128
        %262 = vxpose.xlu0.b32.cont [12/16] 0.0, 128
        %263 = vxpose.xlu0.b32.cont [13/16] 0.0, 128
        %264 = vxpose.xlu0.b32.cont [14/16] 0.0, 128
        %265 = vxpose.xlu0.b32.cont [15/16] 0.0, 128
        %266 = vxpose.xlu0.b32.end [16/16] 0.0, 128
        %v267 = vpop.trf.xlu0
        %v268 = vpop.trf.xlu0
        %v269 = vpop.trf.xlu0
        %v270 = vpop.trf.xlu0
        %v271 = vpop.trf.xlu0
        %v272 = vpop.trf.xlu0
        %v273 = vpop.trf.xlu0
        %v274 = vpop.trf.xlu0
        %v275 = vpop.trf.xlu0
        %v276 = vpop.trf.xlu0
        %v277 = vpop.trf.xlu0
        %v278 = vpop.trf.xlu0
        %v279 = vpop.trf.xlu0
        %v280 = vpop.trf.xlu0
        %v281 = vpop.trf.xlu0
        %v282 = vpop.trf.xlu0
        %283 = vxpose.xlu0.b32.start [1/16] %v141, 128
        %284 = vxpose.xlu0.b32.cont [2/16] 0.0, 128
        %285 = vxpose.xlu0.b32.cont [3/16] 0.0, 128
        %286 = vxpose.xlu0.b32.cont [4/16] 0.0, 128
        %287 = vxpose.xlu0.b32.cont [5/16] 0.0, 128
        %288 = vxpose.xlu0.b32.cont [6/16] 0.0, 128
        %289 = vxpose.xlu0.b32.cont [7/16] 0.0, 128
        %290 = vxpose.xlu0.b32.cont [8/16] 0.0, 128
        %291 = vxpose.xlu0.b32.cont [9/16] 0.0, 128
        %292 = vxpose.xlu0.b32.cont [10/16] 0.0, 128
        %293 = vxpose.xlu0.b32.cont [11/16] 0.0, 128
        %294 = vxpose.xlu0.b32.cont [12/16] 0.0, 128
        %295 = vxpose.xlu0.b32.cont [13/16] 0.0, 128
        %296 = vxpose.xlu0.b32.cont [14/16] 0.0, 128
        %297 = vxpose.xlu0.b32.cont [15/16] 0.0, 128
        %298 = vxpose.xlu0.b32.end [16/16] 0.0, 128
        %v299 = vpop.trf.xlu0
        %v300 = vpop.trf.xlu0
        %v301 = vpop.trf.xlu0
        %v302 = vpop.trf.xlu0
        %v303 = vpop.trf.xlu0
        %v304 = vpop.trf.xlu0
        %v305 = vpop.trf.xlu0
        %v306 = vpop.trf.xlu0
        %v307 = vpop.trf.xlu0
        %v308 = vpop.trf.xlu0
        %v309 = vpop.trf.xlu0
        %v310 = vpop.trf.xlu0
        %v311 = vpop.trf.xlu0
        %v312 = vpop.trf.xlu0
        %v313 = vpop.trf.xlu0
        %v314 = vpop.trf.xlu0
        %315 = vxpose.xlu0.b32.start [1/16] %v149, 128
        %316 = vxpose.xlu0.b32.cont [2/16] 0.0, 128
        %317 = vxpose.xlu0.b32.cont [3/16] 0.0, 128
        %318 = vxpose.xlu0.b32.cont [4/16] 0.0, 128
        %319 = vxpose.xlu0.b32.cont [5/16] 0.0, 128
        %320 = vxpose.xlu0.b32.cont [6/16] 0.0, 128
        %321 = vxpose.xlu0.b32.cont [7/16] 0.0, 128
        %322 = vxpose.xlu0.b32.cont [8/16] 0.0, 128
        %323 = vxpose.xlu0.b32.cont [9/16] 0.0, 128
        %324 = vxpose.xlu0.b32.cont [10/16] 0.0, 128
        %325 = vxpose.xlu0.b32.cont [11/16] 0.0, 128
        %326 = vxpose.xlu0.b32.cont [12/16] 0.0, 128
        %327 = vxpose.xlu0.b32.cont [13/16] 0.0, 128
        %328 = vxpose.xlu0.b32.cont [14/16] 0.0, 128
        %329 = vxpose.xlu0.b32.cont [15/16] 0.0, 128
        %330 = vxpose.xlu0.b32.end [16/16] 0.0, 128
        %v331 = vpop.trf.xlu0
        %v332 = vpop.trf.xlu0
        %v333 = vpop.trf.xlu0
        %v334 = vpop.trf.xlu0
        %v335 = vpop.trf.xlu0
        %v336 = vpop.trf.xlu0
        %v337 = vpop.trf.xlu0
        %v338 = vpop.trf.xlu0
        %v339 = vpop.trf.xlu0
        %v340 = vpop.trf.xlu0
        %v341 = vpop.trf.xlu0
        %v342 = vpop.trf.xlu0
        %v343 = vpop.trf.xlu0
        %v344 = vpop.trf.xlu0
        %v345 = vpop.trf.xlu0
        %v346 = vpop.trf.xlu0
        %347 = vxpose.xlu0.b32.start [1/16] %v142, 128
        %348 = vxpose.xlu0.b32.cont [2/16] 0.0, 128
        %349 = vxpose.xlu0.b32.cont [3/16] 0.0, 128
        %350 = vxpose.xlu0.b32.cont [4/16] 0.0, 128
        %351 = vxpose.xlu0.b32.cont [5/16] 0.0, 128
        %352 = vxpose.xlu0.b32.cont [6/16] 0.0, 128
        %353 = vxpose.xlu0.b32.cont [7/16] 0.0, 128
        %354 = vxpose.xlu0.b32.cont [8/16] 0.0, 128
        %355 = vxpose.xlu0.b32.cont [9/16] 0.0, 128
        %356 = vxpose.xlu0.b32.cont [10/16] 0.0, 128
        %357 = vxpose.xlu0.b32.cont [11/16] 0.0, 128
        %358 = vxpose.xlu0.b32.cont [12/16] 0.0, 128
        %359 = vxpose.xlu0.b32.cont [13/16] 0.0, 128
        %360 = vxpose.xlu0.b32.cont [14/16] 0.0, 128
        %361 = vxpose.xlu0.b32.cont [15/16] 0.0, 128
        %362 = vxpose.xlu0.b32.end [16/16] 0.0, 128
        %v363 = vpop.trf.xlu0
        %v364 = vpop.trf.xlu0
        %v365 = vpop.trf.xlu0
        %v366 = vpop.trf.xlu0
        %v367 = vpop.trf.xlu0
        %v368 = vpop.trf.xlu0
        %v369 = vpop.trf.xlu0
        %v370 = vpop.trf.xlu0
        %v371 = vpop.trf.xlu0
        %v372 = vpop.trf.xlu0
        %v373 = vpop.trf.xlu0
        %v374 = vpop.trf.xlu0
        %v375 = vpop.trf.xlu0
        %v376 = vpop.trf.xlu0
        %v377 = vpop.trf.xlu0
        %v378 = vpop.trf.xlu0
        %379 = vxpose.xlu0.b32.start [1/16] %v150, 128
        %380 = vxpose.xlu0.b32.cont [2/16] 0.0, 128
        %381 = vxpose.xlu0.b32.cont [3/16] 0.0, 128
        %382 = vxpose.xlu0.b32.cont [4/16] 0.0, 128
        %383 = vxpose.xlu0.b32.cont [5/16] 0.0, 128
        %384 = vxpose.xlu0.b32.cont [6/16] 0.0, 128
        %385 = vxpose.xlu0.b32.cont [7/16] 0.0, 128
        %386 = vxpose.xlu0.b32.cont [8/16] 0.0, 128
        %387 = vxpose.xlu0.b32.cont [9/16] 0.0, 128
        %388 = vxpose.xlu0.b32.cont [10/16] 0.0, 128
        %389 = vxpose.xlu0.b32.cont [11/16] 0.0, 128
        %390 = vxpose.xlu0.b32.cont [12/16] 0.0, 128
        %391 = vxpose.xlu0.b32.cont [13/16] 0.0, 128
        %392 = vxpose.xlu0.b32.cont [14/16] 0.0, 128
        %393 = vxpose.xlu0.b32.cont [15/16] 0.0, 128
        %394 = vxpose.xlu0.b32.end [16/16] 0.0, 128
        %v395 = vpop.trf.xlu0
        %v396 = vpop.trf.xlu0
        %v397 = vpop.trf.xlu0
        %v398 = vpop.trf.xlu0
        %v399 = vpop.trf.xlu0
        %v400 = vpop.trf.xlu0
        %v401 = vpop.trf.xlu0
        %v402 = vpop.trf.xlu0
        %v403 = vpop.trf.xlu0
        %v404 = vpop.trf.xlu0
        %v405 = vpop.trf.xlu0
        %v406 = vpop.trf.xlu0
        %v407 = vpop.trf.xlu0
        %v408 = vpop.trf.xlu0
        %v409 = vpop.trf.xlu0
        %v410 = vpop.trf.xlu0
        %v411 = vcombine.high %v171, 0.0
        %v413 = vunpack.c.l.s4 1983009808
        %v414 = vunpack.c.0.s8 %v413
        %v415 = vlaneseq
        %v416 = vshrl.u32 %v415, 7
        %v417 = vsub.s32 %v414, %v416
        %v418 = vrot.slane %v171, %v417
        %v420 = vunpack.c.l.s4 1983009808
        %v421 = vunpack.c.0.s8 %v420
        %v422 = vlaneseq
        %v423 = vshrl.u32 %v422, 7
        %v424 = vsub.s32 %v421, %v423
        %v425 = vrot.slane %v411, %v424
        %v426 = vcombine.high %v299, 0.0
        %v428 = vunpack.c.l.s4 1983009808
        %v429 = vunpack.c.0.s8 %v428
        %v430 = vlaneseq
        %v431 = vshrl.u32 %v430, 7
        %v432 = vsub.s32 %v429, %v431
        %v433 = vrot.slane %v299, %v432
        %v435 = vunpack.c.l.s4 1983009808
        %v436 = vunpack.c.0.s8 %v435
        %v437 = vlaneseq
        %v438 = vshrl.u32 %v437, 7
        %v439 = vsub.s32 %v436, %v438
        %v440 = vrot.slane %v426, %v439
        %v441 = vcombine.low %v418, %v433
        %v442 = vcombine.high %v418, %v433
        %v444 = vunpack.c.l.s4 1934713408
        %v445 = vunpack.c.0.s8 %v444
        %v446 = vlaneseq
        %v447 = vshrl.u32 %v446, 7
        %v448 = vsub.s32 %v445, %v447
        %v449 = vrot.slane %v441, %v448
        %v451 = vunpack.c.l.s4 1934713408
        %v452 = vunpack.c.0.s8 %v451
        %v453 = vlaneseq
        %v454 = vshrl.u32 %v453, 7
        %v455 = vsub.s32 %v452, %v454
        %v456 = vrot.slane %v442, %v455
        %v457 = vcombine.low %v425, %v440
        %v458 = vcombine.high %v425, %v440
        %v460 = vunpack.c.l.s4 1934713408
        %v461 = vunpack.c.0.s8 %v460
        %v462 = vlaneseq
        %v463 = vshrl.u32 %v462, 7
        %v464 = vsub.s32 %v461, %v463
        %v465 = vrot.slane %v457, %v464
        %v467 = vunpack.c.l.s4 1934713408
        %v468 = vunpack.c.0.s8 %v467
        %v469 = vlaneseq
        %v470 = vshrl.u32 %v469, 7
        %v471 = vsub.s32 %v468, %v470
        %v472 = vrot.slane %v458, %v471
        %v473 = vcombine.high %v449, 0.0
        %v474 = vcombine.high %v456, 0.0
        %v475 = vcombine.high %v465, 0.0
        %v476 = vcombine.high %v472, 0.0
        %v477 = vcombine.high %v172, 0.0
        %v479 = vunpack.c.l.s4 1983009808
        %v480 = vunpack.c.0.s8 %v479
        %v481 = vlaneseq
        %v482 = vshrl.u32 %v481, 7
        %v483 = vsub.s32 %v480, %v482
        %v484 = vrot.slane %v172, %v483
        %v486 = vunpack.c.l.s4 1983009808
        %v487 = vunpack.c.0.s8 %v486
        %v488 = vlaneseq
        %v489 = vshrl.u32 %v488, 7
        %v490 = vsub.s32 %v487, %v489
        %v491 = vrot.slane %v477, %v490
        %v492 = vcombine.high %v300, 0.0
        %v494 = vunpack.c.l.s4 1983009808
        %v495 = vunpack.c.0.s8 %v494
        %v496 = vlaneseq
        %v497 = vshrl.u32 %v496, 7
        %v498 = vsub.s32 %v495, %v497
        %v499 = vrot.slane %v300, %v498
        %v501 = vunpack.c.l.s4 1983009808
        %v502 = vunpack.c.0.s8 %v501
        %v503 = vlaneseq
        %v504 = vshrl.u32 %v503, 7
        %v505 = vsub.s32 %v502, %v504
        %v506 = vrot.slane %v492, %v505
        %v507 = vcombine.low %v484, %v499
        %v508 = vcombine.high %v484, %v499
        %v510 = vunpack.c.l.s4 1934713408
        %v511 = vunpack.c.0.s8 %v510
        %v512 = vlaneseq
        %v513 = vshrl.u32 %v512, 7
        %v514 = vsub.s32 %v511, %v513
        %v515 = vrot.slane %v507, %v514
        %v517 = vunpack.c.l.s4 1934713408
        %v518 = vunpack.c.0.s8 %v517
        %v519 = vlaneseq
        %v520 = vshrl.u32 %v519, 7
        %v521 = vsub.s32 %v518, %v520
        %v522 = vrot.slane %v508, %v521
        %v523 = vcombine.low %v491, %v506
        %v524 = vcombine.high %v491, %v506
        %v526 = vunpack.c.l.s4 1934713408
        %v527 = vunpack.c.0.s8 %v526
        %v528 = vlaneseq
        %v529 = vshrl.u32 %v528, 7
        %v530 = vsub.s32 %v527, %v529
        %v531 = vrot.slane %v523, %v530
        %v533 = vunpack.c.l.s4 1934713408
        %v534 = vunpack.c.0.s8 %v533
        %v535 = vlaneseq
        %v536 = vshrl.u32 %v535, 7
        %v537 = vsub.s32 %v534, %v536
        %v538 = vrot.slane %v524, %v537
        %v539 = vcombine.high %v515, 0.0
        %v540 = vcombine.high %v522, 0.0
        %v541 = vcombine.high %v531, 0.0
        %v542 = vcombine.high %v538, 0.0
        %v543 = vcombine.high %v173, 0.0
        %v545 = vunpack.c.l.s4 1983009808
        %v546 = vunpack.c.0.s8 %v545
        %v547 = vlaneseq
        %v548 = vshrl.u32 %v547, 7
        %v549 = vsub.s32 %v546, %v548
        %v550 = vrot.slane %v173, %v549
        %v552 = vunpack.c.l.s4 1983009808
        %v553 = vunpack.c.0.s8 %v552
        %v554 = vlaneseq
        %v555 = vshrl.u32 %v554, 7
        %v556 = vsub.s32 %v553, %v555
        %v557 = vrot.slane %v543, %v556
        %v558 = vcombine.high %v301, 0.0
        %v560 = vunpack.c.l.s4 1983009808
        %v561 = vunpack.c.0.s8 %v560
        %v562 = vlaneseq
        %v563 = vshrl.u32 %v562, 7
        %v564 = vsub.s32 %v561, %v563
        %v565 = vrot.slane %v301, %v564
        %v567 = vunpack.c.l.s4 1983009808
        %v568 = vunpack.c.0.s8 %v567
        %v569 = vlaneseq
        %v570 = vshrl.u32 %v569, 7
        %v571 = vsub.s32 %v568, %v570
        %v572 = vrot.slane %v558, %v571
        %v573 = vcombine.low %v550, %v565
        %v574 = vcombine.high %v550, %v565
        %v576 = vunpack.c.l.s4 1934713408
        %v577 = vunpack.c.0.s8 %v576
        %v578 = vlaneseq
        %v579 = vshrl.u32 %v578, 7
        %v580 = vsub.s32 %v577, %v579
        %v581 = vrot.slane %v573, %v580
        %v583 = vunpack.c.l.s4 1934713408
        %v584 = vunpack.c.0.s8 %v583
        %v585 = vlaneseq
        %v586 = vshrl.u32 %v585, 7
        %v587 = vsub.s32 %v584, %v586
        %v588 = vrot.slane %v574, %v587
        %v589 = vcombine.low %v557, %v572
        %v590 = vcombine.high %v557, %v572
        %v592 = vunpack.c.l.s4 1934713408
        %v593 = vunpack.c.0.s8 %v592
        %v594 = vlaneseq
        %v595 = vshrl.u32 %v594, 7
        %v596 = vsub.s32 %v593, %v595
        %v597 = vrot.slane %v589, %v596
        %v599 = vunpack.c.l.s4 1934713408
        %v600 = vunpack.c.0.s8 %v599
        %v601 = vlaneseq
        %v602 = vshrl.u32 %v601, 7
        %v603 = vsub.s32 %v600, %v602
        %v604 = vrot.slane %v590, %v603
        %v605 = vcombine.high %v581, 0.0
        %v606 = vcombine.high %v588, 0.0
        %v607 = vcombine.high %v597, 0.0
        %v608 = vcombine.high %v604, 0.0
        %v609 = vcombine.high %v174, 0.0
        %v611 = vunpack.c.l.s4 1983009808
        %v612 = vunpack.c.0.s8 %v611
        %v613 = vlaneseq
        %v614 = vshrl.u32 %v613, 7
        %v615 = vsub.s32 %v612, %v614
        %v616 = vrot.slane %v174, %v615
        %v618 = vunpack.c.l.s4 1983009808
        %v619 = vunpack.c.0.s8 %v618
        %v620 = vlaneseq
        %v621 = vshrl.u32 %v620, 7
        %v622 = vsub.s32 %v619, %v621
        %v623 = vrot.slane %v609, %v622
        %v624 = vcombine.high %v302, 0.0
        %v626 = vunpack.c.l.s4 1983009808
        %v627 = vunpack.c.0.s8 %v626
        %v628 = vlaneseq
        %v629 = vshrl.u32 %v628, 7
        %v630 = vsub.s32 %v627, %v629
        %v631 = vrot.slane %v302, %v630
        %v633 = vunpack.c.l.s4 1983009808
        %v634 = vunpack.c.0.s8 %v633
        %v635 = vlaneseq
        %v636 = vshrl.u32 %v635, 7
        %v637 = vsub.s32 %v634, %v636
        %v638 = vrot.slane %v624, %v637
        %v639 = vcombine.low %v616, %v631
        %v640 = vcombine.high %v616, %v631
        %v642 = vunpack.c.l.s4 1934713408
        %v643 = vunpack.c.0.s8 %v642
        %v644 = vlaneseq
        %v645 = vshrl.u32 %v644, 7
        %v646 = vsub.s32 %v643, %v645
        %v647 = vrot.slane %v639, %v646
        %v649 = vunpack.c.l.s4 1934713408
        %v650 = vunpack.c.0.s8 %v649
        %v651 = vlaneseq
        %v652 = vshrl.u32 %v651, 7
        %v653 = vsub.s32 %v650, %v652
        %v654 = vrot.slane %v640, %v653
        %v655 = vcombine.low %v623, %v638
        %v656 = vcombine.high %v623, %v638
        %v658 = vunpack.c.l.s4 1934713408
        %v659 = vunpack.c.0.s8 %v658
        %v660 = vlaneseq
        %v661 = vshrl.u32 %v660, 7
        %v662 = vsub.s32 %v659, %v661
        %v663 = vrot.slane %v655, %v662
        %v665 = vunpack.c.l.s4 1934713408
        %v666 = vunpack.c.0.s8 %v665
        %v667 = vlaneseq
        %v668 = vshrl.u32 %v667, 7
        %v669 = vsub.s32 %v666, %v668
        %v670 = vrot.slane %v656, %v669
        %v671 = vcombine.high %v647, 0.0
        %v672 = vcombine.high %v654, 0.0
        %v673 = vcombine.high %v663, 0.0
        %v674 = vcombine.high %v670, 0.0
        %v675 = vcombine.high %v175, 0.0
        %v677 = vunpack.c.l.s4 1983009808
        %v678 = vunpack.c.0.s8 %v677
        %v679 = vlaneseq
        %v680 = vshrl.u32 %v679, 7
        %v681 = vsub.s32 %v678, %v680
        %v682 = vrot.slane %v175, %v681
        %v684 = vunpack.c.l.s4 1983009808
        %v685 = vunpack.c.0.s8 %v684
        %v686 = vlaneseq
        %v687 = vshrl.u32 %v686, 7
        %v688 = vsub.s32 %v685, %v687
        %v689 = vrot.slane %v675, %v688
        %v690 = vcombine.high %v303, 0.0
        %v692 = vunpack.c.l.s4 1983009808
        %v693 = vunpack.c.0.s8 %v692
        %v694 = vlaneseq
        %v695 = vshrl.u32 %v694, 7
        %v696 = vsub.s32 %v693, %v695
        %v697 = vrot.slane %v303, %v696
        %v699 = vunpack.c.l.s4 1983009808
        %v700 = vunpack.c.0.s8 %v699
        %v701 = vlaneseq
        %v702 = vshrl.u32 %v701, 7
        %v703 = vsub.s32 %v700, %v702
        %v704 = vrot.slane %v690, %v703
        %v705 = vcombine.low %v682, %v697
        %v706 = vcombine.high %v682, %v697
        %v708 = vunpack.c.l.s4 1934713408
        %v709 = vunpack.c.0.s8 %v708
        %v710 = vlaneseq
        %v711 = vshrl.u32 %v710, 7
        %v712 = vsub.s32 %v709, %v711
        %v713 = vrot.slane %v705, %v712
        %v715 = vunpack.c.l.s4 1934713408
        %v716 = vunpack.c.0.s8 %v715
        %v717 = vlaneseq
        %v718 = vshrl.u32 %v717, 7
        %v719 = vsub.s32 %v716, %v718
        %v720 = vrot.slane %v706, %v719
        %v721 = vcombine.low %v689, %v704
        %v722 = vcombine.high %v689, %v704
        %v724 = vunpack.c.l.s4 1934713408
        %v725 = vunpack.c.0.s8 %v724
        %v726 = vlaneseq
        %v727 = vshrl.u32 %v726, 7
        %v728 = vsub.s32 %v725, %v727
        %v729 = vrot.slane %v721, %v728
        %v731 = vunpack.c.l.s4 1934713408
        %v732 = vunpack.c.0.s8 %v731
        %v733 = vlaneseq
        %v734 = vshrl.u32 %v733, 7
        %v735 = vsub.s32 %v732, %v734
        %v736 = vrot.slane %v722, %v735
        %v737 = vcombine.high %v713, 0.0
        %v738 = vcombine.high %v720, 0.0
        %v739 = vcombine.high %v729, 0.0
        %v740 = vcombine.high %v736, 0.0
        %v741 = vcombine.high %v176, 0.0
        %v743 = vunpack.c.l.s4 1983009808
        %v744 = vunpack.c.0.s8 %v743
        %v745 = vlaneseq
        %v746 = vshrl.u32 %v745, 7
        %v747 = vsub.s32 %v744, %v746
        %v748 = vrot.slane %v176, %v747
        %v750 = vunpack.c.l.s4 1983009808
        %v751 = vunpack.c.0.s8 %v750
        %v752 = vlaneseq
        %v753 = vshrl.u32 %v752, 7
        %v754 = vsub.s32 %v751, %v753
        %v755 = vrot.slane %v741, %v754
        %v756 = vcombine.high %v304, 0.0
        %v758 = vunpack.c.l.s4 1983009808
        %v759 = vunpack.c.0.s8 %v758
        %v760 = vlaneseq
        %v761 = vshrl.u32 %v760, 7
        %v762 = vsub.s32 %v759, %v761
        %v763 = vrot.slane %v304, %v762
        %v765 = vunpack.c.l.s4 1983009808
        %v766 = vunpack.c.0.s8 %v765
        %v767 = vlaneseq
        %v768 = vshrl.u32 %v767, 7
        %v769 = vsub.s32 %v766, %v768
        %v770 = vrot.slane %v756, %v769
        %v771 = vcombine.low %v748, %v763
        %v772 = vcombine.high %v748, %v763
        %v774 = vunpack.c.l.s4 1934713408
        %v775 = vunpack.c.0.s8 %v774
        %v776 = vlaneseq
        %v777 = vshrl.u32 %v776, 7
        %v778 = vsub.s32 %v775, %v777
        %v779 = vrot.slane %v771, %v778
        %v781 = vunpack.c.l.s4 1934713408
        %v782 = vunpack.c.0.s8 %v781
        %v783 = vlaneseq
        %v784 = vshrl.u32 %v783, 7
        %v785 = vsub.s32 %v782, %v784
        %v786 = vrot.slane %v772, %v785
        %v787 = vcombine.low %v755, %v770
        %v788 = vcombine.high %v755, %v770
        %v790 = vunpack.c.l.s4 1934713408
        %v791 = vunpack.c.0.s8 %v790
        %v792 = vlaneseq
        %v793 = vshrl.u32 %v792, 7
        %v794 = vsub.s32 %v791, %v793
        %v795 = vrot.slane %v787, %v794
        %v797 = vunpack.c.l.s4 1934713408
        %v798 = vunpack.c.0.s8 %v797
        %v799 = vlaneseq
        %v800 = vshrl.u32 %v799, 7
        %v801 = vsub.s32 %v798, %v800
        %v802 = vrot.slane %v788, %v801
        %v803 = vcombine.high %v779, 0.0
        %v804 = vcombine.high %v786, 0.0
        %v805 = vcombine.high %v795, 0.0
        %v806 = vcombine.high %v802, 0.0
        %v807 = vcombine.high %v177, 0.0
        %v809 = vunpack.c.l.s4 1983009808
        %v810 = vunpack.c.0.s8 %v809
        %v811 = vlaneseq
        %v812 = vshrl.u32 %v811, 7
        %v813 = vsub.s32 %v810, %v812
        %v814 = vrot.slane %v177, %v813
        %v816 = vunpack.c.l.s4 1983009808
        %v817 = vunpack.c.0.s8 %v816
        %v818 = vlaneseq
        %v819 = vshrl.u32 %v818, 7
        %v820 = vsub.s32 %v817, %v819
        %v821 = vrot.slane %v807, %v820
        %v822 = vcombine.high %v305, 0.0
        %v824 = vunpack.c.l.s4 1983009808
        %v825 = vunpack.c.0.s8 %v824
        %v826 = vlaneseq
        %v827 = vshrl.u32 %v826, 7
        %v828 = vsub.s32 %v825, %v827
        %v829 = vrot.slane %v305, %v828
        %v831 = vunpack.c.l.s4 1983009808
        %v832 = vunpack.c.0.s8 %v831
        %v833 = vlaneseq
        %v834 = vshrl.u32 %v833, 7
        %v835 = vsub.s32 %v832, %v834
        %v836 = vrot.slane %v822, %v835
        %v837 = vcombine.low %v814, %v829
        %v838 = vcombine.high %v814, %v829
        %v840 = vunpack.c.l.s4 1934713408
        %v841 = vunpack.c.0.s8 %v840
        %v842 = vlaneseq
        %v843 = vshrl.u32 %v842, 7
        %v844 = vsub.s32 %v841, %v843
        %v845 = vrot.slane %v837, %v844
        %v847 = vunpack.c.l.s4 1934713408
        %v848 = vunpack.c.0.s8 %v847
        %v849 = vlaneseq
        %v850 = vshrl.u32 %v849, 7
        %v851 = vsub.s32 %v848, %v850
        %v852 = vrot.slane %v838, %v851
        %v853 = vcombine.low %v821, %v836
        %v854 = vcombine.high %v821, %v836
        %v856 = vunpack.c.l.s4 1934713408
        %v857 = vunpack.c.0.s8 %v856
        %v858 = vlaneseq
        %v859 = vshrl.u32 %v858, 7
        %v860 = vsub.s32 %v857, %v859
        %v861 = vrot.slane %v853, %v860
        %v863 = vunpack.c.l.s4 1934713408
        %v864 = vunpack.c.0.s8 %v863
        %v865 = vlaneseq
        %v866 = vshrl.u32 %v865, 7
        %v867 = vsub.s32 %v864, %v866
        %v868 = vrot.slane %v854, %v867
        %v869 = vcombine.high %v845, 0.0
        %v870 = vcombine.high %v852, 0.0
        %v871 = vcombine.high %v861, 0.0
        %v872 = vcombine.high %v868, 0.0
        %v873 = vcombine.high %v178, 0.0
        %v875 = vunpack.c.l.s4 1983009808
        %v876 = vunpack.c.0.s8 %v875
        %v877 = vlaneseq
        %v878 = vshrl.u32 %v877, 7
        %v879 = vsub.s32 %v876, %v878
        %v880 = vrot.slane %v178, %v879
        %v882 = vunpack.c.l.s4 1983009808
        %v883 = vunpack.c.0.s8 %v882
        %v884 = vlaneseq
        %v885 = vshrl.u32 %v884, 7
        %v886 = vsub.s32 %v883, %v885
        %v887 = vrot.slane %v873, %v886
        %v888 = vcombine.high %v306, 0.0
        %v890 = vunpack.c.l.s4 1983009808
        %v891 = vunpack.c.0.s8 %v890
        %v892 = vlaneseq
        %v893 = vshrl.u32 %v892, 7
        %v894 = vsub.s32 %v891, %v893
        %v895 = vrot.slane %v306, %v894
        %v897 = vunpack.c.l.s4 1983009808
        %v898 = vunpack.c.0.s8 %v897
        %v899 = vlaneseq
        %v900 = vshrl.u32 %v899, 7
        %v901 = vsub.s32 %v898, %v900
        %v902 = vrot.slane %v888, %v901
        %v903 = vcombine.low %v880, %v895
        %v904 = vcombine.high %v880, %v895
        %v906 = vunpack.c.l.s4 1934713408
        %v907 = vunpack.c.0.s8 %v906
        %v908 = vlaneseq
        %v909 = vshrl.u32 %v908, 7
        %v910 = vsub.s32 %v907, %v909
        %v911 = vrot.slane %v903, %v910
        %v913 = vunpack.c.l.s4 1934713408
        %v914 = vunpack.c.0.s8 %v913
        %v915 = vlaneseq
        %v916 = vshrl.u32 %v915, 7
        %v917 = vsub.s32 %v914, %v916
        %v918 = vrot.slane %v904, %v917
        %v919 = vcombine.low %v887, %v902
        %v920 = vcombine.high %v887, %v902
        %v922 = vunpack.c.l.s4 1934713408
        %v923 = vunpack.c.0.s8 %v922
        %v924 = vlaneseq
        %v925 = vshrl.u32 %v924, 7
        %v926 = vsub.s32 %v923, %v925
        %v927 = vrot.slane %v919, %v926
        %v929 = vunpack.c.l.s4 1934713408
        %v930 = vunpack.c.0.s8 %v929
        %v931 = vlaneseq
        %v932 = vshrl.u32 %v931, 7
        %v933 = vsub.s32 %v930, %v932
        %v934 = vrot.slane %v920, %v933
        %v935 = vcombine.high %v911, 0.0
        %v936 = vcombine.high %v918, 0.0
        %v937 = vcombine.high %v927, 0.0
        %v938 = vcombine.high %v934, 0.0
        %v939 = vcombine.high %v179, 0.0
        %v941 = vunpack.c.l.s4 1983009808
        %v942 = vunpack.c.0.s8 %v941
        %v943 = vlaneseq
        %v944 = vshrl.u32 %v943, 7
        %v945 = vsub.s32 %v942, %v944
        %v946 = vrot.slane %v179, %v945
        %v948 = vunpack.c.l.s4 1983009808
        %v949 = vunpack.c.0.s8 %v948
        %v950 = vlaneseq
        %v951 = vshrl.u32 %v950, 7
        %v952 = vsub.s32 %v949, %v951
        %v953 = vrot.slane %v939, %v952
        %v954 = vcombine.high %v307, 0.0
        %v956 = vunpack.c.l.s4 1983009808
        %v957 = vunpack.c.0.s8 %v956
        %v958 = vlaneseq
        %v959 = vshrl.u32 %v958, 7
        %v960 = vsub.s32 %v957, %v959
        %v961 = vrot.slane %v307, %v960
        %v963 = vunpack.c.l.s4 1983009808
        %v964 = vunpack.c.0.s8 %v963
        %v965 = vlaneseq
        %v966 = vshrl.u32 %v965, 7
        %v967 = vsub.s32 %v964, %v966
        %v968 = vrot.slane %v954, %v967
        %v969 = vcombine.low %v946, %v961
        %v970 = vcombine.high %v946, %v961
        %v972 = vunpack.c.l.s4 1934713408
        %v973 = vunpack.c.0.s8 %v972
        %v974 = vlaneseq
        %v975 = vshrl.u32 %v974, 7
        %v976 = vsub.s32 %v973, %v975
        %v977 = vrot.slane %v969, %v976
        %v979 = vunpack.c.l.s4 1934713408
        %v980 = vunpack.c.0.s8 %v979
        %v981 = vlaneseq
        %v982 = vshrl.u32 %v981, 7
        %v983 = vsub.s32 %v980, %v982
        %v984 = vrot.slane %v970, %v983
        %v985 = vcombine.low %v953, %v968
        %v986 = vcombine.high %v953, %v968
        %v988 = vunpack.c.l.s4 1934713408
        %v989 = vunpack.c.0.s8 %v988
        %v990 = vlaneseq
        %v991 = vshrl.u32 %v990, 7
        %v992 = vsub.s32 %v989, %v991
        %v993 = vrot.slane %v985, %v992
        %v995 = vunpack.c.l.s4 1934713408
        %v996 = vunpack.c.0.s8 %v995
        %v997 = vlaneseq
        %v998 = vshrl.u32 %v997, 7
        %v999 = vsub.s32 %v996, %v998
        %v1000 = vrot.slane %v986, %v999
        %v1001 = vcombine.high %v977, 0.0
        %v1002 = vcombine.high %v984, 0.0
        %v1003 = vcombine.high %v993, 0.0
        %v1004 = vcombine.high %v1000, 0.0
        %v1005 = vcombine.high %v180, 0.0
        %v1007 = vunpack.c.l.s4 1983009808
        %v1008 = vunpack.c.0.s8 %v1007
        %v1009 = vlaneseq
        %v1010 = vshrl.u32 %v1009, 7
        %v1011 = vsub.s32 %v1008, %v1010
        %v1012 = vrot.slane %v180, %v1011
        %v1014 = vunpack.c.l.s4 1983009808
        %v1015 = vunpack.c.0.s8 %v1014
        %v1016 = vlaneseq
        %v1017 = vshrl.u32 %v1016, 7
        %v1018 = vsub.s32 %v1015, %v1017
        %v1019 = vrot.slane %v1005, %v1018
        %v1020 = vcombine.high %v308, 0.0
        %v1022 = vunpack.c.l.s4 1983009808
        %v1023 = vunpack.c.0.s8 %v1022
        %v1024 = vlaneseq
        %v1025 = vshrl.u32 %v1024, 7
        %v1026 = vsub.s32 %v1023, %v1025
        %v1027 = vrot.slane %v308, %v1026
        %v1029 = vunpack.c.l.s4 1983009808
        %v1030 = vunpack.c.0.s8 %v1029
        %v1031 = vlaneseq
        %v1032 = vshrl.u32 %v1031, 7
        %v1033 = vsub.s32 %v1030, %v1032
        %v1034 = vrot.slane %v1020, %v1033
        %v1035 = vcombine.low %v1012, %v1027
        %v1036 = vcombine.high %v1012, %v1027
        %v1038 = vunpack.c.l.s4 1934713408
        %v1039 = vunpack.c.0.s8 %v1038
        %v1040 = vlaneseq
        %v1041 = vshrl.u32 %v1040, 7
        %v1042 = vsub.s32 %v1039, %v1041
        %v1043 = vrot.slane %v1035, %v1042
        %v1045 = vunpack.c.l.s4 1934713408
        %v1046 = vunpack.c.0.s8 %v1045
        %v1047 = vlaneseq
        %v1048 = vshrl.u32 %v1047, 7
        %v1049 = vsub.s32 %v1046, %v1048
        %v1050 = vrot.slane %v1036, %v1049
        %v1051 = vcombine.low %v1019, %v1034
        %v1052 = vcombine.high %v1019, %v1034
        %v1054 = vunpack.c.l.s4 1934713408
        %v1055 = vunpack.c.0.s8 %v1054
        %v1056 = vlaneseq
        %v1057 = vshrl.u32 %v1056, 7
        %v1058 = vsub.s32 %v1055, %v1057
        %v1059 = vrot.slane %v1051, %v1058
        %v1061 = vunpack.c.l.s4 1934713408
        %v1062 = vunpack.c.0.s8 %v1061
        %v1063 = vlaneseq
        %v1064 = vshrl.u32 %v1063, 7
        %v1065 = vsub.s32 %v1062, %v1064
        %v1066 = vrot.slane %v1052, %v1065
        %v1067 = vcombine.high %v1043, 0.0
        %v1068 = vcombine.high %v1050, 0.0
        %v1069 = vcombine.high %v1059, 0.0
        %v1070 = vcombine.high %v1066, 0.0
        %v1071 = vcombine.high %v181, 0.0
        %v1073 = vunpack.c.l.s4 1983009808
        %v1074 = vunpack.c.0.s8 %v1073
        %v1075 = vlaneseq
        %v1076 = vshrl.u32 %v1075, 7
        %v1077 = vsub.s32 %v1074, %v1076
        %v1078 = vrot.slane %v181, %v1077
        %v1080 = vunpack.c.l.s4 1983009808
        %v1081 = vunpack.c.0.s8 %v1080
        %v1082 = vlaneseq
        %v1083 = vshrl.u32 %v1082, 7
        %v1084 = vsub.s32 %v1081, %v1083
        %v1085 = vrot.slane %v1071, %v1084
        %v1086 = vcombine.high %v309, 0.0
        %v1088 = vunpack.c.l.s4 1983009808
        %v1089 = vunpack.c.0.s8 %v1088
        %v1090 = vlaneseq
        %v1091 = vshrl.u32 %v1090, 7
        %v1092 = vsub.s32 %v1089, %v1091
        %v1093 = vrot.slane %v309, %v1092
        %v1095 = vunpack.c.l.s4 1983009808
        %v1096 = vunpack.c.0.s8 %v1095
        %v1097 = vlaneseq
        %v1098 = vshrl.u32 %v1097, 7
        %v1099 = vsub.s32 %v1096, %v1098
        %v1100 = vrot.slane %v1086, %v1099
        %v1101 = vcombine.low %v1078, %v1093
        %v1102 = vcombine.high %v1078, %v1093
        %v1104 = vunpack.c.l.s4 1934713408
        %v1105 = vunpack.c.0.s8 %v1104
        %v1106 = vlaneseq
        %v1107 = vshrl.u32 %v1106, 7
        %v1108 = vsub.s32 %v1105, %v1107
        %v1109 = vrot.slane %v1101, %v1108
        %v1111 = vunpack.c.l.s4 1934713408
        %v1112 = vunpack.c.0.s8 %v1111
        %v1113 = vlaneseq
        %v1114 = vshrl.u32 %v1113, 7
        %v1115 = vsub.s32 %v1112, %v1114
        %v1116 = vrot.slane %v1102, %v1115
        %v1117 = vcombine.low %v1085, %v1100
        %v1118 = vcombine.high %v1085, %v1100
        %v1120 = vunpack.c.l.s4 1934713408
        %v1121 = vunpack.c.0.s8 %v1120
        %v1122 = vlaneseq
        %v1123 = vshrl.u32 %v1122, 7
        %v1124 = vsub.s32 %v1121, %v1123
        %v1125 = vrot.slane %v1117, %v1124
        %v1127 = vunpack.c.l.s4 1934713408
        %v1128 = vunpack.c.0.s8 %v1127
        %v1129 = vlaneseq
        %v1130 = vshrl.u32 %v1129, 7
        %v1131 = vsub.s32 %v1128, %v1130
        %v1132 = vrot.slane %v1118, %v1131
        %v1133 = vcombine.high %v1109, 0.0
        %v1134 = vcombine.high %v1116, 0.0
        %v1135 = vcombine.high %v1125, 0.0
        %v1136 = vcombine.high %v1132, 0.0
        %v1137 = vcombine.high %v182, 0.0
        %v1139 = vunpack.c.l.s4 1983009808
        %v1140 = vunpack.c.0.s8 %v1139
        %v1141 = vlaneseq
        %v1142 = vshrl.u32 %v1141, 7
        %v1143 = vsub.s32 %v1140, %v1142
        %v1144 = vrot.slane %v182, %v1143
        %v1146 = vunpack.c.l.s4 1983009808
        %v1147 = vunpack.c.0.s8 %v1146
        %v1148 = vlaneseq
        %v1149 = vshrl.u32 %v1148, 7
        %v1150 = vsub.s32 %v1147, %v1149
        %v1151 = vrot.slane %v1137, %v1150
        %v1152 = vcombine.high %v310, 0.0
        %v1154 = vunpack.c.l.s4 1983009808
        %v1155 = vunpack.c.0.s8 %v1154
        %v1156 = vlaneseq
        %v1157 = vshrl.u32 %v1156, 7
        %v1158 = vsub.s32 %v1155, %v1157
        %v1159 = vrot.slane %v310, %v1158
        %v1161 = vunpack.c.l.s4 1983009808
        %v1162 = vunpack.c.0.s8 %v1161
        %v1163 = vlaneseq
        %v1164 = vshrl.u32 %v1163, 7
        %v1165 = vsub.s32 %v1162, %v1164
        %v1166 = vrot.slane %v1152, %v1165
        %v1167 = vcombine.low %v1144, %v1159
        %v1168 = vcombine.high %v1144, %v1159
        %v1170 = vunpack.c.l.s4 1934713408
        %v1171 = vunpack.c.0.s8 %v1170
        %v1172 = vlaneseq
        %v1173 = vshrl.u32 %v1172, 7
        %v1174 = vsub.s32 %v1171, %v1173
        %v1175 = vrot.slane %v1167, %v1174
        %v1177 = vunpack.c.l.s4 1934713408
        %v1178 = vunpack.c.0.s8 %v1177
        %v1179 = vlaneseq
        %v1180 = vshrl.u32 %v1179, 7
        %v1181 = vsub.s32 %v1178, %v1180
        %v1182 = vrot.slane %v1168, %v1181
        %v1183 = vcombine.low %v1151, %v1166
        %v1184 = vcombine.high %v1151, %v1166
        %v1186 = vunpack.c.l.s4 1934713408
        %v1187 = vunpack.c.0.s8 %v1186
        %v1188 = vlaneseq
        %v1189 = vshrl.u32 %v1188, 7
        %v1190 = vsub.s32 %v1187, %v1189
        %v1191 = vrot.slane %v1183, %v1190
        %v1193 = vunpack.c.l.s4 1934713408
        %v1194 = vunpack.c.0.s8 %v1193
        %v1195 = vlaneseq
        %v1196 = vshrl.u32 %v1195, 7
        %v1197 = vsub.s32 %v1194, %v1196
        %v1198 = vrot.slane %v1184, %v1197
        %v1199 = vcombine.high %v1175, 0.0
        %v1200 = vcombine.high %v1182, 0.0
        %v1201 = vcombine.high %v1191, 0.0
        %v1202 = vcombine.high %v1198, 0.0
        %v1203 = vcombine.high %v183, 0.0
        %v1205 = vunpack.c.l.s4 1983009808
        %v1206 = vunpack.c.0.s8 %v1205
        %v1207 = vlaneseq
        %v1208 = vshrl.u32 %v1207, 7
        %v1209 = vsub.s32 %v1206, %v1208
        %v1210 = vrot.slane %v183, %v1209
        %v1212 = vunpack.c.l.s4 1983009808
        %v1213 = vunpack.c.0.s8 %v1212
        %v1214 = vlaneseq
        %v1215 = vshrl.u32 %v1214, 7
        %v1216 = vsub.s32 %v1213, %v1215
        %v1217 = vrot.slane %v1203, %v1216
        %v1218 = vcombine.high %v311, 0.0
        %v1220 = vunpack.c.l.s4 1983009808
        %v1221 = vunpack.c.0.s8 %v1220
        %v1222 = vlaneseq
        %v1223 = vshrl.u32 %v1222, 7
        %v1224 = vsub.s32 %v1221, %v1223
        %v1225 = vrot.slane %v311, %v1224
        %v1227 = vunpack.c.l.s4 1983009808
        %v1228 = vunpack.c.0.s8 %v1227
        %v1229 = vlaneseq
        %v1230 = vshrl.u32 %v1229, 7
        %v1231 = vsub.s32 %v1228, %v1230
        %v1232 = vrot.slane %v1218, %v1231
        %v1233 = vcombine.low %v1210, %v1225
        %v1234 = vcombine.high %v1210, %v1225
        %v1236 = vunpack.c.l.s4 1934713408
        %v1237 = vunpack.c.0.s8 %v1236
        %v1238 = vlaneseq
        %v1239 = vshrl.u32 %v1238, 7
        %v1240 = vsub.s32 %v1237, %v1239
        %v1241 = vrot.slane %v1233, %v1240
        %v1243 = vunpack.c.l.s4 1934713408
        %v1244 = vunpack.c.0.s8 %v1243
        %v1245 = vlaneseq
        %v1246 = vshrl.u32 %v1245, 7
        %v1247 = vsub.s32 %v1244, %v1246
        %v1248 = vrot.slane %v1234, %v1247
        %v1249 = vcombine.low %v1217, %v1232
        %v1250 = vcombine.high %v1217, %v1232
        %v1252 = vunpack.c.l.s4 1934713408
        %v1253 = vunpack.c.0.s8 %v1252
        %v1254 = vlaneseq
        %v1255 = vshrl.u32 %v1254, 7
        %v1256 = vsub.s32 %v1253, %v1255
        %v1257 = vrot.slane %v1249, %v1256
        %v1259 = vunpack.c.l.s4 1934713408
        %v1260 = vunpack.c.0.s8 %v1259
        %v1261 = vlaneseq
        %v1262 = vshrl.u32 %v1261, 7
        %v1263 = vsub.s32 %v1260, %v1262
        %v1264 = vrot.slane %v1250, %v1263
        %v1265 = vcombine.high %v1241, 0.0
        %v1266 = vcombine.high %v1248, 0.0
        %v1267 = vcombine.high %v1257, 0.0
        %v1268 = vcombine.high %v1264, 0.0
        %v1269 = vcombine.high %v184, 0.0
        %v1271 = vunpack.c.l.s4 1983009808
        %v1272 = vunpack.c.0.s8 %v1271
        %v1273 = vlaneseq
        %v1274 = vshrl.u32 %v1273, 7
        %v1275 = vsub.s32 %v1272, %v1274
        %v1276 = vrot.slane %v184, %v1275
        %v1278 = vunpack.c.l.s4 1983009808
        %v1279 = vunpack.c.0.s8 %v1278
        %v1280 = vlaneseq
        %v1281 = vshrl.u32 %v1280, 7
        %v1282 = vsub.s32 %v1279, %v1281
        %v1283 = vrot.slane %v1269, %v1282
        %v1284 = vcombine.high %v312, 0.0
        %v1286 = vunpack.c.l.s4 1983009808
        %v1287 = vunpack.c.0.s8 %v1286
        %v1288 = vlaneseq
        %v1289 = vshrl.u32 %v1288, 7
        %v1290 = vsub.s32 %v1287, %v1289
        %v1291 = vrot.slane %v312, %v1290
        %v1293 = vunpack.c.l.s4 1983009808
        %v1294 = vunpack.c.0.s8 %v1293
        %v1295 = vlaneseq
        %v1296 = vshrl.u32 %v1295, 7
        %v1297 = vsub.s32 %v1294, %v1296
        %v1298 = vrot.slane %v1284, %v1297
        %v1299 = vcombine.low %v1276, %v1291
        %v1300 = vcombine.high %v1276, %v1291
        %v1302 = vunpack.c.l.s4 1934713408
        %v1303 = vunpack.c.0.s8 %v1302
        %v1304 = vlaneseq
        %v1305 = vshrl.u32 %v1304, 7
        %v1306 = vsub.s32 %v1303, %v1305
        %v1307 = vrot.slane %v1299, %v1306
        %v1309 = vunpack.c.l.s4 1934713408
        %v1310 = vunpack.c.0.s8 %v1309
        %v1311 = vlaneseq
        %v1312 = vshrl.u32 %v1311, 7
        %v1313 = vsub.s32 %v1310, %v1312
        %v1314 = vrot.slane %v1300, %v1313
        %v1315 = vcombine.low %v1283, %v1298
        %v1316 = vcombine.high %v1283, %v1298
        %v1318 = vunpack.c.l.s4 1934713408
        %v1319 = vunpack.c.0.s8 %v1318
        %v1320 = vlaneseq
        %v1321 = vshrl.u32 %v1320, 7
        %v1322 = vsub.s32 %v1319, %v1321
        %v1323 = vrot.slane %v1315, %v1322
        %v1325 = vunpack.c.l.s4 1934713408
        %v1326 = vunpack.c.0.s8 %v1325
        %v1327 = vlaneseq
        %v1328 = vshrl.u32 %v1327, 7
        %v1329 = vsub.s32 %v1326, %v1328
        %v1330 = vrot.slane %v1316, %v1329
        %v1331 = vcombine.high %v1307, 0.0
        %v1332 = vcombine.high %v1314, 0.0
        %v1333 = vcombine.high %v1323, 0.0
        %v1334 = vcombine.high %v1330, 0.0
        %v1335 = vcombine.high %v185, 0.0
        %v1337 = vunpack.c.l.s4 1983009808
        %v1338 = vunpack.c.0.s8 %v1337
        %v1339 = vlaneseq
        %v1340 = vshrl.u32 %v1339, 7
        %v1341 = vsub.s32 %v1338, %v1340
        %v1342 = vrot.slane %v185, %v1341
        %v1344 = vunpack.c.l.s4 1983009808
        %v1345 = vunpack.c.0.s8 %v1344
        %v1346 = vlaneseq
        %v1347 = vshrl.u32 %v1346, 7
        %v1348 = vsub.s32 %v1345, %v1347
        %v1349 = vrot.slane %v1335, %v1348
        %v1350 = vcombine.high %v313, 0.0
        %v1352 = vunpack.c.l.s4 1983009808
        %v1353 = vunpack.c.0.s8 %v1352
        %v1354 = vlaneseq
        %v1355 = vshrl.u32 %v1354, 7
        %v1356 = vsub.s32 %v1353, %v1355
        %v1357 = vrot.slane %v313, %v1356
        %v1359 = vunpack.c.l.s4 1983009808
        %v1360 = vunpack.c.0.s8 %v1359
        %v1361 = vlaneseq
        %v1362 = vshrl.u32 %v1361, 7
        %v1363 = vsub.s32 %v1360, %v1362
        %v1364 = vrot.slane %v1350, %v1363
        %v1365 = vcombine.low %v1342, %v1357
        %v1366 = vcombine.high %v1342, %v1357
        %v1368 = vunpack.c.l.s4 1934713408
        %v1369 = vunpack.c.0.s8 %v1368
        %v1370 = vlaneseq
        %v1371 = vshrl.u32 %v1370, 7
        %v1372 = vsub.s32 %v1369, %v1371
        %v1373 = vrot.slane %v1365, %v1372
        %v1375 = vunpack.c.l.s4 1934713408
        %v1376 = vunpack.c.0.s8 %v1375
        %v1377 = vlaneseq
        %v1378 = vshrl.u32 %v1377, 7
        %v1379 = vsub.s32 %v1376, %v1378
        %v1380 = vrot.slane %v1366, %v1379
        %v1381 = vcombine.low %v1349, %v1364
        %v1382 = vcombine.high %v1349, %v1364
        %v1384 = vunpack.c.l.s4 1934713408
        %v1385 = vunpack.c.0.s8 %v1384
        %v1386 = vlaneseq
        %v1387 = vshrl.u32 %v1386, 7
        %v1388 = vsub.s32 %v1385, %v1387
        %v1389 = vrot.slane %v1381, %v1388
        %v1391 = vunpack.c.l.s4 1934713408
        %v1392 = vunpack.c.0.s8 %v1391
        %v1393 = vlaneseq
        %v1394 = vshrl.u32 %v1393, 7
        %v1395 = vsub.s32 %v1392, %v1394
        %v1396 = vrot.slane %v1382, %v1395
        %v1397 = vcombine.high %v1373, 0.0
        %v1398 = vcombine.high %v1380, 0.0
        %v1399 = vcombine.high %v1389, 0.0
        %v1400 = vcombine.high %v1396, 0.0
        %v1401 = vcombine.high %v186, 0.0
        %v1403 = vunpack.c.l.s4 1983009808
        %v1404 = vunpack.c.0.s8 %v1403
        %v1405 = vlaneseq
        %v1406 = vshrl.u32 %v1405, 7
        %v1407 = vsub.s32 %v1404, %v1406
        %v1408 = vrot.slane %v186, %v1407
        %v1410 = vunpack.c.l.s4 1983009808
        %v1411 = vunpack.c.0.s8 %v1410
        %v1412 = vlaneseq
        %v1413 = vshrl.u32 %v1412, 7
        %v1414 = vsub.s32 %v1411, %v1413
        %v1415 = vrot.slane %v1401, %v1414
        %v1416 = vcombine.high %v314, 0.0
        %v1418 = vunpack.c.l.s4 1983009808
        %v1419 = vunpack.c.0.s8 %v1418
        %v1420 = vlaneseq
        %v1421 = vshrl.u32 %v1420, 7
        %v1422 = vsub.s32 %v1419, %v1421
        %v1423 = vrot.slane %v314, %v1422
        %v1425 = vunpack.c.l.s4 1983009808
        %v1426 = vunpack.c.0.s8 %v1425
        %v1427 = vlaneseq
        %v1428 = vshrl.u32 %v1427, 7
        %v1429 = vsub.s32 %v1426, %v1428
        %v1430 = vrot.slane %v1416, %v1429
        %v1431 = vcombine.low %v1408, %v1423
        %v1432 = vcombine.high %v1408, %v1423
        %v1434 = vunpack.c.l.s4 1934713408
        %v1435 = vunpack.c.0.s8 %v1434
        %v1436 = vlaneseq
        %v1437 = vshrl.u32 %v1436, 7
        %v1438 = vsub.s32 %v1435, %v1437
        %v1439 = vrot.slane %v1431, %v1438
        %v1441 = vunpack.c.l.s4 1934713408
        %v1442 = vunpack.c.0.s8 %v1441
        %v1443 = vlaneseq
        %v1444 = vshrl.u32 %v1443, 7
        %v1445 = vsub.s32 %v1442, %v1444
        %v1446 = vrot.slane %v1432, %v1445
        %v1447 = vcombine.low %v1415, %v1430
        %v1448 = vcombine.high %v1415, %v1430
        %v1450 = vunpack.c.l.s4 1934713408
        %v1451 = vunpack.c.0.s8 %v1450
        %v1452 = vlaneseq
        %v1453 = vshrl.u32 %v1452, 7
        %v1454 = vsub.s32 %v1451, %v1453
        %v1455 = vrot.slane %v1447, %v1454
        %v1457 = vunpack.c.l.s4 1934713408
        %v1458 = vunpack.c.0.s8 %v1457
        %v1459 = vlaneseq
        %v1460 = vshrl.u32 %v1459, 7
        %v1461 = vsub.s32 %v1458, %v1460
        %v1462 = vrot.slane %v1448, %v1461
        %v1463 = vcombine.high %v1439, 0.0
        %v1464 = vcombine.high %v1446, 0.0
        %v1465 = vcombine.high %v1455, 0.0
        %v1466 = vcombine.high %v1462, 0.0
        %v1467 = vcombine.high %v203, 0.0
        %v1469 = vunpack.c.l.s4 1983009808
        %v1470 = vunpack.c.0.s8 %v1469
        %v1471 = vlaneseq
        %v1472 = vshrl.u32 %v1471, 7
        %v1473 = vsub.s32 %v1470, %v1472
        %v1474 = vrot.slane %v203, %v1473
        %v1476 = vunpack.c.l.s4 1983009808
        %v1477 = vunpack.c.0.s8 %v1476
        %v1478 = vlaneseq
        %v1479 = vshrl.u32 %v1478, 7
        %v1480 = vsub.s32 %v1477, %v1479
        %v1481 = vrot.slane %v1467, %v1480
        %v1482 = vcombine.high %v331, 0.0
        %v1484 = vunpack.c.l.s4 1983009808
        %v1485 = vunpack.c.0.s8 %v1484
        %v1486 = vlaneseq
        %v1487 = vshrl.u32 %v1486, 7
        %v1488 = vsub.s32 %v1485, %v1487
        %v1489 = vrot.slane %v331, %v1488
        %v1491 = vunpack.c.l.s4 1983009808
        %v1492 = vunpack.c.0.s8 %v1491
        %v1493 = vlaneseq
        %v1494 = vshrl.u32 %v1493, 7
        %v1495 = vsub.s32 %v1492, %v1494
        %v1496 = vrot.slane %v1482, %v1495
        %v1497 = vcombine.low %v1474, %v1489
        %v1498 = vcombine.high %v1474, %v1489
        %v1500 = vunpack.c.l.s4 1934713408
        %v1501 = vunpack.c.0.s8 %v1500
        %v1502 = vlaneseq
        %v1503 = vshrl.u32 %v1502, 7
        %v1504 = vsub.s32 %v1501, %v1503
        %v1505 = vrot.slane %v1497, %v1504
        %v1507 = vunpack.c.l.s4 1934713408
        %v1508 = vunpack.c.0.s8 %v1507
        %v1509 = vlaneseq
        %v1510 = vshrl.u32 %v1509, 7
        %v1511 = vsub.s32 %v1508, %v1510
        %v1512 = vrot.slane %v1498, %v1511
        %v1513 = vcombine.low %v1481, %v1496
        %v1514 = vcombine.high %v1481, %v1496
        %v1516 = vunpack.c.l.s4 1934713408
        %v1517 = vunpack.c.0.s8 %v1516
        %v1518 = vlaneseq
        %v1519 = vshrl.u32 %v1518, 7
        %v1520 = vsub.s32 %v1517, %v1519
        %v1521 = vrot.slane %v1513, %v1520
        %v1523 = vunpack.c.l.s4 1934713408
        %v1524 = vunpack.c.0.s8 %v1523
        %v1525 = vlaneseq
        %v1526 = vshrl.u32 %v1525, 7
        %v1527 = vsub.s32 %v1524, %v1526
        %v1528 = vrot.slane %v1514, %v1527
        %v1529 = vcombine.high %v1505, 0.0
        %v1530 = vcombine.high %v1512, 0.0
        %v1531 = vcombine.high %v1521, 0.0
        %v1532 = vcombine.high %v1528, 0.0
        %v1533 = vcombine.high %v204, 0.0
        %v1535 = vunpack.c.l.s4 1983009808
        %v1536 = vunpack.c.0.s8 %v1535
        %v1537 = vlaneseq
        %v1538 = vshrl.u32 %v1537, 7
        %v1539 = vsub.s32 %v1536, %v1538
        %v1540 = vrot.slane %v204, %v1539
        %v1542 = vunpack.c.l.s4 1983009808
        %v1543 = vunpack.c.0.s8 %v1542
        %v1544 = vlaneseq
        %v1545 = vshrl.u32 %v1544, 7
        %v1546 = vsub.s32 %v1543, %v1545
        %v1547 = vrot.slane %v1533, %v1546
        %v1548 = vcombine.high %v332, 0.0
        %v1550 = vunpack.c.l.s4 1983009808
        %v1551 = vunpack.c.0.s8 %v1550
        %v1552 = vlaneseq
        %v1553 = vshrl.u32 %v1552, 7
        %v1554 = vsub.s32 %v1551, %v1553
        %v1555 = vrot.slane %v332, %v1554
        %v1557 = vunpack.c.l.s4 1983009808
        %v1558 = vunpack.c.0.s8 %v1557
        %v1559 = vlaneseq
        %v1560 = vshrl.u32 %v1559, 7
        %v1561 = vsub.s32 %v1558, %v1560
        %v1562 = vrot.slane %v1548, %v1561
        %v1563 = vcombine.low %v1540, %v1555
        %v1564 = vcombine.high %v1540, %v1555
        %v1566 = vunpack.c.l.s4 1934713408
        %v1567 = vunpack.c.0.s8 %v1566
        %v1568 = vlaneseq
        %v1569 = vshrl.u32 %v1568, 7
        %v1570 = vsub.s32 %v1567, %v1569
        %v1571 = vrot.slane %v1563, %v1570
        %v1573 = vunpack.c.l.s4 1934713408
        %v1574 = vunpack.c.0.s8 %v1573
        %v1575 = vlaneseq
        %v1576 = vshrl.u32 %v1575, 7
        %v1577 = vsub.s32 %v1574, %v1576
        %v1578 = vrot.slane %v1564, %v1577
        %v1579 = vcombine.low %v1547, %v1562
        %v1580 = vcombine.high %v1547, %v1562
        %v1582 = vunpack.c.l.s4 1934713408
        %v1583 = vunpack.c.0.s8 %v1582
        %v1584 = vlaneseq
        %v1585 = vshrl.u32 %v1584, 7
        %v1586 = vsub.s32 %v1583, %v1585
        %v1587 = vrot.slane %v1579, %v1586
        %v1589 = vunpack.c.l.s4 1934713408
        %v1590 = vunpack.c.0.s8 %v1589
        %v1591 = vlaneseq
        %v1592 = vshrl.u32 %v1591, 7
        %v1593 = vsub.s32 %v1590, %v1592
        %v1594 = vrot.slane %v1580, %v1593
        %v1595 = vcombine.high %v1571, 0.0
        %v1596 = vcombine.high %v1578, 0.0
        %v1597 = vcombine.high %v1587, 0.0
        %v1598 = vcombine.high %v1594, 0.0
        %v1599 = vcombine.high %v205, 0.0
        %v1601 = vunpack.c.l.s4 1983009808
        %v1602 = vunpack.c.0.s8 %v1601
        %v1603 = vlaneseq
        %v1604 = vshrl.u32 %v1603, 7
        %v1605 = vsub.s32 %v1602, %v1604
        %v1606 = vrot.slane %v205, %v1605
        %v1608 = vunpack.c.l.s4 1983009808
        %v1609 = vunpack.c.0.s8 %v1608
        %v1610 = vlaneseq
        %v1611 = vshrl.u32 %v1610, 7
        %v1612 = vsub.s32 %v1609, %v1611
        %v1613 = vrot.slane %v1599, %v1612
        %v1614 = vcombine.high %v333, 0.0
        %v1616 = vunpack.c.l.s4 1983009808
        %v1617 = vunpack.c.0.s8 %v1616
        %v1618 = vlaneseq
        %v1619 = vshrl.u32 %v1618, 7
        %v1620 = vsub.s32 %v1617, %v1619
        %v1621 = vrot.slane %v333, %v1620
        %v1623 = vunpack.c.l.s4 1983009808
        %v1624 = vunpack.c.0.s8 %v1623
        %v1625 = vlaneseq
        %v1626 = vshrl.u32 %v1625, 7
        %v1627 = vsub.s32 %v1624, %v1626
        %v1628 = vrot.slane %v1614, %v1627
        %v1629 = vcombine.low %v1606, %v1621
        %v1630 = vcombine.high %v1606, %v1621
        %v1632 = vunpack.c.l.s4 1934713408
        %v1633 = vunpack.c.0.s8 %v1632
        %v1634 = vlaneseq
        %v1635 = vshrl.u32 %v1634, 7
        %v1636 = vsub.s32 %v1633, %v1635
        %v1637 = vrot.slane %v1629, %v1636
        %v1639 = vunpack.c.l.s4 1934713408
        %v1640 = vunpack.c.0.s8 %v1639
        %v1641 = vlaneseq
        %v1642 = vshrl.u32 %v1641, 7
        %v1643 = vsub.s32 %v1640, %v1642
        %v1644 = vrot.slane %v1630, %v1643
        %v1645 = vcombine.low %v1613, %v1628
        %v1646 = vcombine.high %v1613, %v1628
        %v1648 = vunpack.c.l.s4 1934713408
        %v1649 = vunpack.c.0.s8 %v1648
        %v1650 = vlaneseq
        %v1651 = vshrl.u32 %v1650, 7
        %v1652 = vsub.s32 %v1649, %v1651
        %v1653 = vrot.slane %v1645, %v1652
        %v1655 = vunpack.c.l.s4 1934713408
        %v1656 = vunpack.c.0.s8 %v1655
        %v1657 = vlaneseq
        %v1658 = vshrl.u32 %v1657, 7
        %v1659 = vsub.s32 %v1656, %v1658
        %v1660 = vrot.slane %v1646, %v1659
        %v1661 = vcombine.high %v1637, 0.0
        %v1662 = vcombine.high %v1644, 0.0
        %v1663 = vcombine.high %v1653, 0.0
        %v1664 = vcombine.high %v1660, 0.0
        %v1665 = vcombine.high %v206, 0.0
        %v1667 = vunpack.c.l.s4 1983009808
        %v1668 = vunpack.c.0.s8 %v1667
        %v1669 = vlaneseq
        %v1670 = vshrl.u32 %v1669, 7
        %v1671 = vsub.s32 %v1668, %v1670
        %v1672 = vrot.slane %v206, %v1671
        %v1674 = vunpack.c.l.s4 1983009808
        %v1675 = vunpack.c.0.s8 %v1674
        %v1676 = vlaneseq
        %v1677 = vshrl.u32 %v1676, 7
        %v1678 = vsub.s32 %v1675, %v1677
        %v1679 = vrot.slane %v1665, %v1678
        %v1680 = vcombine.high %v334, 0.0
        %v1682 = vunpack.c.l.s4 1983009808
        %v1683 = vunpack.c.0.s8 %v1682
        %v1684 = vlaneseq
        %v1685 = vshrl.u32 %v1684, 7
        %v1686 = vsub.s32 %v1683, %v1685
        %v1687 = vrot.slane %v334, %v1686
        %v1689 = vunpack.c.l.s4 1983009808
        %v1690 = vunpack.c.0.s8 %v1689
        %v1691 = vlaneseq
        %v1692 = vshrl.u32 %v1691, 7
        %v1693 = vsub.s32 %v1690, %v1692
        %v1694 = vrot.slane %v1680, %v1693
        %v1695 = vcombine.low %v1672, %v1687
        %v1696 = vcombine.high %v1672, %v1687
        %v1698 = vunpack.c.l.s4 1934713408
        %v1699 = vunpack.c.0.s8 %v1698
        %v1700 = vlaneseq
        %v1701 = vshrl.u32 %v1700, 7
        %v1702 = vsub.s32 %v1699, %v1701
        %v1703 = vrot.slane %v1695, %v1702
        %v1705 = vunpack.c.l.s4 1934713408
        %v1706 = vunpack.c.0.s8 %v1705
        %v1707 = vlaneseq
        %v1708 = vshrl.u32 %v1707, 7
        %v1709 = vsub.s32 %v1706, %v1708
        %v1710 = vrot.slane %v1696, %v1709
        %v1711 = vcombine.low %v1679, %v1694
        %v1712 = vcombine.high %v1679, %v1694
        %v1714 = vunpack.c.l.s4 1934713408
        %v1715 = vunpack.c.0.s8 %v1714
        %v1716 = vlaneseq
        %v1717 = vshrl.u32 %v1716, 7
        %v1718 = vsub.s32 %v1715, %v1717
        %v1719 = vrot.slane %v1711, %v1718
        %v1721 = vunpack.c.l.s4 1934713408
        %v1722 = vunpack.c.0.s8 %v1721
        %v1723 = vlaneseq
        %v1724 = vshrl.u32 %v1723, 7
        %v1725 = vsub.s32 %v1722, %v1724
        %v1726 = vrot.slane %v1712, %v1725
        %v1727 = vcombine.high %v1703, 0.0
        %v1728 = vcombine.high %v1710, 0.0
        %v1729 = vcombine.high %v1719, 0.0
        %v1730 = vcombine.high %v1726, 0.0
        %v1731 = vcombine.high %v207, 0.0
        %v1733 = vunpack.c.l.s4 1983009808
        %v1734 = vunpack.c.0.s8 %v1733
        %v1735 = vlaneseq
        %v1736 = vshrl.u32 %v1735, 7
        %v1737 = vsub.s32 %v1734, %v1736
        %v1738 = vrot.slane %v207, %v1737
        %v1740 = vunpack.c.l.s4 1983009808
        %v1741 = vunpack.c.0.s8 %v1740
        %v1742 = vlaneseq
        %v1743 = vshrl.u32 %v1742, 7
        %v1744 = vsub.s32 %v1741, %v1743
        %v1745 = vrot.slane %v1731, %v1744
        %v1746 = vcombine.high %v335, 0.0
        %v1748 = vunpack.c.l.s4 1983009808
        %v1749 = vunpack.c.0.s8 %v1748
        %v1750 = vlaneseq
        %v1751 = vshrl.u32 %v1750, 7
        %v1752 = vsub.s32 %v1749, %v1751
        %v1753 = vrot.slane %v335, %v1752
        %v1755 = vunpack.c.l.s4 1983009808
        %v1756 = vunpack.c.0.s8 %v1755
        %v1757 = vlaneseq
        %v1758 = vshrl.u32 %v1757, 7
        %v1759 = vsub.s32 %v1756, %v1758
        %v1760 = vrot.slane %v1746, %v1759
        %v1761 = vcombine.low %v1738, %v1753
        %v1762 = vcombine.high %v1738, %v1753
        %v1764 = vunpack.c.l.s4 1934713408
        %v1765 = vunpack.c.0.s8 %v1764
        %v1766 = vlaneseq
        %v1767 = vshrl.u32 %v1766, 7
        %v1768 = vsub.s32 %v1765, %v1767
        %v1769 = vrot.slane %v1761, %v1768
        %v1771 = vunpack.c.l.s4 1934713408
        %v1772 = vunpack.c.0.s8 %v1771
        %v1773 = vlaneseq
        %v1774 = vshrl.u32 %v1773, 7
        %v1775 = vsub.s32 %v1772, %v1774
        %v1776 = vrot.slane %v1762, %v1775
        %v1777 = vcombine.low %v1745, %v1760
        %v1778 = vcombine.high %v1745, %v1760
        %v1780 = vunpack.c.l.s4 1934713408
        %v1781 = vunpack.c.0.s8 %v1780
        %v1782 = vlaneseq
        %v1783 = vshrl.u32 %v1782, 7
        %v1784 = vsub.s32 %v1781, %v1783
        %v1785 = vrot.slane %v1777, %v1784
        %v1787 = vunpack.c.l.s4 1934713408
        %v1788 = vunpack.c.0.s8 %v1787
        %v1789 = vlaneseq
        %v1790 = vshrl.u32 %v1789, 7
        %v1791 = vsub.s32 %v1788, %v1790
        %v1792 = vrot.slane %v1778, %v1791
        %v1793 = vcombine.high %v1769, 0.0
        %v1794 = vcombine.high %v1776, 0.0
        %v1795 = vcombine.high %v1785, 0.0
        %v1796 = vcombine.high %v1792, 0.0
        %v1797 = vcombine.high %v208, 0.0
        %v1799 = vunpack.c.l.s4 1983009808
        %v1800 = vunpack.c.0.s8 %v1799
        %v1801 = vlaneseq
        %v1802 = vshrl.u32 %v1801, 7
        %v1803 = vsub.s32 %v1800, %v1802
        %v1804 = vrot.slane %v208, %v1803
        %v1806 = vunpack.c.l.s4 1983009808
        %v1807 = vunpack.c.0.s8 %v1806
        %v1808 = vlaneseq
        %v1809 = vshrl.u32 %v1808, 7
        %v1810 = vsub.s32 %v1807, %v1809
        %v1811 = vrot.slane %v1797, %v1810
        %v1812 = vcombine.high %v336, 0.0
        %v1814 = vunpack.c.l.s4 1983009808
        %v1815 = vunpack.c.0.s8 %v1814
        %v1816 = vlaneseq
        %v1817 = vshrl.u32 %v1816, 7
        %v1818 = vsub.s32 %v1815, %v1817
        %v1819 = vrot.slane %v336, %v1818
        %v1821 = vunpack.c.l.s4 1983009808
        %v1822 = vunpack.c.0.s8 %v1821
        %v1823 = vlaneseq
        %v1824 = vshrl.u32 %v1823, 7
        %v1825 = vsub.s32 %v1822, %v1824
        %v1826 = vrot.slane %v1812, %v1825
        %v1827 = vcombine.low %v1804, %v1819
        %v1828 = vcombine.high %v1804, %v1819
        %v1830 = vunpack.c.l.s4 1934713408
        %v1831 = vunpack.c.0.s8 %v1830
        %v1832 = vlaneseq
        %v1833 = vshrl.u32 %v1832, 7
        %v1834 = vsub.s32 %v1831, %v1833
        %v1835 = vrot.slane %v1827, %v1834
        %v1837 = vunpack.c.l.s4 1934713408
        %v1838 = vunpack.c.0.s8 %v1837
        %v1839 = vlaneseq
        %v1840 = vshrl.u32 %v1839, 7
        %v1841 = vsub.s32 %v1838, %v1840
        %v1842 = vrot.slane %v1828, %v1841
        %v1843 = vcombine.low %v1811, %v1826
        %v1844 = vcombine.high %v1811, %v1826
        %v1846 = vunpack.c.l.s4 1934713408
        %v1847 = vunpack.c.0.s8 %v1846
        %v1848 = vlaneseq
        %v1849 = vshrl.u32 %v1848, 7
        %v1850 = vsub.s32 %v1847, %v1849
        %v1851 = vrot.slane %v1843, %v1850
        %v1853 = vunpack.c.l.s4 1934713408
        %v1854 = vunpack.c.0.s8 %v1853
        %v1855 = vlaneseq
        %v1856 = vshrl.u32 %v1855, 7
        %v1857 = vsub.s32 %v1854, %v1856
        %v1858 = vrot.slane %v1844, %v1857
        %v1859 = vcombine.high %v1835, 0.0
        %v1860 = vcombine.high %v1842, 0.0
        %v1861 = vcombine.high %v1851, 0.0
        %v1862 = vcombine.high %v1858, 0.0
        %v1863 = vcombine.high %v209, 0.0
        %v1865 = vunpack.c.l.s4 1983009808
        %v1866 = vunpack.c.0.s8 %v1865
        %v1867 = vlaneseq
        %v1868 = vshrl.u32 %v1867, 7
        %v1869 = vsub.s32 %v1866, %v1868
        %v1870 = vrot.slane %v209, %v1869
        %v1872 = vunpack.c.l.s4 1983009808
        %v1873 = vunpack.c.0.s8 %v1872
        %v1874 = vlaneseq
        %v1875 = vshrl.u32 %v1874, 7
        %v1876 = vsub.s32 %v1873, %v1875
        %v1877 = vrot.slane %v1863, %v1876
        %v1878 = vcombine.high %v337, 0.0
        %v1880 = vunpack.c.l.s4 1983009808
        %v1881 = vunpack.c.0.s8 %v1880
        %v1882 = vlaneseq
        %v1883 = vshrl.u32 %v1882, 7
        %v1884 = vsub.s32 %v1881, %v1883
        %v1885 = vrot.slane %v337, %v1884
        %v1887 = vunpack.c.l.s4 1983009808
        %v1888 = vunpack.c.0.s8 %v1887
        %v1889 = vlaneseq
        %v1890 = vshrl.u32 %v1889, 7
        %v1891 = vsub.s32 %v1888, %v1890
        %v1892 = vrot.slane %v1878, %v1891
        %v1893 = vcombine.low %v1870, %v1885
        %v1894 = vcombine.high %v1870, %v1885
        %v1896 = vunpack.c.l.s4 1934713408
        %v1897 = vunpack.c.0.s8 %v1896
        %v1898 = vlaneseq
        %v1899 = vshrl.u32 %v1898, 7
        %v1900 = vsub.s32 %v1897, %v1899
        %v1901 = vrot.slane %v1893, %v1900
        %v1903 = vunpack.c.l.s4 1934713408
        %v1904 = vunpack.c.0.s8 %v1903
        %v1905 = vlaneseq
        %v1906 = vshrl.u32 %v1905, 7
        %v1907 = vsub.s32 %v1904, %v1906
        %v1908 = vrot.slane %v1894, %v1907
        %v1909 = vcombine.low %v1877, %v1892
        %v1910 = vcombine.high %v1877, %v1892
        %v1912 = vunpack.c.l.s4 1934713408
        %v1913 = vunpack.c.0.s8 %v1912
        %v1914 = vlaneseq
        %v1915 = vshrl.u32 %v1914, 7
        %v1916 = vsub.s32 %v1913, %v1915
        %v1917 = vrot.slane %v1909, %v1916
        %v1919 = vunpack.c.l.s4 1934713408
        %v1920 = vunpack.c.0.s8 %v1919
        %v1921 = vlaneseq
        %v1922 = vshrl.u32 %v1921, 7
        %v1923 = vsub.s32 %v1920, %v1922
        %v1924 = vrot.slane %v1910, %v1923
        %v1925 = vcombine.high %v1901, 0.0
        %v1926 = vcombine.high %v1908, 0.0
        %v1927 = vcombine.high %v1917, 0.0
        %v1928 = vcombine.high %v1924, 0.0
        %v1929 = vcombine.high %v210, 0.0
        %v1931 = vunpack.c.l.s4 1983009808
        %v1932 = vunpack.c.0.s8 %v1931
        %v1933 = vlaneseq
        %v1934 = vshrl.u32 %v1933, 7
        %v1935 = vsub.s32 %v1932, %v1934
        %v1936 = vrot.slane %v210, %v1935
        %v1938 = vunpack.c.l.s4 1983009808
        %v1939 = vunpack.c.0.s8 %v1938
        %v1940 = vlaneseq
        %v1941 = vshrl.u32 %v1940, 7
        %v1942 = vsub.s32 %v1939, %v1941
        %v1943 = vrot.slane %v1929, %v1942
        %v1944 = vcombine.high %v338, 0.0
        %v1946 = vunpack.c.l.s4 1983009808
        %v1947 = vunpack.c.0.s8 %v1946
        %v1948 = vlaneseq
        %v1949 = vshrl.u32 %v1948, 7
        %v1950 = vsub.s32 %v1947, %v1949
        %v1951 = vrot.slane %v338, %v1950
        %v1953 = vunpack.c.l.s4 1983009808
        %v1954 = vunpack.c.0.s8 %v1953
        %v1955 = vlaneseq
        %v1956 = vshrl.u32 %v1955, 7
        %v1957 = vsub.s32 %v1954, %v1956
        %v1958 = vrot.slane %v1944, %v1957
        %v1959 = vcombine.low %v1936, %v1951
        %v1960 = vcombine.high %v1936, %v1951
        %v1962 = vunpack.c.l.s4 1934713408
        %v1963 = vunpack.c.0.s8 %v1962
        %v1964 = vlaneseq
        %v1965 = vshrl.u32 %v1964, 7
        %v1966 = vsub.s32 %v1963, %v1965
        %v1967 = vrot.slane %v1959, %v1966
        %v1969 = vunpack.c.l.s4 1934713408
        %v1970 = vunpack.c.0.s8 %v1969
        %v1971 = vlaneseq
        %v1972 = vshrl.u32 %v1971, 7
        %v1973 = vsub.s32 %v1970, %v1972
        %v1974 = vrot.slane %v1960, %v1973
        %v1975 = vcombine.low %v1943, %v1958
        %v1976 = vcombine.high %v1943, %v1958
        %v1978 = vunpack.c.l.s4 1934713408
        %v1979 = vunpack.c.0.s8 %v1978
        %v1980 = vlaneseq
        %v1981 = vshrl.u32 %v1980, 7
        %v1982 = vsub.s32 %v1979, %v1981
        %v1983 = vrot.slane %v1975, %v1982
        %v1985 = vunpack.c.l.s4 1934713408
        %v1986 = vunpack.c.0.s8 %v1985
        %v1987 = vlaneseq
        %v1988 = vshrl.u32 %v1987, 7
        %v1989 = vsub.s32 %v1986, %v1988
        %v1990 = vrot.slane %v1976, %v1989
        %v1991 = vcombine.high %v1967, 0.0
        %v1992 = vcombine.high %v1974, 0.0
        %v1993 = vcombine.high %v1983, 0.0
        %v1994 = vcombine.high %v1990, 0.0
        %v1995 = vcombine.high %v211, 0.0
        %v1997 = vunpack.c.l.s4 1983009808
        %v1998 = vunpack.c.0.s8 %v1997
        %v1999 = vlaneseq
        %v2000 = vshrl.u32 %v1999, 7
        %v2001 = vsub.s32 %v1998, %v2000
        %v2002 = vrot.slane %v211, %v2001
        %v2004 = vunpack.c.l.s4 1983009808
        %v2005 = vunpack.c.0.s8 %v2004
        %v2006 = vlaneseq
        %v2007 = vshrl.u32 %v2006, 7
        %v2008 = vsub.s32 %v2005, %v2007
        %v2009 = vrot.slane %v1995, %v2008
        %v2010 = vcombine.high %v339, 0.0
        %v2012 = vunpack.c.l.s4 1983009808
        %v2013 = vunpack.c.0.s8 %v2012
        %v2014 = vlaneseq
        %v2015 = vshrl.u32 %v2014, 7
        %v2016 = vsub.s32 %v2013, %v2015
        %v2017 = vrot.slane %v339, %v2016
        %v2019 = vunpack.c.l.s4 1983009808
        %v2020 = vunpack.c.0.s8 %v2019
        %v2021 = vlaneseq
        %v2022 = vshrl.u32 %v2021, 7
        %v2023 = vsub.s32 %v2020, %v2022
        %v2024 = vrot.slane %v2010, %v2023
        %v2025 = vcombine.low %v2002, %v2017
        %v2026 = vcombine.high %v2002, %v2017
        %v2028 = vunpack.c.l.s4 1934713408
        %v2029 = vunpack.c.0.s8 %v2028
        %v2030 = vlaneseq
        %v2031 = vshrl.u32 %v2030, 7
        %v2032 = vsub.s32 %v2029, %v2031
        %v2033 = vrot.slane %v2025, %v2032
        %v2035 = vunpack.c.l.s4 1934713408
        %v2036 = vunpack.c.0.s8 %v2035
        %v2037 = vlaneseq
        %v2038 = vshrl.u32 %v2037, 7
        %v2039 = vsub.s32 %v2036, %v2038
        %v2040 = vrot.slane %v2026, %v2039
        %v2041 = vcombine.low %v2009, %v2024
        %v2042 = vcombine.high %v2009, %v2024
        %v2044 = vunpack.c.l.s4 1934713408
        %v2045 = vunpack.c.0.s8 %v2044
        %v2046 = vlaneseq
        %v2047 = vshrl.u32 %v2046, 7
        %v2048 = vsub.s32 %v2045, %v2047
        %v2049 = vrot.slane %v2041, %v2048
        %v2051 = vunpack.c.l.s4 1934713408
        %v2052 = vunpack.c.0.s8 %v2051
        %v2053 = vlaneseq
        %v2054 = vshrl.u32 %v2053, 7
        %v2055 = vsub.s32 %v2052, %v2054
        %v2056 = vrot.slane %v2042, %v2055
        %v2057 = vcombine.high %v2033, 0.0
        %v2058 = vcombine.high %v2040, 0.0
        %v2059 = vcombine.high %v2049, 0.0
        %v2060 = vcombine.high %v2056, 0.0
        %v2061 = vcombine.high %v212, 0.0
        %v2063 = vunpack.c.l.s4 1983009808
        %v2064 = vunpack.c.0.s8 %v2063
        %v2065 = vlaneseq
        %v2066 = vshrl.u32 %v2065, 7
        %v2067 = vsub.s32 %v2064, %v2066
        %v2068 = vrot.slane %v212, %v2067
        %v2070 = vunpack.c.l.s4 1983009808
        %v2071 = vunpack.c.0.s8 %v2070
        %v2072 = vlaneseq
        %v2073 = vshrl.u32 %v2072, 7
        %v2074 = vsub.s32 %v2071, %v2073
        %v2075 = vrot.slane %v2061, %v2074
        %v2076 = vcombine.high %v340, 0.0
        %v2078 = vunpack.c.l.s4 1983009808
        %v2079 = vunpack.c.0.s8 %v2078
        %v2080 = vlaneseq
        %v2081 = vshrl.u32 %v2080, 7
        %v2082 = vsub.s32 %v2079, %v2081
        %v2083 = vrot.slane %v340, %v2082
        %v2085 = vunpack.c.l.s4 1983009808
        %v2086 = vunpack.c.0.s8 %v2085
        %v2087 = vlaneseq
        %v2088 = vshrl.u32 %v2087, 7
        %v2089 = vsub.s32 %v2086, %v2088
        %v2090 = vrot.slane %v2076, %v2089
        %v2091 = vcombine.low %v2068, %v2083
        %v2092 = vcombine.high %v2068, %v2083
        %v2094 = vunpack.c.l.s4 1934713408
        %v2095 = vunpack.c.0.s8 %v2094
        %v2096 = vlaneseq
        %v2097 = vshrl.u32 %v2096, 7
        %v2098 = vsub.s32 %v2095, %v2097
        %v2099 = vrot.slane %v2091, %v2098
        %v2101 = vunpack.c.l.s4 1934713408
        %v2102 = vunpack.c.0.s8 %v2101
        %v2103 = vlaneseq
        %v2104 = vshrl.u32 %v2103, 7
        %v2105 = vsub.s32 %v2102, %v2104
        %v2106 = vrot.slane %v2092, %v2105
        %v2107 = vcombine.low %v2075, %v2090
        %v2108 = vcombine.high %v2075, %v2090
        %v2110 = vunpack.c.l.s4 1934713408
        %v2111 = vunpack.c.0.s8 %v2110
        %v2112 = vlaneseq
        %v2113 = vshrl.u32 %v2112, 7
        %v2114 = vsub.s32 %v2111, %v2113
        %v2115 = vrot.slane %v2107, %v2114
        %v2117 = vunpack.c.l.s4 1934713408
        %v2118 = vunpack.c.0.s8 %v2117
        %v2119 = vlaneseq
        %v2120 = vshrl.u32 %v2119, 7
        %v2121 = vsub.s32 %v2118, %v2120
        %v2122 = vrot.slane %v2108, %v2121
        %v2123 = vcombine.high %v2099, 0.0
        %v2124 = vcombine.high %v2106, 0.0
        %v2125 = vcombine.high %v2115, 0.0
        %v2126 = vcombine.high %v2122, 0.0
        %v2127 = vcombine.high %v213, 0.0
        %v2129 = vunpack.c.l.s4 1983009808
        %v2130 = vunpack.c.0.s8 %v2129
        %v2131 = vlaneseq
        %v2132 = vshrl.u32 %v2131, 7
        %v2133 = vsub.s32 %v2130, %v2132
        %v2134 = vrot.slane %v213, %v2133
        %v2136 = vunpack.c.l.s4 1983009808
        %v2137 = vunpack.c.0.s8 %v2136
        %v2138 = vlaneseq
        %v2139 = vshrl.u32 %v2138, 7
        %v2140 = vsub.s32 %v2137, %v2139
        %v2141 = vrot.slane %v2127, %v2140
        %v2142 = vcombine.high %v341, 0.0
        %v2144 = vunpack.c.l.s4 1983009808
        %v2145 = vunpack.c.0.s8 %v2144
        %v2146 = vlaneseq
        %v2147 = vshrl.u32 %v2146, 7
        %v2148 = vsub.s32 %v2145, %v2147
        %v2149 = vrot.slane %v341, %v2148
        %v2151 = vunpack.c.l.s4 1983009808
        %v2152 = vunpack.c.0.s8 %v2151
        %v2153 = vlaneseq
        %v2154 = vshrl.u32 %v2153, 7
        %v2155 = vsub.s32 %v2152, %v2154
        %v2156 = vrot.slane %v2142, %v2155
        %v2157 = vcombine.low %v2134, %v2149
        %v2158 = vcombine.high %v2134, %v2149
        %v2160 = vunpack.c.l.s4 1934713408
        %v2161 = vunpack.c.0.s8 %v2160
        %v2162 = vlaneseq
        %v2163 = vshrl.u32 %v2162, 7
        %v2164 = vsub.s32 %v2161, %v2163
        %v2165 = vrot.slane %v2157, %v2164
        %v2167 = vunpack.c.l.s4 1934713408
        %v2168 = vunpack.c.0.s8 %v2167
        %v2169 = vlaneseq
        %v2170 = vshrl.u32 %v2169, 7
        %v2171 = vsub.s32 %v2168, %v2170
        %v2172 = vrot.slane %v2158, %v2171
        %v2173 = vcombine.low %v2141, %v2156
        %v2174 = vcombine.high %v2141, %v2156
        %v2176 = vunpack.c.l.s4 1934713408
        %v2177 = vunpack.c.0.s8 %v2176
        %v2178 = vlaneseq
        %v2179 = vshrl.u32 %v2178, 7
        %v2180 = vsub.s32 %v2177, %v2179
        %v2181 = vrot.slane %v2173, %v2180
        %v2183 = vunpack.c.l.s4 1934713408
        %v2184 = vunpack.c.0.s8 %v2183
        %v2185 = vlaneseq
        %v2186 = vshrl.u32 %v2185, 7
        %v2187 = vsub.s32 %v2184, %v2186
        %v2188 = vrot.slane %v2174, %v2187
        %v2189 = vcombine.high %v2165, 0.0
        %v2190 = vcombine.high %v2172, 0.0
        %v2191 = vcombine.high %v2181, 0.0
        %v2192 = vcombine.high %v2188, 0.0
        %v2193 = vcombine.high %v214, 0.0
        %v2195 = vunpack.c.l.s4 1983009808
        %v2196 = vunpack.c.0.s8 %v2195
        %v2197 = vlaneseq
        %v2198 = vshrl.u32 %v2197, 7
        %v2199 = vsub.s32 %v2196, %v2198
        %v2200 = vrot.slane %v214, %v2199
        %v2202 = vunpack.c.l.s4 1983009808
        %v2203 = vunpack.c.0.s8 %v2202
        %v2204 = vlaneseq
        %v2205 = vshrl.u32 %v2204, 7
        %v2206 = vsub.s32 %v2203, %v2205
        %v2207 = vrot.slane %v2193, %v2206
        %v2208 = vcombine.high %v342, 0.0
        %v2210 = vunpack.c.l.s4 1983009808
        %v2211 = vunpack.c.0.s8 %v2210
        %v2212 = vlaneseq
        %v2213 = vshrl.u32 %v2212, 7
        %v2214 = vsub.s32 %v2211, %v2213
        %v2215 = vrot.slane %v342, %v2214
        %v2217 = vunpack.c.l.s4 1983009808
        %v2218 = vunpack.c.0.s8 %v2217
        %v2219 = vlaneseq
        %v2220 = vshrl.u32 %v2219, 7
        %v2221 = vsub.s32 %v2218, %v2220
        %v2222 = vrot.slane %v2208, %v2221
        %v2223 = vcombine.low %v2200, %v2215
        %v2224 = vcombine.high %v2200, %v2215
        %v2226 = vunpack.c.l.s4 1934713408
        %v2227 = vunpack.c.0.s8 %v2226
        %v2228 = vlaneseq
        %v2229 = vshrl.u32 %v2228, 7
        %v2230 = vsub.s32 %v2227, %v2229
        %v2231 = vrot.slane %v2223, %v2230
        %v2233 = vunpack.c.l.s4 1934713408
        %v2234 = vunpack.c.0.s8 %v2233
        %v2235 = vlaneseq
        %v2236 = vshrl.u32 %v2235, 7
        %v2237 = vsub.s32 %v2234, %v2236
        %v2238 = vrot.slane %v2224, %v2237
        %v2239 = vcombine.low %v2207, %v2222
        %v2240 = vcombine.high %v2207, %v2222
        %v2242 = vunpack.c.l.s4 1934713408
        %v2243 = vunpack.c.0.s8 %v2242
        %v2244 = vlaneseq
        %v2245 = vshrl.u32 %v2244, 7
        %v2246 = vsub.s32 %v2243, %v2245
        %v2247 = vrot.slane %v2239, %v2246
        %v2249 = vunpack.c.l.s4 1934713408
        %v2250 = vunpack.c.0.s8 %v2249
        %v2251 = vlaneseq
        %v2252 = vshrl.u32 %v2251, 7
        %v2253 = vsub.s32 %v2250, %v2252
        %v2254 = vrot.slane %v2240, %v2253
        %v2255 = vcombine.high %v2231, 0.0
        %v2256 = vcombine.high %v2238, 0.0
        %v2257 = vcombine.high %v2247, 0.0
        %v2258 = vcombine.high %v2254, 0.0
        %v2259 = vcombine.high %v215, 0.0
        %v2261 = vunpack.c.l.s4 1983009808
        %v2262 = vunpack.c.0.s8 %v2261
        %v2263 = vlaneseq
        %v2264 = vshrl.u32 %v2263, 7
        %v2265 = vsub.s32 %v2262, %v2264
        %v2266 = vrot.slane %v215, %v2265
        %v2268 = vunpack.c.l.s4 1983009808
        %v2269 = vunpack.c.0.s8 %v2268
        %v2270 = vlaneseq
        %v2271 = vshrl.u32 %v2270, 7
        %v2272 = vsub.s32 %v2269, %v2271
        %v2273 = vrot.slane %v2259, %v2272
        %v2274 = vcombine.high %v343, 0.0
        %v2276 = vunpack.c.l.s4 1983009808
        %v2277 = vunpack.c.0.s8 %v2276
        %v2278 = vlaneseq
        %v2279 = vshrl.u32 %v2278, 7
        %v2280 = vsub.s32 %v2277, %v2279
        %v2281 = vrot.slane %v343, %v2280
        %v2283 = vunpack.c.l.s4 1983009808
        %v2284 = vunpack.c.0.s8 %v2283
        %v2285 = vlaneseq
        %v2286 = vshrl.u32 %v2285, 7
        %v2287 = vsub.s32 %v2284, %v2286
        %v2288 = vrot.slane %v2274, %v2287
        %v2289 = vcombine.low %v2266, %v2281
        %v2290 = vcombine.high %v2266, %v2281
        %v2292 = vunpack.c.l.s4 1934713408
        %v2293 = vunpack.c.0.s8 %v2292
        %v2294 = vlaneseq
        %v2295 = vshrl.u32 %v2294, 7
        %v2296 = vsub.s32 %v2293, %v2295
        %v2297 = vrot.slane %v2289, %v2296
        %v2299 = vunpack.c.l.s4 1934713408
        %v2300 = vunpack.c.0.s8 %v2299
        %v2301 = vlaneseq
        %v2302 = vshrl.u32 %v2301, 7
        %v2303 = vsub.s32 %v2300, %v2302
        %v2304 = vrot.slane %v2290, %v2303
        %v2305 = vcombine.low %v2273, %v2288
        %v2306 = vcombine.high %v2273, %v2288
        %v2308 = vunpack.c.l.s4 1934713408
        %v2309 = vunpack.c.0.s8 %v2308
        %v2310 = vlaneseq
        %v2311 = vshrl.u32 %v2310, 7
        %v2312 = vsub.s32 %v2309, %v2311
        %v2313 = vrot.slane %v2305, %v2312
        %v2315 = vunpack.c.l.s4 1934713408
        %v2316 = vunpack.c.0.s8 %v2315
        %v2317 = vlaneseq
        %v2318 = vshrl.u32 %v2317, 7
        %v2319 = vsub.s32 %v2316, %v2318
        %v2320 = vrot.slane %v2306, %v2319
        %v2321 = vcombine.high %v2297, 0.0
        %v2322 = vcombine.high %v2304, 0.0
        %v2323 = vcombine.high %v2313, 0.0
        %v2324 = vcombine.high %v2320, 0.0
        %v2325 = vcombine.high %v216, 0.0
        %v2327 = vunpack.c.l.s4 1983009808
        %v2328 = vunpack.c.0.s8 %v2327
        %v2329 = vlaneseq
        %v2330 = vshrl.u32 %v2329, 7
        %v2331 = vsub.s32 %v2328, %v2330
        %v2332 = vrot.slane %v216, %v2331
        %v2334 = vunpack.c.l.s4 1983009808
        %v2335 = vunpack.c.0.s8 %v2334
        %v2336 = vlaneseq
        %v2337 = vshrl.u32 %v2336, 7
        %v2338 = vsub.s32 %v2335, %v2337
        %v2339 = vrot.slane %v2325, %v2338
        %v2340 = vcombine.high %v344, 0.0
        %v2342 = vunpack.c.l.s4 1983009808
        %v2343 = vunpack.c.0.s8 %v2342
        %v2344 = vlaneseq
        %v2345 = vshrl.u32 %v2344, 7
        %v2346 = vsub.s32 %v2343, %v2345
        %v2347 = vrot.slane %v344, %v2346
        %v2349 = vunpack.c.l.s4 1983009808
        %v2350 = vunpack.c.0.s8 %v2349
        %v2351 = vlaneseq
        %v2352 = vshrl.u32 %v2351, 7
        %v2353 = vsub.s32 %v2350, %v2352
        %v2354 = vrot.slane %v2340, %v2353
        %v2355 = vcombine.low %v2332, %v2347
        %v2356 = vcombine.high %v2332, %v2347
        %v2358 = vunpack.c.l.s4 1934713408
        %v2359 = vunpack.c.0.s8 %v2358
        %v2360 = vlaneseq
        %v2361 = vshrl.u32 %v2360, 7
        %v2362 = vsub.s32 %v2359, %v2361
        %v2363 = vrot.slane %v2355, %v2362
        %v2365 = vunpack.c.l.s4 1934713408
        %v2366 = vunpack.c.0.s8 %v2365
        %v2367 = vlaneseq
        %v2368 = vshrl.u32 %v2367, 7
        %v2369 = vsub.s32 %v2366, %v2368
        %v2370 = vrot.slane %v2356, %v2369
        %v2371 = vcombine.low %v2339, %v2354
        %v2372 = vcombine.high %v2339, %v2354
        %v2374 = vunpack.c.l.s4 1934713408
        %v2375 = vunpack.c.0.s8 %v2374
        %v2376 = vlaneseq
        %v2377 = vshrl.u32 %v2376, 7
        %v2378 = vsub.s32 %v2375, %v2377
        %v2379 = vrot.slane %v2371, %v2378
        %v2381 = vunpack.c.l.s4 1934713408
        %v2382 = vunpack.c.0.s8 %v2381
        %v2383 = vlaneseq
        %v2384 = vshrl.u32 %v2383, 7
        %v2385 = vsub.s32 %v2382, %v2384
        %v2386 = vrot.slane %v2372, %v2385
        %v2387 = vcombine.high %v2363, 0.0
        %v2388 = vcombine.high %v2370, 0.0
        %v2389 = vcombine.high %v2379, 0.0
        %v2390 = vcombine.high %v2386, 0.0
        %v2391 = vcombine.high %v217, 0.0
        %v2393 = vunpack.c.l.s4 1983009808
        %v2394 = vunpack.c.0.s8 %v2393
        %v2395 = vlaneseq
        %v2396 = vshrl.u32 %v2395, 7
        %v2397 = vsub.s32 %v2394, %v2396
        %v2398 = vrot.slane %v217, %v2397
        %v2400 = vunpack.c.l.s4 1983009808
        %v2401 = vunpack.c.0.s8 %v2400
        %v2402 = vlaneseq
        %v2403 = vshrl.u32 %v2402, 7
        %v2404 = vsub.s32 %v2401, %v2403
        %v2405 = vrot.slane %v2391, %v2404
        %v2406 = vcombine.high %v345, 0.0
        %v2408 = vunpack.c.l.s4 1983009808
        %v2409 = vunpack.c.0.s8 %v2408
        %v2410 = vlaneseq
        %v2411 = vshrl.u32 %v2410, 7
        %v2412 = vsub.s32 %v2409, %v2411
        %v2413 = vrot.slane %v345, %v2412
        %v2415 = vunpack.c.l.s4 1983009808
        %v2416 = vunpack.c.0.s8 %v2415
        %v2417 = vlaneseq
        %v2418 = vshrl.u32 %v2417, 7
        %v2419 = vsub.s32 %v2416, %v2418
        %v2420 = vrot.slane %v2406, %v2419
        %v2421 = vcombine.low %v2398, %v2413
        %v2422 = vcombine.high %v2398, %v2413
        %v2424 = vunpack.c.l.s4 1934713408
        %v2425 = vunpack.c.0.s8 %v2424
        %v2426 = vlaneseq
        %v2427 = vshrl.u32 %v2426, 7
        %v2428 = vsub.s32 %v2425, %v2427
        %v2429 = vrot.slane %v2421, %v2428
        %v2431 = vunpack.c.l.s4 1934713408
        %v2432 = vunpack.c.0.s8 %v2431
        %v2433 = vlaneseq
        %v2434 = vshrl.u32 %v2433, 7
        %v2435 = vsub.s32 %v2432, %v2434
        %v2436 = vrot.slane %v2422, %v2435
        %v2437 = vcombine.low %v2405, %v2420
        %v2438 = vcombine.high %v2405, %v2420
        %v2440 = vunpack.c.l.s4 1934713408
        %v2441 = vunpack.c.0.s8 %v2440
        %v2442 = vlaneseq
        %v2443 = vshrl.u32 %v2442, 7
        %v2444 = vsub.s32 %v2441, %v2443
        %v2445 = vrot.slane %v2437, %v2444
        %v2447 = vunpack.c.l.s4 1934713408
        %v2448 = vunpack.c.0.s8 %v2447
        %v2449 = vlaneseq
        %v2450 = vshrl.u32 %v2449, 7
        %v2451 = vsub.s32 %v2448, %v2450
        %v2452 = vrot.slane %v2438, %v2451
        %v2453 = vcombine.high %v2429, 0.0
        %v2454 = vcombine.high %v2436, 0.0
        %v2455 = vcombine.high %v2445, 0.0
        %v2456 = vcombine.high %v2452, 0.0
        %v2457 = vcombine.high %v218, 0.0
        %v2459 = vunpack.c.l.s4 1983009808
        %v2460 = vunpack.c.0.s8 %v2459
        %v2461 = vlaneseq
        %v2462 = vshrl.u32 %v2461, 7
        %v2463 = vsub.s32 %v2460, %v2462
        %v2464 = vrot.slane %v218, %v2463
        %v2466 = vunpack.c.l.s4 1983009808
        %v2467 = vunpack.c.0.s8 %v2466
        %v2468 = vlaneseq
        %v2469 = vshrl.u32 %v2468, 7
        %v2470 = vsub.s32 %v2467, %v2469
        %v2471 = vrot.slane %v2457, %v2470
        %v2472 = vcombine.high %v346, 0.0
        %v2474 = vunpack.c.l.s4 1983009808
        %v2475 = vunpack.c.0.s8 %v2474
        %v2476 = vlaneseq
        %v2477 = vshrl.u32 %v2476, 7
        %v2478 = vsub.s32 %v2475, %v2477
        %v2479 = vrot.slane %v346, %v2478
        %v2481 = vunpack.c.l.s4 1983009808
        %v2482 = vunpack.c.0.s8 %v2481
        %v2483 = vlaneseq
        %v2484 = vshrl.u32 %v2483, 7
        %v2485 = vsub.s32 %v2482, %v2484
        %v2486 = vrot.slane %v2472, %v2485
        %v2487 = vcombine.low %v2464, %v2479
        %v2488 = vcombine.high %v2464, %v2479
        %v2490 = vunpack.c.l.s4 1934713408
        %v2491 = vunpack.c.0.s8 %v2490
        %v2492 = vlaneseq
        %v2493 = vshrl.u32 %v2492, 7
        %v2494 = vsub.s32 %v2491, %v2493
        %v2495 = vrot.slane %v2487, %v2494
        %v2497 = vunpack.c.l.s4 1934713408
        %v2498 = vunpack.c.0.s8 %v2497
        %v2499 = vlaneseq
        %v2500 = vshrl.u32 %v2499, 7
        %v2501 = vsub.s32 %v2498, %v2500
        %v2502 = vrot.slane %v2488, %v2501
        %v2503 = vcombine.low %v2471, %v2486
        %v2504 = vcombine.high %v2471, %v2486
        %v2506 = vunpack.c.l.s4 1934713408
        %v2507 = vunpack.c.0.s8 %v2506
        %v2508 = vlaneseq
        %v2509 = vshrl.u32 %v2508, 7
        %v2510 = vsub.s32 %v2507, %v2509
        %v2511 = vrot.slane %v2503, %v2510
        %v2513 = vunpack.c.l.s4 1934713408
        %v2514 = vunpack.c.0.s8 %v2513
        %v2515 = vlaneseq
        %v2516 = vshrl.u32 %v2515, 7
        %v2517 = vsub.s32 %v2514, %v2516
        %v2518 = vrot.slane %v2504, %v2517
        %v2519 = vcombine.high %v2495, 0.0
        %v2520 = vcombine.high %v2502, 0.0
        %v2521 = vcombine.high %v2511, 0.0
        %v2522 = vcombine.high %v2518, 0.0
        %v2523 = vcombine.high %v235, 0.0
        %v2525 = vunpack.c.l.s4 1983009808
        %v2526 = vunpack.c.0.s8 %v2525
        %v2527 = vlaneseq
        %v2528 = vshrl.u32 %v2527, 7
        %v2529 = vsub.s32 %v2526, %v2528
        %v2530 = vrot.slane %v235, %v2529
        %v2532 = vunpack.c.l.s4 1983009808
        %v2533 = vunpack.c.0.s8 %v2532
        %v2534 = vlaneseq
        %v2535 = vshrl.u32 %v2534, 7
        %v2536 = vsub.s32 %v2533, %v2535
        %v2537 = vrot.slane %v2523, %v2536
        %v2538 = vcombine.high %v363, 0.0
        %v2540 = vunpack.c.l.s4 1983009808
        %v2541 = vunpack.c.0.s8 %v2540
        %v2542 = vlaneseq
        %v2543 = vshrl.u32 %v2542, 7
        %v2544 = vsub.s32 %v2541, %v2543
        %v2545 = vrot.slane %v363, %v2544
        %v2547 = vunpack.c.l.s4 1983009808
        %v2548 = vunpack.c.0.s8 %v2547
        %v2549 = vlaneseq
        %v2550 = vshrl.u32 %v2549, 7
        %v2551 = vsub.s32 %v2548, %v2550
        %v2552 = vrot.slane %v2538, %v2551
        %v2553 = vcombine.low %v2530, %v2545
        %v2554 = vcombine.high %v2530, %v2545
        %v2556 = vunpack.c.l.s4 1934713408
        %v2557 = vunpack.c.0.s8 %v2556
        %v2558 = vlaneseq
        %v2559 = vshrl.u32 %v2558, 7
        %v2560 = vsub.s32 %v2557, %v2559
        %v2561 = vrot.slane %v2553, %v2560
        %v2563 = vunpack.c.l.s4 1934713408
        %v2564 = vunpack.c.0.s8 %v2563
        %v2565 = vlaneseq
        %v2566 = vshrl.u32 %v2565, 7
        %v2567 = vsub.s32 %v2564, %v2566
        %v2568 = vrot.slane %v2554, %v2567
        %v2569 = vcombine.low %v2537, %v2552
        %v2570 = vcombine.high %v2537, %v2552
        %v2572 = vunpack.c.l.s4 1934713408
        %v2573 = vunpack.c.0.s8 %v2572
        %v2574 = vlaneseq
        %v2575 = vshrl.u32 %v2574, 7
        %v2576 = vsub.s32 %v2573, %v2575
        %v2577 = vrot.slane %v2569, %v2576
        %v2579 = vunpack.c.l.s4 1934713408
        %v2580 = vunpack.c.0.s8 %v2579
        %v2581 = vlaneseq
        %v2582 = vshrl.u32 %v2581, 7
        %v2583 = vsub.s32 %v2580, %v2582
        %v2584 = vrot.slane %v2570, %v2583
        %v2585 = vcombine.high %v2561, 0.0
        %v2586 = vcombine.high %v2568, 0.0
        %v2587 = vcombine.high %v2577, 0.0
        %v2588 = vcombine.high %v2584, 0.0
        %v2589 = vcombine.high %v236, 0.0
        %v2591 = vunpack.c.l.s4 1983009808
        %v2592 = vunpack.c.0.s8 %v2591
        %v2593 = vlaneseq
        %v2594 = vshrl.u32 %v2593, 7
        %v2595 = vsub.s32 %v2592, %v2594
        %v2596 = vrot.slane %v236, %v2595
        %v2598 = vunpack.c.l.s4 1983009808
        %v2599 = vunpack.c.0.s8 %v2598
        %v2600 = vlaneseq
        %v2601 = vshrl.u32 %v2600, 7
        %v2602 = vsub.s32 %v2599, %v2601
        %v2603 = vrot.slane %v2589, %v2602
        %v2604 = vcombine.high %v364, 0.0
        %v2606 = vunpack.c.l.s4 1983009808
        %v2607 = vunpack.c.0.s8 %v2606
        %v2608 = vlaneseq
        %v2609 = vshrl.u32 %v2608, 7
        %v2610 = vsub.s32 %v2607, %v2609
        %v2611 = vrot.slane %v364, %v2610
        %v2613 = vunpack.c.l.s4 1983009808
        %v2614 = vunpack.c.0.s8 %v2613
        %v2615 = vlaneseq
        %v2616 = vshrl.u32 %v2615, 7
        %v2617 = vsub.s32 %v2614, %v2616
        %v2618 = vrot.slane %v2604, %v2617
        %v2619 = vcombine.low %v2596, %v2611
        %v2620 = vcombine.high %v2596, %v2611
        %v2622 = vunpack.c.l.s4 1934713408
        %v2623 = vunpack.c.0.s8 %v2622
        %v2624 = vlaneseq
        %v2625 = vshrl.u32 %v2624, 7
        %v2626 = vsub.s32 %v2623, %v2625
        %v2627 = vrot.slane %v2619, %v2626
        %v2629 = vunpack.c.l.s4 1934713408
        %v2630 = vunpack.c.0.s8 %v2629
        %v2631 = vlaneseq
        %v2632 = vshrl.u32 %v2631, 7
        %v2633 = vsub.s32 %v2630, %v2632
        %v2634 = vrot.slane %v2620, %v2633
        %v2635 = vcombine.low %v2603, %v2618
        %v2636 = vcombine.high %v2603, %v2618
        %v2638 = vunpack.c.l.s4 1934713408
        %v2639 = vunpack.c.0.s8 %v2638
        %v2640 = vlaneseq
        %v2641 = vshrl.u32 %v2640, 7
        %v2642 = vsub.s32 %v2639, %v2641
        %v2643 = vrot.slane %v2635, %v2642
        %v2645 = vunpack.c.l.s4 1934713408
        %v2646 = vunpack.c.0.s8 %v2645
        %v2647 = vlaneseq
        %v2648 = vshrl.u32 %v2647, 7
        %v2649 = vsub.s32 %v2646, %v2648
        %v2650 = vrot.slane %v2636, %v2649
        %v2651 = vcombine.high %v2627, 0.0
        %v2652 = vcombine.high %v2634, 0.0
        %v2653 = vcombine.high %v2643, 0.0
        %v2654 = vcombine.high %v2650, 0.0
        %v2655 = vcombine.high %v237, 0.0
        %v2657 = vunpack.c.l.s4 1983009808
        %v2658 = vunpack.c.0.s8 %v2657
        %v2659 = vlaneseq
        %v2660 = vshrl.u32 %v2659, 7
        %v2661 = vsub.s32 %v2658, %v2660
        %v2662 = vrot.slane %v237, %v2661
        %v2664 = vunpack.c.l.s4 1983009808
        %v2665 = vunpack.c.0.s8 %v2664
        %v2666 = vlaneseq
        %v2667 = vshrl.u32 %v2666, 7
        %v2668 = vsub.s32 %v2665, %v2667
        %v2669 = vrot.slane %v2655, %v2668
        %v2670 = vcombine.high %v365, 0.0
        %v2672 = vunpack.c.l.s4 1983009808
        %v2673 = vunpack.c.0.s8 %v2672
        %v2674 = vlaneseq
        %v2675 = vshrl.u32 %v2674, 7
        %v2676 = vsub.s32 %v2673, %v2675
        %v2677 = vrot.slane %v365, %v2676
        %v2679 = vunpack.c.l.s4 1983009808
        %v2680 = vunpack.c.0.s8 %v2679
        %v2681 = vlaneseq
        %v2682 = vshrl.u32 %v2681, 7
        %v2683 = vsub.s32 %v2680, %v2682
        %v2684 = vrot.slane %v2670, %v2683
        %v2685 = vcombine.low %v2662, %v2677
        %v2686 = vcombine.high %v2662, %v2677
        %v2688 = vunpack.c.l.s4 1934713408
        %v2689 = vunpack.c.0.s8 %v2688
        %v2690 = vlaneseq
        %v2691 = vshrl.u32 %v2690, 7
        %v2692 = vsub.s32 %v2689, %v2691
        %v2693 = vrot.slane %v2685, %v2692
        %v2695 = vunpack.c.l.s4 1934713408
        %v2696 = vunpack.c.0.s8 %v2695
        %v2697 = vlaneseq
        %v2698 = vshrl.u32 %v2697, 7
        %v2699 = vsub.s32 %v2696, %v2698
        %v2700 = vrot.slane %v2686, %v2699
        %v2701 = vcombine.low %v2669, %v2684
        %v2702 = vcombine.high %v2669, %v2684
        %v2704 = vunpack.c.l.s4 1934713408
        %v2705 = vunpack.c.0.s8 %v2704
        %v2706 = vlaneseq
        %v2707 = vshrl.u32 %v2706, 7
        %v2708 = vsub.s32 %v2705, %v2707
        %v2709 = vrot.slane %v2701, %v2708
        %v2711 = vunpack.c.l.s4 1934713408
        %v2712 = vunpack.c.0.s8 %v2711
        %v2713 = vlaneseq
        %v2714 = vshrl.u32 %v2713, 7
        %v2715 = vsub.s32 %v2712, %v2714
        %v2716 = vrot.slane %v2702, %v2715
        %v2717 = vcombine.high %v2693, 0.0
        %v2718 = vcombine.high %v2700, 0.0
        %v2719 = vcombine.high %v2709, 0.0
        %v2720 = vcombine.high %v2716, 0.0
        %v2721 = vcombine.high %v238, 0.0
        %v2723 = vunpack.c.l.s4 1983009808
        %v2724 = vunpack.c.0.s8 %v2723
        %v2725 = vlaneseq
        %v2726 = vshrl.u32 %v2725, 7
        %v2727 = vsub.s32 %v2724, %v2726
        %v2728 = vrot.slane %v238, %v2727
        %v2730 = vunpack.c.l.s4 1983009808
        %v2731 = vunpack.c.0.s8 %v2730
        %v2732 = vlaneseq
        %v2733 = vshrl.u32 %v2732, 7
        %v2734 = vsub.s32 %v2731, %v2733
        %v2735 = vrot.slane %v2721, %v2734
        %v2736 = vcombine.high %v366, 0.0
        %v2738 = vunpack.c.l.s4 1983009808
        %v2739 = vunpack.c.0.s8 %v2738
        %v2740 = vlaneseq
        %v2741 = vshrl.u32 %v2740, 7
        %v2742 = vsub.s32 %v2739, %v2741
        %v2743 = vrot.slane %v366, %v2742
        %v2745 = vunpack.c.l.s4 1983009808
        %v2746 = vunpack.c.0.s8 %v2745
        %v2747 = vlaneseq
        %v2748 = vshrl.u32 %v2747, 7
        %v2749 = vsub.s32 %v2746, %v2748
        %v2750 = vrot.slane %v2736, %v2749
        %v2751 = vcombine.low %v2728, %v2743
        %v2752 = vcombine.high %v2728, %v2743
        %v2754 = vunpack.c.l.s4 1934713408
        %v2755 = vunpack.c.0.s8 %v2754
        %v2756 = vlaneseq
        %v2757 = vshrl.u32 %v2756, 7
        %v2758 = vsub.s32 %v2755, %v2757
        %v2759 = vrot.slane %v2751, %v2758
        %v2761 = vunpack.c.l.s4 1934713408
        %v2762 = vunpack.c.0.s8 %v2761
        %v2763 = vlaneseq
        %v2764 = vshrl.u32 %v2763, 7
        %v2765 = vsub.s32 %v2762, %v2764
        %v2766 = vrot.slane %v2752, %v2765
        %v2767 = vcombine.low %v2735, %v2750
        %v2768 = vcombine.high %v2735, %v2750
        %v2770 = vunpack.c.l.s4 1934713408
        %v2771 = vunpack.c.0.s8 %v2770
        %v2772 = vlaneseq
        %v2773 = vshrl.u32 %v2772, 7
        %v2774 = vsub.s32 %v2771, %v2773
        %v2775 = vrot.slane %v2767, %v2774
        %v2777 = vunpack.c.l.s4 1934713408
        %v2778 = vunpack.c.0.s8 %v2777
        %v2779 = vlaneseq
        %v2780 = vshrl.u32 %v2779, 7
        %v2781 = vsub.s32 %v2778, %v2780
        %v2782 = vrot.slane %v2768, %v2781
        %v2783 = vcombine.high %v2759, 0.0
        %v2784 = vcombine.high %v2766, 0.0
        %v2785 = vcombine.high %v2775, 0.0
        %v2786 = vcombine.high %v2782, 0.0
        %v2787 = vcombine.high %v239, 0.0
        %v2789 = vunpack.c.l.s4 1983009808
        %v2790 = vunpack.c.0.s8 %v2789
        %v2791 = vlaneseq
        %v2792 = vshrl.u32 %v2791, 7
        %v2793 = vsub.s32 %v2790, %v2792
        %v2794 = vrot.slane %v239, %v2793
        %v2796 = vunpack.c.l.s4 1983009808
        %v2797 = vunpack.c.0.s8 %v2796
        %v2798 = vlaneseq
        %v2799 = vshrl.u32 %v2798, 7
        %v2800 = vsub.s32 %v2797, %v2799
        %v2801 = vrot.slane %v2787, %v2800
        %v2802 = vcombine.high %v367, 0.0
        %v2804 = vunpack.c.l.s4 1983009808
        %v2805 = vunpack.c.0.s8 %v2804
        %v2806 = vlaneseq
        %v2807 = vshrl.u32 %v2806, 7
        %v2808 = vsub.s32 %v2805, %v2807
        %v2809 = vrot.slane %v367, %v2808
        %v2811 = vunpack.c.l.s4 1983009808
        %v2812 = vunpack.c.0.s8 %v2811
        %v2813 = vlaneseq
        %v2814 = vshrl.u32 %v2813, 7
        %v2815 = vsub.s32 %v2812, %v2814
        %v2816 = vrot.slane %v2802, %v2815
        %v2817 = vcombine.low %v2794, %v2809
        %v2818 = vcombine.high %v2794, %v2809
        %v2820 = vunpack.c.l.s4 1934713408
        %v2821 = vunpack.c.0.s8 %v2820
        %v2822 = vlaneseq
        %v2823 = vshrl.u32 %v2822, 7
        %v2824 = vsub.s32 %v2821, %v2823
        %v2825 = vrot.slane %v2817, %v2824
        %v2827 = vunpack.c.l.s4 1934713408
        %v2828 = vunpack.c.0.s8 %v2827
        %v2829 = vlaneseq
        %v2830 = vshrl.u32 %v2829, 7
        %v2831 = vsub.s32 %v2828, %v2830
        %v2832 = vrot.slane %v2818, %v2831
        %v2833 = vcombine.low %v2801, %v2816
        %v2834 = vcombine.high %v2801, %v2816
        %v2836 = vunpack.c.l.s4 1934713408
        %v2837 = vunpack.c.0.s8 %v2836
        %v2838 = vlaneseq
        %v2839 = vshrl.u32 %v2838, 7
        %v2840 = vsub.s32 %v2837, %v2839
        %v2841 = vrot.slane %v2833, %v2840
        %v2843 = vunpack.c.l.s4 1934713408
        %v2844 = vunpack.c.0.s8 %v2843
        %v2845 = vlaneseq
        %v2846 = vshrl.u32 %v2845, 7
        %v2847 = vsub.s32 %v2844, %v2846
        %v2848 = vrot.slane %v2834, %v2847
        %v2849 = vcombine.high %v2825, 0.0
        %v2850 = vcombine.high %v2832, 0.0
        %v2851 = vcombine.high %v2841, 0.0
        %v2852 = vcombine.high %v2848, 0.0
        %v2853 = vcombine.high %v240, 0.0
        %v2855 = vunpack.c.l.s4 1983009808
        %v2856 = vunpack.c.0.s8 %v2855
        %v2857 = vlaneseq
        %v2858 = vshrl.u32 %v2857, 7
        %v2859 = vsub.s32 %v2856, %v2858
        %v2860 = vrot.slane %v240, %v2859
        %v2862 = vunpack.c.l.s4 1983009808
        %v2863 = vunpack.c.0.s8 %v2862
        %v2864 = vlaneseq
        %v2865 = vshrl.u32 %v2864, 7
        %v2866 = vsub.s32 %v2863, %v2865
        %v2867 = vrot.slane %v2853, %v2866
        %v2868 = vcombine.high %v368, 0.0
        %v2870 = vunpack.c.l.s4 1983009808
        %v2871 = vunpack.c.0.s8 %v2870
        %v2872 = vlaneseq
        %v2873 = vshrl.u32 %v2872, 7
        %v2874 = vsub.s32 %v2871, %v2873
        %v2875 = vrot.slane %v368, %v2874
        %v2877 = vunpack.c.l.s4 1983009808
        %v2878 = vunpack.c.0.s8 %v2877
        %v2879 = vlaneseq
        %v2880 = vshrl.u32 %v2879, 7
        %v2881 = vsub.s32 %v2878, %v2880
        %v2882 = vrot.slane %v2868, %v2881
        %v2883 = vcombine.low %v2860, %v2875
        %v2884 = vcombine.high %v2860, %v2875
        %v2886 = vunpack.c.l.s4 1934713408
        %v2887 = vunpack.c.0.s8 %v2886
        %v2888 = vlaneseq
        %v2889 = vshrl.u32 %v2888, 7
        %v2890 = vsub.s32 %v2887, %v2889
        %v2891 = vrot.slane %v2883, %v2890
        %v2893 = vunpack.c.l.s4 1934713408
        %v2894 = vunpack.c.0.s8 %v2893
        %v2895 = vlaneseq
        %v2896 = vshrl.u32 %v2895, 7
        %v2897 = vsub.s32 %v2894, %v2896
        %v2898 = vrot.slane %v2884, %v2897
        %v2899 = vcombine.low %v2867, %v2882
        %v2900 = vcombine.high %v2867, %v2882
        %v2902 = vunpack.c.l.s4 1934713408
        %v2903 = vunpack.c.0.s8 %v2902
        %v2904 = vlaneseq
        %v2905 = vshrl.u32 %v2904, 7
        %v2906 = vsub.s32 %v2903, %v2905
        %v2907 = vrot.slane %v2899, %v2906
        %v2909 = vunpack.c.l.s4 1934713408
        %v2910 = vunpack.c.0.s8 %v2909
        %v2911 = vlaneseq
        %v2912 = vshrl.u32 %v2911, 7
        %v2913 = vsub.s32 %v2910, %v2912
        %v2914 = vrot.slane %v2900, %v2913
        %v2915 = vcombine.high %v2891, 0.0
        %v2916 = vcombine.high %v2898, 0.0
        %v2917 = vcombine.high %v2907, 0.0
        %v2918 = vcombine.high %v2914, 0.0
        %v2919 = vcombine.high %v241, 0.0
        %v2921 = vunpack.c.l.s4 1983009808
        %v2922 = vunpack.c.0.s8 %v2921
        %v2923 = vlaneseq
        %v2924 = vshrl.u32 %v2923, 7
        %v2925 = vsub.s32 %v2922, %v2924
        %v2926 = vrot.slane %v241, %v2925
        %v2928 = vunpack.c.l.s4 1983009808
        %v2929 = vunpack.c.0.s8 %v2928
        %v2930 = vlaneseq
        %v2931 = vshrl.u32 %v2930, 7
        %v2932 = vsub.s32 %v2929, %v2931
        %v2933 = vrot.slane %v2919, %v2932
        %v2934 = vcombine.high %v369, 0.0
        %v2936 = vunpack.c.l.s4 1983009808
        %v2937 = vunpack.c.0.s8 %v2936
        %v2938 = vlaneseq
        %v2939 = vshrl.u32 %v2938, 7
        %v2940 = vsub.s32 %v2937, %v2939
        %v2941 = vrot.slane %v369, %v2940
        %v2943 = vunpack.c.l.s4 1983009808
        %v2944 = vunpack.c.0.s8 %v2943
        %v2945 = vlaneseq
        %v2946 = vshrl.u32 %v2945, 7
        %v2947 = vsub.s32 %v2944, %v2946
        %v2948 = vrot.slane %v2934, %v2947
        %v2949 = vcombine.low %v2926, %v2941
        %v2950 = vcombine.high %v2926, %v2941
        %v2952 = vunpack.c.l.s4 1934713408
        %v2953 = vunpack.c.0.s8 %v2952
        %v2954 = vlaneseq
        %v2955 = vshrl.u32 %v2954, 7
        %v2956 = vsub.s32 %v2953, %v2955
        %v2957 = vrot.slane %v2949, %v2956
        %v2959 = vunpack.c.l.s4 1934713408
        %v2960 = vunpack.c.0.s8 %v2959
        %v2961 = vlaneseq
        %v2962 = vshrl.u32 %v2961, 7
        %v2963 = vsub.s32 %v2960, %v2962
        %v2964 = vrot.slane %v2950, %v2963
        %v2965 = vcombine.low %v2933, %v2948
        %v2966 = vcombine.high %v2933, %v2948
        %v2968 = vunpack.c.l.s4 1934713408
        %v2969 = vunpack.c.0.s8 %v2968
        %v2970 = vlaneseq
        %v2971 = vshrl.u32 %v2970, 7
        %v2972 = vsub.s32 %v2969, %v2971
        %v2973 = vrot.slane %v2965, %v2972
        %v2975 = vunpack.c.l.s4 1934713408
        %v2976 = vunpack.c.0.s8 %v2975
        %v2977 = vlaneseq
        %v2978 = vshrl.u32 %v2977, 7
        %v2979 = vsub.s32 %v2976, %v2978
        %v2980 = vrot.slane %v2966, %v2979
        %v2981 = vcombine.high %v2957, 0.0
        %v2982 = vcombine.high %v2964, 0.0
        %v2983 = vcombine.high %v2973, 0.0
        %v2984 = vcombine.high %v2980, 0.0
        %v2985 = vcombine.high %v242, 0.0
        %v2987 = vunpack.c.l.s4 1983009808
        %v2988 = vunpack.c.0.s8 %v2987
        %v2989 = vlaneseq
        %v2990 = vshrl.u32 %v2989, 7
        %v2991 = vsub.s32 %v2988, %v2990
        %v2992 = vrot.slane %v242, %v2991
        %v2994 = vunpack.c.l.s4 1983009808
        %v2995 = vunpack.c.0.s8 %v2994
        %v2996 = vlaneseq
        %v2997 = vshrl.u32 %v2996, 7
        %v2998 = vsub.s32 %v2995, %v2997
        %v2999 = vrot.slane %v2985, %v2998
        %v3000 = vcombine.high %v370, 0.0
        %v3002 = vunpack.c.l.s4 1983009808
        %v3003 = vunpack.c.0.s8 %v3002
        %v3004 = vlaneseq
        %v3005 = vshrl.u32 %v3004, 7
        %v3006 = vsub.s32 %v3003, %v3005
        %v3007 = vrot.slane %v370, %v3006
        %v3009 = vunpack.c.l.s4 1983009808
        %v3010 = vunpack.c.0.s8 %v3009
        %v3011 = vlaneseq
        %v3012 = vshrl.u32 %v3011, 7
        %v3013 = vsub.s32 %v3010, %v3012
        %v3014 = vrot.slane %v3000, %v3013
        %v3015 = vcombine.low %v2992, %v3007
        %v3016 = vcombine.high %v2992, %v3007
        %v3018 = vunpack.c.l.s4 1934713408
        %v3019 = vunpack.c.0.s8 %v3018
        %v3020 = vlaneseq
        %v3021 = vshrl.u32 %v3020, 7
        %v3022 = vsub.s32 %v3019, %v3021
        %v3023 = vrot.slane %v3015, %v3022
        %v3025 = vunpack.c.l.s4 1934713408
        %v3026 = vunpack.c.0.s8 %v3025
        %v3027 = vlaneseq
        %v3028 = vshrl.u32 %v3027, 7
        %v3029 = vsub.s32 %v3026, %v3028
        %v3030 = vrot.slane %v3016, %v3029
        %v3031 = vcombine.low %v2999, %v3014
        %v3032 = vcombine.high %v2999, %v3014
        %v3034 = vunpack.c.l.s4 1934713408
        %v3035 = vunpack.c.0.s8 %v3034
        %v3036 = vlaneseq
        %v3037 = vshrl.u32 %v3036, 7
        %v3038 = vsub.s32 %v3035, %v3037
        %v3039 = vrot.slane %v3031, %v3038
        %v3041 = vunpack.c.l.s4 1934713408
        %v3042 = vunpack.c.0.s8 %v3041
        %v3043 = vlaneseq
        %v3044 = vshrl.u32 %v3043, 7
        %v3045 = vsub.s32 %v3042, %v3044
        %v3046 = vrot.slane %v3032, %v3045
        %v3047 = vcombine.high %v3023, 0.0
        %v3048 = vcombine.high %v3030, 0.0
        %v3049 = vcombine.high %v3039, 0.0
        %v3050 = vcombine.high %v3046, 0.0
        %v3051 = vcombine.high %v243, 0.0
        %v3053 = vunpack.c.l.s4 1983009808
        %v3054 = vunpack.c.0.s8 %v3053
        %v3055 = vlaneseq
        %v3056 = vshrl.u32 %v3055, 7
        %v3057 = vsub.s32 %v3054, %v3056
        %v3058 = vrot.slane %v243, %v3057
        %v3060 = vunpack.c.l.s4 1983009808
        %v3061 = vunpack.c.0.s8 %v3060
        %v3062 = vlaneseq
        %v3063 = vshrl.u32 %v3062, 7
        %v3064 = vsub.s32 %v3061, %v3063
        %v3065 = vrot.slane %v3051, %v3064
        %v3066 = vcombine.high %v371, 0.0
        %v3068 = vunpack.c.l.s4 1983009808
        %v3069 = vunpack.c.0.s8 %v3068
        %v3070 = vlaneseq
        %v3071 = vshrl.u32 %v3070, 7
        %v3072 = vsub.s32 %v3069, %v3071
        %v3073 = vrot.slane %v371, %v3072
        %v3075 = vunpack.c.l.s4 1983009808
        %v3076 = vunpack.c.0.s8 %v3075
        %v3077 = vlaneseq
        %v3078 = vshrl.u32 %v3077, 7
        %v3079 = vsub.s32 %v3076, %v3078
        %v3080 = vrot.slane %v3066, %v3079
        %v3081 = vcombine.low %v3058, %v3073
        %v3082 = vcombine.high %v3058, %v3073
        %v3084 = vunpack.c.l.s4 1934713408
        %v3085 = vunpack.c.0.s8 %v3084
        %v3086 = vlaneseq
        %v3087 = vshrl.u32 %v3086, 7
        %v3088 = vsub.s32 %v3085, %v3087
        %v3089 = vrot.slane %v3081, %v3088
        %v3091 = vunpack.c.l.s4 1934713408
        %v3092 = vunpack.c.0.s8 %v3091
        %v3093 = vlaneseq
        %v3094 = vshrl.u32 %v3093, 7
        %v3095 = vsub.s32 %v3092, %v3094
        %v3096 = vrot.slane %v3082, %v3095
        %v3097 = vcombine.low %v3065, %v3080
        %v3098 = vcombine.high %v3065, %v3080
        %v3100 = vunpack.c.l.s4 1934713408
        %v3101 = vunpack.c.0.s8 %v3100
        %v3102 = vlaneseq
        %v3103 = vshrl.u32 %v3102, 7
        %v3104 = vsub.s32 %v3101, %v3103
        %v3105 = vrot.slane %v3097, %v3104
        %v3107 = vunpack.c.l.s4 1934713408
        %v3108 = vunpack.c.0.s8 %v3107
        %v3109 = vlaneseq
        %v3110 = vshrl.u32 %v3109, 7
        %v3111 = vsub.s32 %v3108, %v3110
        %v3112 = vrot.slane %v3098, %v3111
        %v3113 = vcombine.high %v3089, 0.0
        %v3114 = vcombine.high %v3096, 0.0
        %v3115 = vcombine.high %v3105, 0.0
        %v3116 = vcombine.high %v3112, 0.0
        %v3117 = vcombine.high %v244, 0.0
        %v3119 = vunpack.c.l.s4 1983009808
        %v3120 = vunpack.c.0.s8 %v3119
        %v3121 = vlaneseq
        %v3122 = vshrl.u32 %v3121, 7
        %v3123 = vsub.s32 %v3120, %v3122
        %v3124 = vrot.slane %v244, %v3123
        %v3126 = vunpack.c.l.s4 1983009808
        %v3127 = vunpack.c.0.s8 %v3126
        %v3128 = vlaneseq
        %v3129 = vshrl.u32 %v3128, 7
        %v3130 = vsub.s32 %v3127, %v3129
        %v3131 = vrot.slane %v3117, %v3130
        %v3132 = vcombine.high %v372, 0.0
        %v3134 = vunpack.c.l.s4 1983009808
        %v3135 = vunpack.c.0.s8 %v3134
        %v3136 = vlaneseq
        %v3137 = vshrl.u32 %v3136, 7
        %v3138 = vsub.s32 %v3135, %v3137
        %v3139 = vrot.slane %v372, %v3138
        %v3141 = vunpack.c.l.s4 1983009808
        %v3142 = vunpack.c.0.s8 %v3141
        %v3143 = vlaneseq
        %v3144 = vshrl.u32 %v3143, 7
        %v3145 = vsub.s32 %v3142, %v3144
        %v3146 = vrot.slane %v3132, %v3145
        %v3147 = vcombine.low %v3124, %v3139
        %v3148 = vcombine.high %v3124, %v3139
        %v3150 = vunpack.c.l.s4 1934713408
        %v3151 = vunpack.c.0.s8 %v3150
        %v3152 = vlaneseq
        %v3153 = vshrl.u32 %v3152, 7
        %v3154 = vsub.s32 %v3151, %v3153
        %v3155 = vrot.slane %v3147, %v3154
        %v3157 = vunpack.c.l.s4 1934713408
        %v3158 = vunpack.c.0.s8 %v3157
        %v3159 = vlaneseq
        %v3160 = vshrl.u32 %v3159, 7
        %v3161 = vsub.s32 %v3158, %v3160
        %v3162 = vrot.slane %v3148, %v3161
        %v3163 = vcombine.low %v3131, %v3146
        %v3164 = vcombine.high %v3131, %v3146
        %v3166 = vunpack.c.l.s4 1934713408
        %v3167 = vunpack.c.0.s8 %v3166
        %v3168 = vlaneseq
        %v3169 = vshrl.u32 %v3168, 7
        %v3170 = vsub.s32 %v3167, %v3169
        %v3171 = vrot.slane %v3163, %v3170
        %v3173 = vunpack.c.l.s4 1934713408
        %v3174 = vunpack.c.0.s8 %v3173
        %v3175 = vlaneseq
        %v3176 = vshrl.u32 %v3175, 7
        %v3177 = vsub.s32 %v3174, %v3176
        %v3178 = vrot.slane %v3164, %v3177
        %v3179 = vcombine.high %v3155, 0.0
        %v3180 = vcombine.high %v3162, 0.0
        %v3181 = vcombine.high %v3171, 0.0
        %v3182 = vcombine.high %v3178, 0.0
        %v3183 = vcombine.high %v245, 0.0
        %v3185 = vunpack.c.l.s4 1983009808
        %v3186 = vunpack.c.0.s8 %v3185
        %v3187 = vlaneseq
        %v3188 = vshrl.u32 %v3187, 7
        %v3189 = vsub.s32 %v3186, %v3188
        %v3190 = vrot.slane %v245, %v3189
        %v3192 = vunpack.c.l.s4 1983009808
        %v3193 = vunpack.c.0.s8 %v3192
        %v3194 = vlaneseq
        %v3195 = vshrl.u32 %v3194, 7
        %v3196 = vsub.s32 %v3193, %v3195
        %v3197 = vrot.slane %v3183, %v3196
        %v3198 = vcombine.high %v373, 0.0
        %v3200 = vunpack.c.l.s4 1983009808
        %v3201 = vunpack.c.0.s8 %v3200
        %v3202 = vlaneseq
        %v3203 = vshrl.u32 %v3202, 7
        %v3204 = vsub.s32 %v3201, %v3203
        %v3205 = vrot.slane %v373, %v3204
        %v3207 = vunpack.c.l.s4 1983009808
        %v3208 = vunpack.c.0.s8 %v3207
        %v3209 = vlaneseq
        %v3210 = vshrl.u32 %v3209, 7
        %v3211 = vsub.s32 %v3208, %v3210
        %v3212 = vrot.slane %v3198, %v3211
        %v3213 = vcombine.low %v3190, %v3205
        %v3214 = vcombine.high %v3190, %v3205
        %v3216 = vunpack.c.l.s4 1934713408
        %v3217 = vunpack.c.0.s8 %v3216
        %v3218 = vlaneseq
        %v3219 = vshrl.u32 %v3218, 7
        %v3220 = vsub.s32 %v3217, %v3219
        %v3221 = vrot.slane %v3213, %v3220
        %v3223 = vunpack.c.l.s4 1934713408
        %v3224 = vunpack.c.0.s8 %v3223
        %v3225 = vlaneseq
        %v3226 = vshrl.u32 %v3225, 7
        %v3227 = vsub.s32 %v3224, %v3226
        %v3228 = vrot.slane %v3214, %v3227
        %v3229 = vcombine.low %v3197, %v3212
        %v3230 = vcombine.high %v3197, %v3212
        %v3232 = vunpack.c.l.s4 1934713408
        %v3233 = vunpack.c.0.s8 %v3232
        %v3234 = vlaneseq
        %v3235 = vshrl.u32 %v3234, 7
        %v3236 = vsub.s32 %v3233, %v3235
        %v3237 = vrot.slane %v3229, %v3236
        %v3239 = vunpack.c.l.s4 1934713408
        %v3240 = vunpack.c.0.s8 %v3239
        %v3241 = vlaneseq
        %v3242 = vshrl.u32 %v3241, 7
        %v3243 = vsub.s32 %v3240, %v3242
        %v3244 = vrot.slane %v3230, %v3243
        %v3245 = vcombine.high %v3221, 0.0
        %v3246 = vcombine.high %v3228, 0.0
        %v3247 = vcombine.high %v3237, 0.0
        %v3248 = vcombine.high %v3244, 0.0
        %v3249 = vcombine.high %v246, 0.0
        %v3251 = vunpack.c.l.s4 1983009808
        %v3252 = vunpack.c.0.s8 %v3251
        %v3253 = vlaneseq
        %v3254 = vshrl.u32 %v3253, 7
        %v3255 = vsub.s32 %v3252, %v3254
        %v3256 = vrot.slane %v246, %v3255
        %v3258 = vunpack.c.l.s4 1983009808
        %v3259 = vunpack.c.0.s8 %v3258
        %v3260 = vlaneseq
        %v3261 = vshrl.u32 %v3260, 7
        %v3262 = vsub.s32 %v3259, %v3261
        %v3263 = vrot.slane %v3249, %v3262
        %v3264 = vcombine.high %v374, 0.0
        %v3266 = vunpack.c.l.s4 1983009808
        %v3267 = vunpack.c.0.s8 %v3266
        %v3268 = vlaneseq
        %v3269 = vshrl.u32 %v3268, 7
        %v3270 = vsub.s32 %v3267, %v3269
        %v3271 = vrot.slane %v374, %v3270
        %v3273 = vunpack.c.l.s4 1983009808
        %v3274 = vunpack.c.0.s8 %v3273
        %v3275 = vlaneseq
        %v3276 = vshrl.u32 %v3275, 7
        %v3277 = vsub.s32 %v3274, %v3276
        %v3278 = vrot.slane %v3264, %v3277
        %v3279 = vcombine.low %v3256, %v3271
        %v3280 = vcombine.high %v3256, %v3271
        %v3282 = vunpack.c.l.s4 1934713408
        %v3283 = vunpack.c.0.s8 %v3282
        %v3284 = vlaneseq
        %v3285 = vshrl.u32 %v3284, 7
        %v3286 = vsub.s32 %v3283, %v3285
        %v3287 = vrot.slane %v3279, %v3286
        %v3289 = vunpack.c.l.s4 1934713408
        %v3290 = vunpack.c.0.s8 %v3289
        %v3291 = vlaneseq
        %v3292 = vshrl.u32 %v3291, 7
        %v3293 = vsub.s32 %v3290, %v3292
        %v3294 = vrot.slane %v3280, %v3293
        %v3295 = vcombine.low %v3263, %v3278
        %v3296 = vcombine.high %v3263, %v3278
        %v3298 = vunpack.c.l.s4 1934713408
        %v3299 = vunpack.c.0.s8 %v3298
        %v3300 = vlaneseq
        %v3301 = vshrl.u32 %v3300, 7
        %v3302 = vsub.s32 %v3299, %v3301
        %v3303 = vrot.slane %v3295, %v3302
        %v3305 = vunpack.c.l.s4 1934713408
        %v3306 = vunpack.c.0.s8 %v3305
        %v3307 = vlaneseq
        %v3308 = vshrl.u32 %v3307, 7
        %v3309 = vsub.s32 %v3306, %v3308
        %v3310 = vrot.slane %v3296, %v3309
        %v3311 = vcombine.high %v3287, 0.0
        %v3312 = vcombine.high %v3294, 0.0
        %v3313 = vcombine.high %v3303, 0.0
        %v3314 = vcombine.high %v3310, 0.0
        %v3315 = vcombine.high %v247, 0.0
        %v3317 = vunpack.c.l.s4 1983009808
        %v3318 = vunpack.c.0.s8 %v3317
        %v3319 = vlaneseq
        %v3320 = vshrl.u32 %v3319, 7
        %v3321 = vsub.s32 %v3318, %v3320
        %v3322 = vrot.slane %v247, %v3321
        %v3324 = vunpack.c.l.s4 1983009808
        %v3325 = vunpack.c.0.s8 %v3324
        %v3326 = vlaneseq
        %v3327 = vshrl.u32 %v3326, 7
        %v3328 = vsub.s32 %v3325, %v3327
        %v3329 = vrot.slane %v3315, %v3328
        %v3330 = vcombine.high %v375, 0.0
        %v3332 = vunpack.c.l.s4 1983009808
        %v3333 = vunpack.c.0.s8 %v3332
        %v3334 = vlaneseq
        %v3335 = vshrl.u32 %v3334, 7
        %v3336 = vsub.s32 %v3333, %v3335
        %v3337 = vrot.slane %v375, %v3336
        %v3339 = vunpack.c.l.s4 1983009808
        %v3340 = vunpack.c.0.s8 %v3339
        %v3341 = vlaneseq
        %v3342 = vshrl.u32 %v3341, 7
        %v3343 = vsub.s32 %v3340, %v3342
        %v3344 = vrot.slane %v3330, %v3343
        %v3345 = vcombine.low %v3322, %v3337
        %v3346 = vcombine.high %v3322, %v3337
        %v3348 = vunpack.c.l.s4 1934713408
        %v3349 = vunpack.c.0.s8 %v3348
        %v3350 = vlaneseq
        %v3351 = vshrl.u32 %v3350, 7
        %v3352 = vsub.s32 %v3349, %v3351
        %v3353 = vrot.slane %v3345, %v3352
        %v3355 = vunpack.c.l.s4 1934713408
        %v3356 = vunpack.c.0.s8 %v3355
        %v3357 = vlaneseq
        %v3358 = vshrl.u32 %v3357, 7
        %v3359 = vsub.s32 %v3356, %v3358
        %v3360 = vrot.slane %v3346, %v3359
        %v3361 = vcombine.low %v3329, %v3344
        %v3362 = vcombine.high %v3329, %v3344
        %v3364 = vunpack.c.l.s4 1934713408
        %v3365 = vunpack.c.0.s8 %v3364
        %v3366 = vlaneseq
        %v3367 = vshrl.u32 %v3366, 7
        %v3368 = vsub.s32 %v3365, %v3367
        %v3369 = vrot.slane %v3361, %v3368
        %v3371 = vunpack.c.l.s4 1934713408
        %v3372 = vunpack.c.0.s8 %v3371
        %v3373 = vlaneseq
        %v3374 = vshrl.u32 %v3373, 7
        %v3375 = vsub.s32 %v3372, %v3374
        %v3376 = vrot.slane %v3362, %v3375
        %v3377 = vcombine.high %v3353, 0.0
        %v3378 = vcombine.high %v3360, 0.0
        %v3379 = vcombine.high %v3369, 0.0
        %v3380 = vcombine.high %v3376, 0.0
        %v3381 = vcombine.high %v248, 0.0
        %v3383 = vunpack.c.l.s4 1983009808
        %v3384 = vunpack.c.0.s8 %v3383
        %v3385 = vlaneseq
        %v3386 = vshrl.u32 %v3385, 7
        %v3387 = vsub.s32 %v3384, %v3386
        %v3388 = vrot.slane %v248, %v3387
        %v3390 = vunpack.c.l.s4 1983009808
        %v3391 = vunpack.c.0.s8 %v3390
        %v3392 = vlaneseq
        %v3393 = vshrl.u32 %v3392, 7
        %v3394 = vsub.s32 %v3391, %v3393
        %v3395 = vrot.slane %v3381, %v3394
        %v3396 = vcombine.high %v376, 0.0
        %v3398 = vunpack.c.l.s4 1983009808
        %v3399 = vunpack.c.0.s8 %v3398
        %v3400 = vlaneseq
        %v3401 = vshrl.u32 %v3400, 7
        %v3402 = vsub.s32 %v3399, %v3401
        %v3403 = vrot.slane %v376, %v3402
        %v3405 = vunpack.c.l.s4 1983009808
        %v3406 = vunpack.c.0.s8 %v3405
        %v3407 = vlaneseq
        %v3408 = vshrl.u32 %v3407, 7
        %v3409 = vsub.s32 %v3406, %v3408
        %v3410 = vrot.slane %v3396, %v3409
        %v3411 = vcombine.low %v3388, %v3403
        %v3412 = vcombine.high %v3388, %v3403
        %v3414 = vunpack.c.l.s4 1934713408
        %v3415 = vunpack.c.0.s8 %v3414
        %v3416 = vlaneseq
        %v3417 = vshrl.u32 %v3416, 7
        %v3418 = vsub.s32 %v3415, %v3417
        %v3419 = vrot.slane %v3411, %v3418
        %v3421 = vunpack.c.l.s4 1934713408
        %v3422 = vunpack.c.0.s8 %v3421
        %v3423 = vlaneseq
        %v3424 = vshrl.u32 %v3423, 7
        %v3425 = vsub.s32 %v3422, %v3424
        %v3426 = vrot.slane %v3412, %v3425
        %v3427 = vcombine.low %v3395, %v3410
        %v3428 = vcombine.high %v3395, %v3410
        %v3430 = vunpack.c.l.s4 1934713408
        %v3431 = vunpack.c.0.s8 %v3430
        %v3432 = vlaneseq
        %v3433 = vshrl.u32 %v3432, 7
        %v3434 = vsub.s32 %v3431, %v3433
        %v3435 = vrot.slane %v3427, %v3434
        %v3437 = vunpack.c.l.s4 1934713408
        %v3438 = vunpack.c.0.s8 %v3437
        %v3439 = vlaneseq
        %v3440 = vshrl.u32 %v3439, 7
        %v3441 = vsub.s32 %v3438, %v3440
        %v3442 = vrot.slane %v3428, %v3441
        %v3443 = vcombine.high %v3419, 0.0
        %v3444 = vcombine.high %v3426, 0.0
        %v3445 = vcombine.high %v3435, 0.0
        %v3446 = vcombine.high %v3442, 0.0
        %v3447 = vcombine.high %v249, 0.0
        %v3449 = vunpack.c.l.s4 1983009808
        %v3450 = vunpack.c.0.s8 %v3449
        %v3451 = vlaneseq
        %v3452 = vshrl.u32 %v3451, 7
        %v3453 = vsub.s32 %v3450, %v3452
        %v3454 = vrot.slane %v249, %v3453
        %v3456 = vunpack.c.l.s4 1983009808
        %v3457 = vunpack.c.0.s8 %v3456
        %v3458 = vlaneseq
        %v3459 = vshrl.u32 %v3458, 7
        %v3460 = vsub.s32 %v3457, %v3459
        %v3461 = vrot.slane %v3447, %v3460
        %v3462 = vcombine.high %v377, 0.0
        %v3464 = vunpack.c.l.s4 1983009808
        %v3465 = vunpack.c.0.s8 %v3464
        %v3466 = vlaneseq
        %v3467 = vshrl.u32 %v3466, 7
        %v3468 = vsub.s32 %v3465, %v3467
        %v3469 = vrot.slane %v377, %v3468
        %v3471 = vunpack.c.l.s4 1983009808
        %v3472 = vunpack.c.0.s8 %v3471
        %v3473 = vlaneseq
        %v3474 = vshrl.u32 %v3473, 7
        %v3475 = vsub.s32 %v3472, %v3474
        %v3476 = vrot.slane %v3462, %v3475
        %v3477 = vcombine.low %v3454, %v3469
        %v3478 = vcombine.high %v3454, %v3469
        %v3480 = vunpack.c.l.s4 1934713408
        %v3481 = vunpack.c.0.s8 %v3480
        %v3482 = vlaneseq
        %v3483 = vshrl.u32 %v3482, 7
        %v3484 = vsub.s32 %v3481, %v3483
        %v3485 = vrot.slane %v3477, %v3484
        %v3487 = vunpack.c.l.s4 1934713408
        %v3488 = vunpack.c.0.s8 %v3487
        %v3489 = vlaneseq
        %v3490 = vshrl.u32 %v3489, 7
        %v3491 = vsub.s32 %v3488, %v3490
        %v3492 = vrot.slane %v3478, %v3491
        %v3493 = vcombine.low %v3461, %v3476
        %v3494 = vcombine.high %v3461, %v3476
        %v3496 = vunpack.c.l.s4 1934713408
        %v3497 = vunpack.c.0.s8 %v3496
        %v3498 = vlaneseq
        %v3499 = vshrl.u32 %v3498, 7
        %v3500 = vsub.s32 %v3497, %v3499
        %v3501 = vrot.slane %v3493, %v3500
        %v3503 = vunpack.c.l.s4 1934713408
        %v3504 = vunpack.c.0.s8 %v3503
        %v3505 = vlaneseq
        %v3506 = vshrl.u32 %v3505, 7
        %v3507 = vsub.s32 %v3504, %v3506
        %v3508 = vrot.slane %v3494, %v3507
        %v3509 = vcombine.high %v3485, 0.0
        %v3510 = vcombine.high %v3492, 0.0
        %v3511 = vcombine.high %v3501, 0.0
        %v3512 = vcombine.high %v3508, 0.0
        %v3513 = vcombine.high %v250, 0.0
        %v3515 = vunpack.c.l.s4 1983009808
        %v3516 = vunpack.c.0.s8 %v3515
        %v3517 = vlaneseq
        %v3518 = vshrl.u32 %v3517, 7
        %v3519 = vsub.s32 %v3516, %v3518
        %v3520 = vrot.slane %v250, %v3519
        %v3522 = vunpack.c.l.s4 1983009808
        %v3523 = vunpack.c.0.s8 %v3522
        %v3524 = vlaneseq
        %v3525 = vshrl.u32 %v3524, 7
        %v3526 = vsub.s32 %v3523, %v3525
        %v3527 = vrot.slane %v3513, %v3526
        %v3528 = vcombine.high %v378, 0.0
        %v3530 = vunpack.c.l.s4 1983009808
        %v3531 = vunpack.c.0.s8 %v3530
        %v3532 = vlaneseq
        %v3533 = vshrl.u32 %v3532, 7
        %v3534 = vsub.s32 %v3531, %v3533
        %v3535 = vrot.slane %v378, %v3534
        %v3537 = vunpack.c.l.s4 1983009808
        %v3538 = vunpack.c.0.s8 %v3537
        %v3539 = vlaneseq
        %v3540 = vshrl.u32 %v3539, 7
        %v3541 = vsub.s32 %v3538, %v3540
        %v3542 = vrot.slane %v3528, %v3541
        %v3543 = vcombine.low %v3520, %v3535
        %v3544 = vcombine.high %v3520, %v3535
        %v3546 = vunpack.c.l.s4 1934713408
        %v3547 = vunpack.c.0.s8 %v3546
        %v3548 = vlaneseq
        %v3549 = vshrl.u32 %v3548, 7
        %v3550 = vsub.s32 %v3547, %v3549
        %v3551 = vrot.slane %v3543, %v3550
        %v3553 = vunpack.c.l.s4 1934713408
        %v3554 = vunpack.c.0.s8 %v3553
        %v3555 = vlaneseq
        %v3556 = vshrl.u32 %v3555, 7
        %v3557 = vsub.s32 %v3554, %v3556
        %v3558 = vrot.slane %v3544, %v3557
        %v3559 = vcombine.low %v3527, %v3542
        %v3560 = vcombine.high %v3527, %v3542
        %v3562 = vunpack.c.l.s4 1934713408
        %v3563 = vunpack.c.0.s8 %v3562
        %v3564 = vlaneseq
        %v3565 = vshrl.u32 %v3564, 7
        %v3566 = vsub.s32 %v3563, %v3565
        %v3567 = vrot.slane %v3559, %v3566
        %v3569 = vunpack.c.l.s4 1934713408
        %v3570 = vunpack.c.0.s8 %v3569
        %v3571 = vlaneseq
        %v3572 = vshrl.u32 %v3571, 7
        %v3573 = vsub.s32 %v3570, %v3572
        %v3574 = vrot.slane %v3560, %v3573
        %v3575 = vcombine.high %v3551, 0.0
        %v3576 = vcombine.high %v3558, 0.0
        %v3577 = vcombine.high %v3567, 0.0
        %v3578 = vcombine.high %v3574, 0.0
        %v3579 = vcombine.high %v267, 0.0
        %v3581 = vunpack.c.l.s4 1983009808
        %v3582 = vunpack.c.0.s8 %v3581
        %v3583 = vlaneseq
        %v3584 = vshrl.u32 %v3583, 7
        %v3585 = vsub.s32 %v3582, %v3584
        %v3586 = vrot.slane %v267, %v3585
        %v3588 = vunpack.c.l.s4 1983009808
        %v3589 = vunpack.c.0.s8 %v3588
        %v3590 = vlaneseq
        %v3591 = vshrl.u32 %v3590, 7
        %v3592 = vsub.s32 %v3589, %v3591
        %v3593 = vrot.slane %v3579, %v3592
        %v3594 = vcombine.high %v395, 0.0
        %v3596 = vunpack.c.l.s4 1983009808
        %v3597 = vunpack.c.0.s8 %v3596
        %v3598 = vlaneseq
        %v3599 = vshrl.u32 %v3598, 7
        %v3600 = vsub.s32 %v3597, %v3599
        %v3601 = vrot.slane %v395, %v3600
        %v3603 = vunpack.c.l.s4 1983009808
        %v3604 = vunpack.c.0.s8 %v3603
        %v3605 = vlaneseq
        %v3606 = vshrl.u32 %v3605, 7
        %v3607 = vsub.s32 %v3604, %v3606
        %v3608 = vrot.slane %v3594, %v3607
        %v3609 = vcombine.low %v3586, %v3601
        %v3610 = vcombine.high %v3586, %v3601
        %v3612 = vunpack.c.l.s4 1934713408
        %v3613 = vunpack.c.0.s8 %v3612
        %v3614 = vlaneseq
        %v3615 = vshrl.u32 %v3614, 7
        %v3616 = vsub.s32 %v3613, %v3615
        %v3617 = vrot.slane %v3609, %v3616
        %v3619 = vunpack.c.l.s4 1934713408
        %v3620 = vunpack.c.0.s8 %v3619
        %v3621 = vlaneseq
        %v3622 = vshrl.u32 %v3621, 7
        %v3623 = vsub.s32 %v3620, %v3622
        %v3624 = vrot.slane %v3610, %v3623
        %v3625 = vcombine.low %v3593, %v3608
        %v3626 = vcombine.high %v3593, %v3608
        %v3628 = vunpack.c.l.s4 1934713408
        %v3629 = vunpack.c.0.s8 %v3628
        %v3630 = vlaneseq
        %v3631 = vshrl.u32 %v3630, 7
        %v3632 = vsub.s32 %v3629, %v3631
        %v3633 = vrot.slane %v3625, %v3632
        %v3635 = vunpack.c.l.s4 1934713408
        %v3636 = vunpack.c.0.s8 %v3635
        %v3637 = vlaneseq
        %v3638 = vshrl.u32 %v3637, 7
        %v3639 = vsub.s32 %v3636, %v3638
        %v3640 = vrot.slane %v3626, %v3639
        %v3641 = vcombine.high %v3617, 0.0
        %v3642 = vcombine.high %v3624, 0.0
        %v3643 = vcombine.high %v3633, 0.0
        %v3644 = vcombine.high %v3640, 0.0
        %v3645 = vcombine.high %v268, 0.0
        %v3647 = vunpack.c.l.s4 1983009808
        %v3648 = vunpack.c.0.s8 %v3647
        %v3649 = vlaneseq
        %v3650 = vshrl.u32 %v3649, 7
        %v3651 = vsub.s32 %v3648, %v3650
        %v3652 = vrot.slane %v268, %v3651
        %v3654 = vunpack.c.l.s4 1983009808
        %v3655 = vunpack.c.0.s8 %v3654
        %v3656 = vlaneseq
        %v3657 = vshrl.u32 %v3656, 7
        %v3658 = vsub.s32 %v3655, %v3657
        %v3659 = vrot.slane %v3645, %v3658
        %v3660 = vcombine.high %v396, 0.0
        %v3662 = vunpack.c.l.s4 1983009808
        %v3663 = vunpack.c.0.s8 %v3662
        %v3664 = vlaneseq
        %v3665 = vshrl.u32 %v3664, 7
        %v3666 = vsub.s32 %v3663, %v3665
        %v3667 = vrot.slane %v396, %v3666
        %v3669 = vunpack.c.l.s4 1983009808
        %v3670 = vunpack.c.0.s8 %v3669
        %v3671 = vlaneseq
        %v3672 = vshrl.u32 %v3671, 7
        %v3673 = vsub.s32 %v3670, %v3672
        %v3674 = vrot.slane %v3660, %v3673
        %v3675 = vcombine.low %v3652, %v3667
        %v3676 = vcombine.high %v3652, %v3667
        %v3678 = vunpack.c.l.s4 1934713408
        %v3679 = vunpack.c.0.s8 %v3678
        %v3680 = vlaneseq
        %v3681 = vshrl.u32 %v3680, 7
        %v3682 = vsub.s32 %v3679, %v3681
        %v3683 = vrot.slane %v3675, %v3682
        %v3685 = vunpack.c.l.s4 1934713408
        %v3686 = vunpack.c.0.s8 %v3685
        %v3687 = vlaneseq
        %v3688 = vshrl.u32 %v3687, 7
        %v3689 = vsub.s32 %v3686, %v3688
        %v3690 = vrot.slane %v3676, %v3689
        %v3691 = vcombine.low %v3659, %v3674
        %v3692 = vcombine.high %v3659, %v3674
        %v3694 = vunpack.c.l.s4 1934713408
        %v3695 = vunpack.c.0.s8 %v3694
        %v3696 = vlaneseq
        %v3697 = vshrl.u32 %v3696, 7
        %v3698 = vsub.s32 %v3695, %v3697
        %v3699 = vrot.slane %v3691, %v3698
        %v3701 = vunpack.c.l.s4 1934713408
        %v3702 = vunpack.c.0.s8 %v3701
        %v3703 = vlaneseq
        %v3704 = vshrl.u32 %v3703, 7
        %v3705 = vsub.s32 %v3702, %v3704
        %v3706 = vrot.slane %v3692, %v3705
        %v3707 = vcombine.high %v3683, 0.0
        %v3708 = vcombine.high %v3690, 0.0
        %v3709 = vcombine.high %v3699, 0.0
        %v3710 = vcombine.high %v3706, 0.0
        %v3711 = vcombine.high %v269, 0.0
        %v3713 = vunpack.c.l.s4 1983009808
        %v3714 = vunpack.c.0.s8 %v3713
        %v3715 = vlaneseq
        %v3716 = vshrl.u32 %v3715, 7
        %v3717 = vsub.s32 %v3714, %v3716
        %v3718 = vrot.slane %v269, %v3717
        %v3720 = vunpack.c.l.s4 1983009808
        %v3721 = vunpack.c.0.s8 %v3720
        %v3722 = vlaneseq
        %v3723 = vshrl.u32 %v3722, 7
        %v3724 = vsub.s32 %v3721, %v3723
        %v3725 = vrot.slane %v3711, %v3724
        %v3726 = vcombine.high %v397, 0.0
        %v3728 = vunpack.c.l.s4 1983009808
        %v3729 = vunpack.c.0.s8 %v3728
        %v3730 = vlaneseq
        %v3731 = vshrl.u32 %v3730, 7
        %v3732 = vsub.s32 %v3729, %v3731
        %v3733 = vrot.slane %v397, %v3732
        %v3735 = vunpack.c.l.s4 1983009808
        %v3736 = vunpack.c.0.s8 %v3735
        %v3737 = vlaneseq
        %v3738 = vshrl.u32 %v3737, 7
        %v3739 = vsub.s32 %v3736, %v3738
        %v3740 = vrot.slane %v3726, %v3739
        %v3741 = vcombine.low %v3718, %v3733
        %v3742 = vcombine.high %v3718, %v3733
        %v3744 = vunpack.c.l.s4 1934713408
        %v3745 = vunpack.c.0.s8 %v3744
        %v3746 = vlaneseq
        %v3747 = vshrl.u32 %v3746, 7
        %v3748 = vsub.s32 %v3745, %v3747
        %v3749 = vrot.slane %v3741, %v3748
        %v3751 = vunpack.c.l.s4 1934713408
        %v3752 = vunpack.c.0.s8 %v3751
        %v3753 = vlaneseq
        %v3754 = vshrl.u32 %v3753, 7
        %v3755 = vsub.s32 %v3752, %v3754
        %v3756 = vrot.slane %v3742, %v3755
        %v3757 = vcombine.low %v3725, %v3740
        %v3758 = vcombine.high %v3725, %v3740
        %v3760 = vunpack.c.l.s4 1934713408
        %v3761 = vunpack.c.0.s8 %v3760
        %v3762 = vlaneseq
        %v3763 = vshrl.u32 %v3762, 7
        %v3764 = vsub.s32 %v3761, %v3763
        %v3765 = vrot.slane %v3757, %v3764
        %v3767 = vunpack.c.l.s4 1934713408
        %v3768 = vunpack.c.0.s8 %v3767
        %v3769 = vlaneseq
        %v3770 = vshrl.u32 %v3769, 7
        %v3771 = vsub.s32 %v3768, %v3770
        %v3772 = vrot.slane %v3758, %v3771
        %v3773 = vcombine.high %v3749, 0.0
        %v3774 = vcombine.high %v3756, 0.0
        %v3775 = vcombine.high %v3765, 0.0
        %v3776 = vcombine.high %v3772, 0.0
        %v3777 = vcombine.high %v270, 0.0
        %v3779 = vunpack.c.l.s4 1983009808
        %v3780 = vunpack.c.0.s8 %v3779
        %v3781 = vlaneseq
        %v3782 = vshrl.u32 %v3781, 7
        %v3783 = vsub.s32 %v3780, %v3782
        %v3784 = vrot.slane %v270, %v3783
        %v3786 = vunpack.c.l.s4 1983009808
        %v3787 = vunpack.c.0.s8 %v3786
        %v3788 = vlaneseq
        %v3789 = vshrl.u32 %v3788, 7
        %v3790 = vsub.s32 %v3787, %v3789
        %v3791 = vrot.slane %v3777, %v3790
        %v3792 = vcombine.high %v398, 0.0
        %v3794 = vunpack.c.l.s4 1983009808
        %v3795 = vunpack.c.0.s8 %v3794
        %v3796 = vlaneseq
        %v3797 = vshrl.u32 %v3796, 7
        %v3798 = vsub.s32 %v3795, %v3797
        %v3799 = vrot.slane %v398, %v3798
        %v3801 = vunpack.c.l.s4 1983009808
        %v3802 = vunpack.c.0.s8 %v3801
        %v3803 = vlaneseq
        %v3804 = vshrl.u32 %v3803, 7
        %v3805 = vsub.s32 %v3802, %v3804
        %v3806 = vrot.slane %v3792, %v3805
        %v3807 = vcombine.low %v3784, %v3799
        %v3808 = vcombine.high %v3784, %v3799
        %v3810 = vunpack.c.l.s4 1934713408
        %v3811 = vunpack.c.0.s8 %v3810
        %v3812 = vlaneseq
        %v3813 = vshrl.u32 %v3812, 7
        %v3814 = vsub.s32 %v3811, %v3813
        %v3815 = vrot.slane %v3807, %v3814
        %v3817 = vunpack.c.l.s4 1934713408
        %v3818 = vunpack.c.0.s8 %v3817
        %v3819 = vlaneseq
        %v3820 = vshrl.u32 %v3819, 7
        %v3821 = vsub.s32 %v3818, %v3820
        %v3822 = vrot.slane %v3808, %v3821
        %v3823 = vcombine.low %v3791, %v3806
        %v3824 = vcombine.high %v3791, %v3806
        %v3826 = vunpack.c.l.s4 1934713408
        %v3827 = vunpack.c.0.s8 %v3826
        %v3828 = vlaneseq
        %v3829 = vshrl.u32 %v3828, 7
        %v3830 = vsub.s32 %v3827, %v3829
        %v3831 = vrot.slane %v3823, %v3830
        %v3833 = vunpack.c.l.s4 1934713408
        %v3834 = vunpack.c.0.s8 %v3833
        %v3835 = vlaneseq
        %v3836 = vshrl.u32 %v3835, 7
        %v3837 = vsub.s32 %v3834, %v3836
        %v3838 = vrot.slane %v3824, %v3837
        %v3839 = vcombine.high %v3815, 0.0
        %v3840 = vcombine.high %v3822, 0.0
        %v3841 = vcombine.high %v3831, 0.0
        %v3842 = vcombine.high %v3838, 0.0
        %v3843 = vcombine.high %v271, 0.0
        %v3845 = vunpack.c.l.s4 1983009808
        %v3846 = vunpack.c.0.s8 %v3845
        %v3847 = vlaneseq
        %v3848 = vshrl.u32 %v3847, 7
        %v3849 = vsub.s32 %v3846, %v3848
        %v3850 = vrot.slane %v271, %v3849
        %v3852 = vunpack.c.l.s4 1983009808
        %v3853 = vunpack.c.0.s8 %v3852
        %v3854 = vlaneseq
        %v3855 = vshrl.u32 %v3854, 7
        %v3856 = vsub.s32 %v3853, %v3855
        %v3857 = vrot.slane %v3843, %v3856
        %v3858 = vcombine.high %v399, 0.0
        %v3860 = vunpack.c.l.s4 1983009808
        %v3861 = vunpack.c.0.s8 %v3860
        %v3862 = vlaneseq
        %v3863 = vshrl.u32 %v3862, 7
        %v3864 = vsub.s32 %v3861, %v3863
        %v3865 = vrot.slane %v399, %v3864
        %v3867 = vunpack.c.l.s4 1983009808
        %v3868 = vunpack.c.0.s8 %v3867
        %v3869 = vlaneseq
        %v3870 = vshrl.u32 %v3869, 7
        %v3871 = vsub.s32 %v3868, %v3870
        %v3872 = vrot.slane %v3858, %v3871
        %v3873 = vcombine.low %v3850, %v3865
        %v3874 = vcombine.high %v3850, %v3865
        %v3876 = vunpack.c.l.s4 1934713408
        %v3877 = vunpack.c.0.s8 %v3876
        %v3878 = vlaneseq
        %v3879 = vshrl.u32 %v3878, 7
        %v3880 = vsub.s32 %v3877, %v3879
        %v3881 = vrot.slane %v3873, %v3880
        %v3883 = vunpack.c.l.s4 1934713408
        %v3884 = vunpack.c.0.s8 %v3883
        %v3885 = vlaneseq
        %v3886 = vshrl.u32 %v3885, 7
        %v3887 = vsub.s32 %v3884, %v3886
        %v3888 = vrot.slane %v3874, %v3887
        %v3889 = vcombine.low %v3857, %v3872
        %v3890 = vcombine.high %v3857, %v3872
        %v3892 = vunpack.c.l.s4 1934713408
        %v3893 = vunpack.c.0.s8 %v3892
        %v3894 = vlaneseq
        %v3895 = vshrl.u32 %v3894, 7
        %v3896 = vsub.s32 %v3893, %v3895
        %v3897 = vrot.slane %v3889, %v3896
        %v3899 = vunpack.c.l.s4 1934713408
        %v3900 = vunpack.c.0.s8 %v3899
        %v3901 = vlaneseq
        %v3902 = vshrl.u32 %v3901, 7
        %v3903 = vsub.s32 %v3900, %v3902
        %v3904 = vrot.slane %v3890, %v3903
        %v3905 = vcombine.high %v3881, 0.0
        %v3906 = vcombine.high %v3888, 0.0
        %v3907 = vcombine.high %v3897, 0.0
        %v3908 = vcombine.high %v3904, 0.0
        %v3909 = vcombine.high %v272, 0.0
        %v3911 = vunpack.c.l.s4 1983009808
        %v3912 = vunpack.c.0.s8 %v3911
        %v3913 = vlaneseq
        %v3914 = vshrl.u32 %v3913, 7
        %v3915 = vsub.s32 %v3912, %v3914
        %v3916 = vrot.slane %v272, %v3915
        %v3918 = vunpack.c.l.s4 1983009808
        %v3919 = vunpack.c.0.s8 %v3918
        %v3920 = vlaneseq
        %v3921 = vshrl.u32 %v3920, 7
        %v3922 = vsub.s32 %v3919, %v3921
        %v3923 = vrot.slane %v3909, %v3922
        %v3924 = vcombine.high %v400, 0.0
        %v3926 = vunpack.c.l.s4 1983009808
        %v3927 = vunpack.c.0.s8 %v3926
        %v3928 = vlaneseq
        %v3929 = vshrl.u32 %v3928, 7
        %v3930 = vsub.s32 %v3927, %v3929
        %v3931 = vrot.slane %v400, %v3930
        %v3933 = vunpack.c.l.s4 1983009808
        %v3934 = vunpack.c.0.s8 %v3933
        %v3935 = vlaneseq
        %v3936 = vshrl.u32 %v3935, 7
        %v3937 = vsub.s32 %v3934, %v3936
        %v3938 = vrot.slane %v3924, %v3937
        %v3939 = vcombine.low %v3916, %v3931
        %v3940 = vcombine.high %v3916, %v3931
        %v3942 = vunpack.c.l.s4 1934713408
        %v3943 = vunpack.c.0.s8 %v3942
        %v3944 = vlaneseq
        %v3945 = vshrl.u32 %v3944, 7
        %v3946 = vsub.s32 %v3943, %v3945
        %v3947 = vrot.slane %v3939, %v3946
        %v3949 = vunpack.c.l.s4 1934713408
        %v3950 = vunpack.c.0.s8 %v3949
        %v3951 = vlaneseq
        %v3952 = vshrl.u32 %v3951, 7
        %v3953 = vsub.s32 %v3950, %v3952
        %v3954 = vrot.slane %v3940, %v3953
        %v3955 = vcombine.low %v3923, %v3938
        %v3956 = vcombine.high %v3923, %v3938
        %v3958 = vunpack.c.l.s4 1934713408
        %v3959 = vunpack.c.0.s8 %v3958
        %v3960 = vlaneseq
        %v3961 = vshrl.u32 %v3960, 7
        %v3962 = vsub.s32 %v3959, %v3961
        %v3963 = vrot.slane %v3955, %v3962
        %v3965 = vunpack.c.l.s4 1934713408
        %v3966 = vunpack.c.0.s8 %v3965
        %v3967 = vlaneseq
        %v3968 = vshrl.u32 %v3967, 7
        %v3969 = vsub.s32 %v3966, %v3968
        %v3970 = vrot.slane %v3956, %v3969
        %v3971 = vcombine.high %v3947, 0.0
        %v3972 = vcombine.high %v3954, 0.0
        %v3973 = vcombine.high %v3963, 0.0
        %v3974 = vcombine.high %v3970, 0.0
        %v3975 = vcombine.high %v273, 0.0
        %v3977 = vunpack.c.l.s4 1983009808
        %v3978 = vunpack.c.0.s8 %v3977
        %v3979 = vlaneseq
        %v3980 = vshrl.u32 %v3979, 7
        %v3981 = vsub.s32 %v3978, %v3980
        %v3982 = vrot.slane %v273, %v3981
        %v3984 = vunpack.c.l.s4 1983009808
        %v3985 = vunpack.c.0.s8 %v3984
        %v3986 = vlaneseq
        %v3987 = vshrl.u32 %v3986, 7
        %v3988 = vsub.s32 %v3985, %v3987
        %v3989 = vrot.slane %v3975, %v3988
        %v3990 = vcombine.high %v401, 0.0
        %v3992 = vunpack.c.l.s4 1983009808
        %v3993 = vunpack.c.0.s8 %v3992
        %v3994 = vlaneseq
        %v3995 = vshrl.u32 %v3994, 7
        %v3996 = vsub.s32 %v3993, %v3995
        %v3997 = vrot.slane %v401, %v3996
        %v3999 = vunpack.c.l.s4 1983009808
        %v4000 = vunpack.c.0.s8 %v3999
        %v4001 = vlaneseq
        %v4002 = vshrl.u32 %v4001, 7
        %v4003 = vsub.s32 %v4000, %v4002
        %v4004 = vrot.slane %v3990, %v4003
        %v4005 = vcombine.low %v3982, %v3997
        %v4006 = vcombine.high %v3982, %v3997
        %v4008 = vunpack.c.l.s4 1934713408
        %v4009 = vunpack.c.0.s8 %v4008
        %v4010 = vlaneseq
        %v4011 = vshrl.u32 %v4010, 7
        %v4012 = vsub.s32 %v4009, %v4011
        %v4013 = vrot.slane %v4005, %v4012
        %v4015 = vunpack.c.l.s4 1934713408
        %v4016 = vunpack.c.0.s8 %v4015
        %v4017 = vlaneseq
        %v4018 = vshrl.u32 %v4017, 7
        %v4019 = vsub.s32 %v4016, %v4018
        %v4020 = vrot.slane %v4006, %v4019
        %v4021 = vcombine.low %v3989, %v4004
        %v4022 = vcombine.high %v3989, %v4004
        %v4024 = vunpack.c.l.s4 1934713408
        %v4025 = vunpack.c.0.s8 %v4024
        %v4026 = vlaneseq
        %v4027 = vshrl.u32 %v4026, 7
        %v4028 = vsub.s32 %v4025, %v4027
        %v4029 = vrot.slane %v4021, %v4028
        %v4031 = vunpack.c.l.s4 1934713408
        %v4032 = vunpack.c.0.s8 %v4031
        %v4033 = vlaneseq
        %v4034 = vshrl.u32 %v4033, 7
        %v4035 = vsub.s32 %v4032, %v4034
        %v4036 = vrot.slane %v4022, %v4035
        %v4037 = vcombine.high %v4013, 0.0
        %v4038 = vcombine.high %v4020, 0.0
        %v4039 = vcombine.high %v4029, 0.0
        %v4040 = vcombine.high %v4036, 0.0
        %v4041 = vcombine.high %v274, 0.0
        %v4043 = vunpack.c.l.s4 1983009808
        %v4044 = vunpack.c.0.s8 %v4043
        %v4045 = vlaneseq
        %v4046 = vshrl.u32 %v4045, 7
        %v4047 = vsub.s32 %v4044, %v4046
        %v4048 = vrot.slane %v274, %v4047
        %v4050 = vunpack.c.l.s4 1983009808
        %v4051 = vunpack.c.0.s8 %v4050
        %v4052 = vlaneseq
        %v4053 = vshrl.u32 %v4052, 7
        %v4054 = vsub.s32 %v4051, %v4053
        %v4055 = vrot.slane %v4041, %v4054
        %v4056 = vcombine.high %v402, 0.0
        %v4058 = vunpack.c.l.s4 1983009808
        %v4059 = vunpack.c.0.s8 %v4058
        %v4060 = vlaneseq
        %v4061 = vshrl.u32 %v4060, 7
        %v4062 = vsub.s32 %v4059, %v4061
        %v4063 = vrot.slane %v402, %v4062
        %v4065 = vunpack.c.l.s4 1983009808
        %v4066 = vunpack.c.0.s8 %v4065
        %v4067 = vlaneseq
        %v4068 = vshrl.u32 %v4067, 7
        %v4069 = vsub.s32 %v4066, %v4068
        %v4070 = vrot.slane %v4056, %v4069
        %v4071 = vcombine.low %v4048, %v4063
        %v4072 = vcombine.high %v4048, %v4063
        %v4074 = vunpack.c.l.s4 1934713408
        %v4075 = vunpack.c.0.s8 %v4074
        %v4076 = vlaneseq
        %v4077 = vshrl.u32 %v4076, 7
        %v4078 = vsub.s32 %v4075, %v4077
        %v4079 = vrot.slane %v4071, %v4078
        %v4081 = vunpack.c.l.s4 1934713408
        %v4082 = vunpack.c.0.s8 %v4081
        %v4083 = vlaneseq
        %v4084 = vshrl.u32 %v4083, 7
        %v4085 = vsub.s32 %v4082, %v4084
        %v4086 = vrot.slane %v4072, %v4085
        %v4087 = vcombine.low %v4055, %v4070
        %v4088 = vcombine.high %v4055, %v4070
        %v4090 = vunpack.c.l.s4 1934713408
        %v4091 = vunpack.c.0.s8 %v4090
        %v4092 = vlaneseq
        %v4093 = vshrl.u32 %v4092, 7
        %v4094 = vsub.s32 %v4091, %v4093
        %v4095 = vrot.slane %v4087, %v4094
        %v4097 = vunpack.c.l.s4 1934713408
        %v4098 = vunpack.c.0.s8 %v4097
        %v4099 = vlaneseq
        %v4100 = vshrl.u32 %v4099, 7
        %v4101 = vsub.s32 %v4098, %v4100
        %v4102 = vrot.slane %v4088, %v4101
        %v4103 = vcombine.high %v4079, 0.0
        %v4104 = vcombine.high %v4086, 0.0
        %v4105 = vcombine.high %v4095, 0.0
        %v4106 = vcombine.high %v4102, 0.0
        %v4107 = vcombine.high %v275, 0.0
        %v4109 = vunpack.c.l.s4 1983009808
        %v4110 = vunpack.c.0.s8 %v4109
        %v4111 = vlaneseq
        %v4112 = vshrl.u32 %v4111, 7
        %v4113 = vsub.s32 %v4110, %v4112
        %v4114 = vrot.slane %v275, %v4113
        %v4116 = vunpack.c.l.s4 1983009808
        %v4117 = vunpack.c.0.s8 %v4116
        %v4118 = vlaneseq
        %v4119 = vshrl.u32 %v4118, 7
        %v4120 = vsub.s32 %v4117, %v4119
        %v4121 = vrot.slane %v4107, %v4120
        %v4122 = vcombine.high %v403, 0.0
        %v4124 = vunpack.c.l.s4 1983009808
        %v4125 = vunpack.c.0.s8 %v4124
        %v4126 = vlaneseq
        %v4127 = vshrl.u32 %v4126, 7
        %v4128 = vsub.s32 %v4125, %v4127
        %v4129 = vrot.slane %v403, %v4128
        %v4131 = vunpack.c.l.s4 1983009808
        %v4132 = vunpack.c.0.s8 %v4131
        %v4133 = vlaneseq
        %v4134 = vshrl.u32 %v4133, 7
        %v4135 = vsub.s32 %v4132, %v4134
        %v4136 = vrot.slane %v4122, %v4135
        %v4137 = vcombine.low %v4114, %v4129
        %v4138 = vcombine.high %v4114, %v4129
        %v4140 = vunpack.c.l.s4 1934713408
        %v4141 = vunpack.c.0.s8 %v4140
        %v4142 = vlaneseq
        %v4143 = vshrl.u32 %v4142, 7
        %v4144 = vsub.s32 %v4141, %v4143
        %v4145 = vrot.slane %v4137, %v4144
        %v4147 = vunpack.c.l.s4 1934713408
        %v4148 = vunpack.c.0.s8 %v4147
        %v4149 = vlaneseq
        %v4150 = vshrl.u32 %v4149, 7
        %v4151 = vsub.s32 %v4148, %v4150
        %v4152 = vrot.slane %v4138, %v4151
        %v4153 = vcombine.low %v4121, %v4136
        %v4154 = vcombine.high %v4121, %v4136
        %v4156 = vunpack.c.l.s4 1934713408
        %v4157 = vunpack.c.0.s8 %v4156
        %v4158 = vlaneseq
        %v4159 = vshrl.u32 %v4158, 7
        %v4160 = vsub.s32 %v4157, %v4159
        %v4161 = vrot.slane %v4153, %v4160
        %v4163 = vunpack.c.l.s4 1934713408
        %v4164 = vunpack.c.0.s8 %v4163
        %v4165 = vlaneseq
        %v4166 = vshrl.u32 %v4165, 7
        %v4167 = vsub.s32 %v4164, %v4166
        %v4168 = vrot.slane %v4154, %v4167
        %v4169 = vcombine.high %v4145, 0.0
        %v4170 = vcombine.high %v4152, 0.0
        %v4171 = vcombine.high %v4161, 0.0
        %v4172 = vcombine.high %v4168, 0.0
        %v4173 = vcombine.high %v276, 0.0
        %v4175 = vunpack.c.l.s4 1983009808
        %v4176 = vunpack.c.0.s8 %v4175
        %v4177 = vlaneseq
        %v4178 = vshrl.u32 %v4177, 7
        %v4179 = vsub.s32 %v4176, %v4178
        %v4180 = vrot.slane %v276, %v4179
        %v4182 = vunpack.c.l.s4 1983009808
        %v4183 = vunpack.c.0.s8 %v4182
        %v4184 = vlaneseq
        %v4185 = vshrl.u32 %v4184, 7
        %v4186 = vsub.s32 %v4183, %v4185
        %v4187 = vrot.slane %v4173, %v4186
        %v4188 = vcombine.high %v404, 0.0
        %v4190 = vunpack.c.l.s4 1983009808
        %v4191 = vunpack.c.0.s8 %v4190
        %v4192 = vlaneseq
        %v4193 = vshrl.u32 %v4192, 7
        %v4194 = vsub.s32 %v4191, %v4193
        %v4195 = vrot.slane %v404, %v4194
        %v4197 = vunpack.c.l.s4 1983009808
        %v4198 = vunpack.c.0.s8 %v4197
        %v4199 = vlaneseq
        %v4200 = vshrl.u32 %v4199, 7
        %v4201 = vsub.s32 %v4198, %v4200
        %v4202 = vrot.slane %v4188, %v4201
        %v4203 = vcombine.low %v4180, %v4195
        %v4204 = vcombine.high %v4180, %v4195
        %v4206 = vunpack.c.l.s4 1934713408
        %v4207 = vunpack.c.0.s8 %v4206
        %v4208 = vlaneseq
        %v4209 = vshrl.u32 %v4208, 7
        %v4210 = vsub.s32 %v4207, %v4209
        %v4211 = vrot.slane %v4203, %v4210
        %v4213 = vunpack.c.l.s4 1934713408
        %v4214 = vunpack.c.0.s8 %v4213
        %v4215 = vlaneseq
        %v4216 = vshrl.u32 %v4215, 7
        %v4217 = vsub.s32 %v4214, %v4216
        %v4218 = vrot.slane %v4204, %v4217
        %v4219 = vcombine.low %v4187, %v4202
        %v4220 = vcombine.high %v4187, %v4202
        %v4222 = vunpack.c.l.s4 1934713408
        %v4223 = vunpack.c.0.s8 %v4222
        %v4224 = vlaneseq
        %v4225 = vshrl.u32 %v4224, 7
        %v4226 = vsub.s32 %v4223, %v4225
        %v4227 = vrot.slane %v4219, %v4226
        %v4229 = vunpack.c.l.s4 1934713408
        %v4230 = vunpack.c.0.s8 %v4229
        %v4231 = vlaneseq
        %v4232 = vshrl.u32 %v4231, 7
        %v4233 = vsub.s32 %v4230, %v4232
        %v4234 = vrot.slane %v4220, %v4233
        %v4235 = vcombine.high %v4211, 0.0
        %v4236 = vcombine.high %v4218, 0.0
        %v4237 = vcombine.high %v4227, 0.0
        %v4238 = vcombine.high %v4234, 0.0
        %v4239 = vcombine.high %v277, 0.0
        %v4241 = vunpack.c.l.s4 1983009808
        %v4242 = vunpack.c.0.s8 %v4241
        %v4243 = vlaneseq
        %v4244 = vshrl.u32 %v4243, 7
        %v4245 = vsub.s32 %v4242, %v4244
        %v4246 = vrot.slane %v277, %v4245
        %v4248 = vunpack.c.l.s4 1983009808
        %v4249 = vunpack.c.0.s8 %v4248
        %v4250 = vlaneseq
        %v4251 = vshrl.u32 %v4250, 7
        %v4252 = vsub.s32 %v4249, %v4251
        %v4253 = vrot.slane %v4239, %v4252
        %v4254 = vcombine.high %v405, 0.0
        %v4256 = vunpack.c.l.s4 1983009808
        %v4257 = vunpack.c.0.s8 %v4256
        %v4258 = vlaneseq
        %v4259 = vshrl.u32 %v4258, 7
        %v4260 = vsub.s32 %v4257, %v4259
        %v4261 = vrot.slane %v405, %v4260
        %v4263 = vunpack.c.l.s4 1983009808
        %v4264 = vunpack.c.0.s8 %v4263
        %v4265 = vlaneseq
        %v4266 = vshrl.u32 %v4265, 7
        %v4267 = vsub.s32 %v4264, %v4266
        %v4268 = vrot.slane %v4254, %v4267
        %v4269 = vcombine.low %v4246, %v4261
        %v4270 = vcombine.high %v4246, %v4261
        %v4272 = vunpack.c.l.s4 1934713408
        %v4273 = vunpack.c.0.s8 %v4272
        %v4274 = vlaneseq
        %v4275 = vshrl.u32 %v4274, 7
        %v4276 = vsub.s32 %v4273, %v4275
        %v4277 = vrot.slane %v4269, %v4276
        %v4279 = vunpack.c.l.s4 1934713408
        %v4280 = vunpack.c.0.s8 %v4279
        %v4281 = vlaneseq
        %v4282 = vshrl.u32 %v4281, 7
        %v4283 = vsub.s32 %v4280, %v4282
        %v4284 = vrot.slane %v4270, %v4283
        %v4285 = vcombine.low %v4253, %v4268
        %v4286 = vcombine.high %v4253, %v4268
        %v4288 = vunpack.c.l.s4 1934713408
        %v4289 = vunpack.c.0.s8 %v4288
        %v4290 = vlaneseq
        %v4291 = vshrl.u32 %v4290, 7
        %v4292 = vsub.s32 %v4289, %v4291
        %v4293 = vrot.slane %v4285, %v4292
        %v4295 = vunpack.c.l.s4 1934713408
        %v4296 = vunpack.c.0.s8 %v4295
        %v4297 = vlaneseq
        %v4298 = vshrl.u32 %v4297, 7
        %v4299 = vsub.s32 %v4296, %v4298
        %v4300 = vrot.slane %v4286, %v4299
        %v4301 = vcombine.high %v4277, 0.0
        %v4302 = vcombine.high %v4284, 0.0
        %v4303 = vcombine.high %v4293, 0.0
        %v4304 = vcombine.high %v4300, 0.0
        %v4305 = vcombine.high %v278, 0.0
        %v4307 = vunpack.c.l.s4 1983009808
        %v4308 = vunpack.c.0.s8 %v4307
        %v4309 = vlaneseq
        %v4310 = vshrl.u32 %v4309, 7
        %v4311 = vsub.s32 %v4308, %v4310
        %v4312 = vrot.slane %v278, %v4311
        %v4314 = vunpack.c.l.s4 1983009808
        %v4315 = vunpack.c.0.s8 %v4314
        %v4316 = vlaneseq
        %v4317 = vshrl.u32 %v4316, 7
        %v4318 = vsub.s32 %v4315, %v4317
        %v4319 = vrot.slane %v4305, %v4318
        %v4320 = vcombine.high %v406, 0.0
        %v4322 = vunpack.c.l.s4 1983009808
        %v4323 = vunpack.c.0.s8 %v4322
        %v4324 = vlaneseq
        %v4325 = vshrl.u32 %v4324, 7
        %v4326 = vsub.s32 %v4323, %v4325
        %v4327 = vrot.slane %v406, %v4326
        %v4329 = vunpack.c.l.s4 1983009808
        %v4330 = vunpack.c.0.s8 %v4329
        %v4331 = vlaneseq
        %v4332 = vshrl.u32 %v4331, 7
        %v4333 = vsub.s32 %v4330, %v4332
        %v4334 = vrot.slane %v4320, %v4333
        %v4335 = vcombine.low %v4312, %v4327
        %v4336 = vcombine.high %v4312, %v4327
        %v4338 = vunpack.c.l.s4 1934713408
        %v4339 = vunpack.c.0.s8 %v4338
        %v4340 = vlaneseq
        %v4341 = vshrl.u32 %v4340, 7
        %v4342 = vsub.s32 %v4339, %v4341
        %v4343 = vrot.slane %v4335, %v4342
        %v4345 = vunpack.c.l.s4 1934713408
        %v4346 = vunpack.c.0.s8 %v4345
        %v4347 = vlaneseq
        %v4348 = vshrl.u32 %v4347, 7
        %v4349 = vsub.s32 %v4346, %v4348
        %v4350 = vrot.slane %v4336, %v4349
        %v4351 = vcombine.low %v4319, %v4334
        %v4352 = vcombine.high %v4319, %v4334
        %v4354 = vunpack.c.l.s4 1934713408
        %v4355 = vunpack.c.0.s8 %v4354
        %v4356 = vlaneseq
        %v4357 = vshrl.u32 %v4356, 7
        %v4358 = vsub.s32 %v4355, %v4357
        %v4359 = vrot.slane %v4351, %v4358
        %v4361 = vunpack.c.l.s4 1934713408
        %v4362 = vunpack.c.0.s8 %v4361
        %v4363 = vlaneseq
        %v4364 = vshrl.u32 %v4363, 7
        %v4365 = vsub.s32 %v4362, %v4364
        %v4366 = vrot.slane %v4352, %v4365
        %v4367 = vcombine.high %v4343, 0.0
        %v4368 = vcombine.high %v4350, 0.0
        %v4369 = vcombine.high %v4359, 0.0
        %v4370 = vcombine.high %v4366, 0.0
        %v4371 = vcombine.high %v279, 0.0
        %v4373 = vunpack.c.l.s4 1983009808
        %v4374 = vunpack.c.0.s8 %v4373
        %v4375 = vlaneseq
        %v4376 = vshrl.u32 %v4375, 7
        %v4377 = vsub.s32 %v4374, %v4376
        %v4378 = vrot.slane %v279, %v4377
        %v4380 = vunpack.c.l.s4 1983009808
        %v4381 = vunpack.c.0.s8 %v4380
        %v4382 = vlaneseq
        %v4383 = vshrl.u32 %v4382, 7
        %v4384 = vsub.s32 %v4381, %v4383
        %v4385 = vrot.slane %v4371, %v4384
        %v4386 = vcombine.high %v407, 0.0
        %v4388 = vunpack.c.l.s4 1983009808
        %v4389 = vunpack.c.0.s8 %v4388
        %v4390 = vlaneseq
        %v4391 = vshrl.u32 %v4390, 7
        %v4392 = vsub.s32 %v4389, %v4391
        %v4393 = vrot.slane %v407, %v4392
        %v4395 = vunpack.c.l.s4 1983009808
        %v4396 = vunpack.c.0.s8 %v4395
        %v4397 = vlaneseq
        %v4398 = vshrl.u32 %v4397, 7
        %v4399 = vsub.s32 %v4396, %v4398
        %v4400 = vrot.slane %v4386, %v4399
        %v4401 = vcombine.low %v4378, %v4393
        %v4402 = vcombine.high %v4378, %v4393
        %v4404 = vunpack.c.l.s4 1934713408
        %v4405 = vunpack.c.0.s8 %v4404
        %v4406 = vlaneseq
        %v4407 = vshrl.u32 %v4406, 7
        %v4408 = vsub.s32 %v4405, %v4407
        %v4409 = vrot.slane %v4401, %v4408
        %v4411 = vunpack.c.l.s4 1934713408
        %v4412 = vunpack.c.0.s8 %v4411
        %v4413 = vlaneseq
        %v4414 = vshrl.u32 %v4413, 7
        %v4415 = vsub.s32 %v4412, %v4414
        %v4416 = vrot.slane %v4402, %v4415
        %v4417 = vcombine.low %v4385, %v4400
        %v4418 = vcombine.high %v4385, %v4400
        %v4420 = vunpack.c.l.s4 1934713408
        %v4421 = vunpack.c.0.s8 %v4420
        %v4422 = vlaneseq
        %v4423 = vshrl.u32 %v4422, 7
        %v4424 = vsub.s32 %v4421, %v4423
        %v4425 = vrot.slane %v4417, %v4424
        %v4427 = vunpack.c.l.s4 1934713408
        %v4428 = vunpack.c.0.s8 %v4427
        %v4429 = vlaneseq
        %v4430 = vshrl.u32 %v4429, 7
        %v4431 = vsub.s32 %v4428, %v4430
        %v4432 = vrot.slane %v4418, %v4431
        %v4433 = vcombine.high %v4409, 0.0
        %v4434 = vcombine.high %v4416, 0.0
        %v4435 = vcombine.high %v4425, 0.0
        %v4436 = vcombine.high %v4432, 0.0
        %v4437 = vcombine.high %v280, 0.0
        %v4439 = vunpack.c.l.s4 1983009808
        %v4440 = vunpack.c.0.s8 %v4439
        %v4441 = vlaneseq
        %v4442 = vshrl.u32 %v4441, 7
        %v4443 = vsub.s32 %v4440, %v4442
        %v4444 = vrot.slane %v280, %v4443
        %v4446 = vunpack.c.l.s4 1983009808
        %v4447 = vunpack.c.0.s8 %v4446
        %v4448 = vlaneseq
        %v4449 = vshrl.u32 %v4448, 7
        %v4450 = vsub.s32 %v4447, %v4449
        %v4451 = vrot.slane %v4437, %v4450
        %v4452 = vcombine.high %v408, 0.0
        %v4454 = vunpack.c.l.s4 1983009808
        %v4455 = vunpack.c.0.s8 %v4454
        %v4456 = vlaneseq
        %v4457 = vshrl.u32 %v4456, 7
        %v4458 = vsub.s32 %v4455, %v4457
        %v4459 = vrot.slane %v408, %v4458
        %v4461 = vunpack.c.l.s4 1983009808
        %v4462 = vunpack.c.0.s8 %v4461
        %v4463 = vlaneseq
        %v4464 = vshrl.u32 %v4463, 7
        %v4465 = vsub.s32 %v4462, %v4464
        %v4466 = vrot.slane %v4452, %v4465
        %v4467 = vcombine.low %v4444, %v4459
        %v4468 = vcombine.high %v4444, %v4459
        %v4470 = vunpack.c.l.s4 1934713408
        %v4471 = vunpack.c.0.s8 %v4470
        %v4472 = vlaneseq
        %v4473 = vshrl.u32 %v4472, 7
        %v4474 = vsub.s32 %v4471, %v4473
        %v4475 = vrot.slane %v4467, %v4474
        %v4477 = vunpack.c.l.s4 1934713408
        %v4478 = vunpack.c.0.s8 %v4477
        %v4479 = vlaneseq
        %v4480 = vshrl.u32 %v4479, 7
        %v4481 = vsub.s32 %v4478, %v4480
        %v4482 = vrot.slane %v4468, %v4481
        %v4483 = vcombine.low %v4451, %v4466
        %v4484 = vcombine.high %v4451, %v4466
        %v4486 = vunpack.c.l.s4 1934713408
        %v4487 = vunpack.c.0.s8 %v4486
        %v4488 = vlaneseq
        %v4489 = vshrl.u32 %v4488, 7
        %v4490 = vsub.s32 %v4487, %v4489
        %v4491 = vrot.slane %v4483, %v4490
        %v4493 = vunpack.c.l.s4 1934713408
        %v4494 = vunpack.c.0.s8 %v4493
        %v4495 = vlaneseq
        %v4496 = vshrl.u32 %v4495, 7
        %v4497 = vsub.s32 %v4494, %v4496
        %v4498 = vrot.slane %v4484, %v4497
        %v4499 = vcombine.high %v4475, 0.0
        %v4500 = vcombine.high %v4482, 0.0
        %v4501 = vcombine.high %v4491, 0.0
        %v4502 = vcombine.high %v4498, 0.0
        %v4503 = vcombine.high %v281, 0.0
        %v4505 = vunpack.c.l.s4 1983009808
        %v4506 = vunpack.c.0.s8 %v4505
        %v4507 = vlaneseq
        %v4508 = vshrl.u32 %v4507, 7
        %v4509 = vsub.s32 %v4506, %v4508
        %v4510 = vrot.slane %v281, %v4509
        %v4512 = vunpack.c.l.s4 1983009808
        %v4513 = vunpack.c.0.s8 %v4512
        %v4514 = vlaneseq
        %v4515 = vshrl.u32 %v4514, 7
        %v4516 = vsub.s32 %v4513, %v4515
        %v4517 = vrot.slane %v4503, %v4516
        %v4518 = vcombine.high %v409, 0.0
        %v4520 = vunpack.c.l.s4 1983009808
        %v4521 = vunpack.c.0.s8 %v4520
        %v4522 = vlaneseq
        %v4523 = vshrl.u32 %v4522, 7
        %v4524 = vsub.s32 %v4521, %v4523
        %v4525 = vrot.slane %v409, %v4524
        %v4527 = vunpack.c.l.s4 1983009808
        %v4528 = vunpack.c.0.s8 %v4527
        %v4529 = vlaneseq
        %v4530 = vshrl.u32 %v4529, 7
        %v4531 = vsub.s32 %v4528, %v4530
        %v4532 = vrot.slane %v4518, %v4531
        %v4533 = vcombine.low %v4510, %v4525
        %v4534 = vcombine.high %v4510, %v4525
        %v4536 = vunpack.c.l.s4 1934713408
        %v4537 = vunpack.c.0.s8 %v4536
        %v4538 = vlaneseq
        %v4539 = vshrl.u32 %v4538, 7
        %v4540 = vsub.s32 %v4537, %v4539
        %v4541 = vrot.slane %v4533, %v4540
        %v4543 = vunpack.c.l.s4 1934713408
        %v4544 = vunpack.c.0.s8 %v4543
        %v4545 = vlaneseq
        %v4546 = vshrl.u32 %v4545, 7
        %v4547 = vsub.s32 %v4544, %v4546
        %v4548 = vrot.slane %v4534, %v4547
        %v4549 = vcombine.low %v4517, %v4532
        %v4550 = vcombine.high %v4517, %v4532
        %v4552 = vunpack.c.l.s4 1934713408
        %v4553 = vunpack.c.0.s8 %v4552
        %v4554 = vlaneseq
        %v4555 = vshrl.u32 %v4554, 7
        %v4556 = vsub.s32 %v4553, %v4555
        %v4557 = vrot.slane %v4549, %v4556
        %v4559 = vunpack.c.l.s4 1934713408
        %v4560 = vunpack.c.0.s8 %v4559
        %v4561 = vlaneseq
        %v4562 = vshrl.u32 %v4561, 7
        %v4563 = vsub.s32 %v4560, %v4562
        %v4564 = vrot.slane %v4550, %v4563
        %v4565 = vcombine.high %v4541, 0.0
        %v4566 = vcombine.high %v4548, 0.0
        %v4567 = vcombine.high %v4557, 0.0
        %v4568 = vcombine.high %v4564, 0.0
        %v4569 = vcombine.high %v282, 0.0
        %v4571 = vunpack.c.l.s4 1983009808
        %v4572 = vunpack.c.0.s8 %v4571
        %v4573 = vlaneseq
        %v4574 = vshrl.u32 %v4573, 7
        %v4575 = vsub.s32 %v4572, %v4574
        %v4576 = vrot.slane %v282, %v4575
        %v4578 = vunpack.c.l.s4 1983009808
        %v4579 = vunpack.c.0.s8 %v4578
        %v4580 = vlaneseq
        %v4581 = vshrl.u32 %v4580, 7
        %v4582 = vsub.s32 %v4579, %v4581
        %v4583 = vrot.slane %v4569, %v4582
        %v4584 = vcombine.high %v410, 0.0
        %v4586 = vunpack.c.l.s4 1983009808
        %v4587 = vunpack.c.0.s8 %v4586
        %v4588 = vlaneseq
        %v4589 = vshrl.u32 %v4588, 7
        %v4590 = vsub.s32 %v4587, %v4589
        %v4591 = vrot.slane %v410, %v4590
        %v4593 = vunpack.c.l.s4 1983009808
        %v4594 = vunpack.c.0.s8 %v4593
        %v4595 = vlaneseq
        %v4596 = vshrl.u32 %v4595, 7
        %v4597 = vsub.s32 %v4594, %v4596
        %v4598 = vrot.slane %v4584, %v4597
        %v4599 = vcombine.low %v4576, %v4591
        %v4600 = vcombine.high %v4576, %v4591
        %v4602 = vunpack.c.l.s4 1934713408
        %v4603 = vunpack.c.0.s8 %v4602
        %v4604 = vlaneseq
        %v4605 = vshrl.u32 %v4604, 7
        %v4606 = vsub.s32 %v4603, %v4605
        %v4607 = vrot.slane %v4599, %v4606
        %v4609 = vunpack.c.l.s4 1934713408
        %v4610 = vunpack.c.0.s8 %v4609
        %v4611 = vlaneseq
        %v4612 = vshrl.u32 %v4611, 7
        %v4613 = vsub.s32 %v4610, %v4612
        %v4614 = vrot.slane %v4600, %v4613
        %v4615 = vcombine.low %v4583, %v4598
        %v4616 = vcombine.high %v4583, %v4598
        %v4618 = vunpack.c.l.s4 1934713408
        %v4619 = vunpack.c.0.s8 %v4618
        %v4620 = vlaneseq
        %v4621 = vshrl.u32 %v4620, 7
        %v4622 = vsub.s32 %v4619, %v4621
        %v4623 = vrot.slane %v4615, %v4622
        %v4625 = vunpack.c.l.s4 1934713408
        %v4626 = vunpack.c.0.s8 %v4625
        %v4627 = vlaneseq
        %v4628 = vshrl.u32 %v4627, 7
        %v4629 = vsub.s32 %v4626, %v4628
        %v4630 = vrot.slane %v4616, %v4629
        %v4631 = vcombine.high %v4607, 0.0
        %v4632 = vcombine.high %v4614, 0.0
        %v4633 = vcombine.high %v4623, 0.0
        %v4634 = vcombine.high %v4630, 0.0
        %vm4635 = vcmask 25600
        %4636 = vst.msk [vmem:[%s137] sm:$0x3] %vm4635, %v449
        %4637 = vst.msk [vmem:[%s137 + $0x2] sm:$0x3] %vm4635, %v473
        %4638 = vst.msk [vmem:[%s137 + $0x4] sm:$0x3] %vm4635, %v456
        %4639 = vst.msk [vmem:[%s137 + $0x6] sm:$0x3] %vm4635, %v474
        %4640 = vst.msk [vmem:[%s137 + $0x8] sm:$0x3] %vm4635, %v465
        %4641 = vst.msk [vmem:[%s137 + $0xa] sm:$0x3] %vm4635, %v475
        %4642 = vst.msk [vmem:[%s137 + $0xc] sm:$0x3] %vm4635, %v472
        %4643 = vst.msk [vmem:[%s137 + $0xe] sm:$0x3] %vm4635, %v476
        %4644 = vst.msk [vmem:[%s137 + $0x10] sm:$0x3] %vm4635, %v515
        %4645 = vst.msk [vmem:[%s137 + $0x12] sm:$0x3] %vm4635, %v539
        %4646 = vst.msk [vmem:[%s137 + $0x14] sm:$0x3] %vm4635, %v522
        %4647 = vst.msk [vmem:[%s137 + $0x16] sm:$0x3] %vm4635, %v540
        %4648 = vst.msk [vmem:[%s137 + $0x18] sm:$0x3] %vm4635, %v531
        %4649 = vst.msk [vmem:[%s137 + $0x1a] sm:$0x3] %vm4635, %v541
        %4650 = vst.msk [vmem:[%s137 + $0x1c] sm:$0x3] %vm4635, %v538
        %4651 = vst.msk [vmem:[%s137 + $0x1e] sm:$0x3] %vm4635, %v542
        %4652 = vst.msk [vmem:[%s137 + $0x20] sm:$0x3] %vm4635, %v581
        %4653 = vst.msk [vmem:[%s137 + $0x22] sm:$0x3] %vm4635, %v605
        %4654 = vst.msk [vmem:[%s137 + $0x24] sm:$0x3] %vm4635, %v588
        %4655 = vst.msk [vmem:[%s137 + $0x26] sm:$0x3] %vm4635, %v606
        %4656 = vst.msk [vmem:[%s137 + $0x28] sm:$0x3] %vm4635, %v597
        %4657 = vst.msk [vmem:[%s137 + $0x2a] sm:$0x3] %vm4635, %v607
        %4658 = vst.msk [vmem:[%s137 + $0x2c] sm:$0x3] %vm4635, %v604
        %4659 = vst.msk [vmem:[%s137 + $0x2e] sm:$0x3] %vm4635, %v608
        %4660 = vst.msk [vmem:[%s137 + $0x30] sm:$0x3] %vm4635, %v647
        %4661 = vst.msk [vmem:[%s137 + $0x32] sm:$0x3] %vm4635, %v671
        %4662 = vst.msk [vmem:[%s137 + $0x34] sm:$0x3] %vm4635, %v654
        %4663 = vst.msk [vmem:[%s137 + $0x36] sm:$0x3] %vm4635, %v672
        %4664 = vst.msk [vmem:[%s137 + $0x38] sm:$0x3] %vm4635, %v663
        %4665 = vst.msk [vmem:[%s137 + $0x3a] sm:$0x3] %vm4635, %v673
        %4666 = vst.msk [vmem:[%s137 + $0x3c] sm:$0x3] %vm4635, %v670
        %4667 = vst.msk [vmem:[%s137 + $0x3e] sm:$0x3] %vm4635, %v674
        %4668 = vst.msk [vmem:[%s137 + $0x40] sm:$0x3] %vm4635, %v713
        %4669 = vst.msk [vmem:[%s137 + $0x42] sm:$0x3] %vm4635, %v737
        %4670 = vst.msk [vmem:[%s137 + $0x44] sm:$0x3] %vm4635, %v720
        %4671 = vst.msk [vmem:[%s137 + $0x46] sm:$0x3] %vm4635, %v738
        %4672 = vst.msk [vmem:[%s137 + $0x48] sm:$0x3] %vm4635, %v729
        %4673 = vst.msk [vmem:[%s137 + $0x4a] sm:$0x3] %vm4635, %v739
        %4674 = vst.msk [vmem:[%s137 + $0x4c] sm:$0x3] %vm4635, %v736
        %4675 = vst.msk [vmem:[%s137 + $0x4e] sm:$0x3] %vm4635, %v740
        %4676 = vst.msk [vmem:[%s137 + $0x50] sm:$0x3] %vm4635, %v779
        %4677 = vst.msk [vmem:[%s137 + $0x52] sm:$0x3] %vm4635, %v803
        %4678 = vst.msk [vmem:[%s137 + $0x54] sm:$0x3] %vm4635, %v786
        %4679 = vst.msk [vmem:[%s137 + $0x56] sm:$0x3] %vm4635, %v804
        %4680 = vst.msk [vmem:[%s137 + $0x58] sm:$0x3] %vm4635, %v795
        %4681 = vst.msk [vmem:[%s137 + $0x5a] sm:$0x3] %vm4635, %v805
        %4682 = vst.msk [vmem:[%s137 + $0x5c] sm:$0x3] %vm4635, %v802
        %4683 = vst.msk [vmem:[%s137 + $0x5e] sm:$0x3] %vm4635, %v806
        %4684 = vst.msk [vmem:[%s137 + $0x60] sm:$0x3] %vm4635, %v845
        %4685 = vst.msk [vmem:[%s137 + $0x62] sm:$0x3] %vm4635, %v869
        %4686 = vst.msk [vmem:[%s137 + $0x64] sm:$0x3] %vm4635, %v852
        %4687 = vst.msk [vmem:[%s137 + $0x66] sm:$0x3] %vm4635, %v870
        %4688 = vst.msk [vmem:[%s137 + $0x68] sm:$0x3] %vm4635, %v861
        %4689 = vst.msk [vmem:[%s137 + $0x6a] sm:$0x3] %vm4635, %v871
        %4690 = vst.msk [vmem:[%s137 + $0x6c] sm:$0x3] %vm4635, %v868
        %4691 = vst.msk [vmem:[%s137 + $0x6e] sm:$0x3] %vm4635, %v872
        %4692 = vst.msk [vmem:[%s137 + $0x70] sm:$0x3] %vm4635, %v911
        %4693 = vst.msk [vmem:[%s137 + $0x72] sm:$0x3] %vm4635, %v935
        %4694 = vst.msk [vmem:[%s137 + $0x74] sm:$0x3] %vm4635, %v918
        %4695 = vst.msk [vmem:[%s137 + $0x76] sm:$0x3] %vm4635, %v936
        %4696 = vst.msk [vmem:[%s137 + $0x78] sm:$0x3] %vm4635, %v927
        %4697 = vst.msk [vmem:[%s137 + $0x7a] sm:$0x3] %vm4635, %v937
        %4698 = vst.msk [vmem:[%s137 + $0x7c] sm:$0x3] %vm4635, %v934
        %4699 = vst.msk [vmem:[%s137 + $0x7e] sm:$0x3] %vm4635, %v938
        %4700 = vst.msk [vmem:[%s137 + $0x80] sm:$0x3] %vm4635, %v977
        %4701 = vst.msk [vmem:[%s137 + $0x82] sm:$0x3] %vm4635, %v1001
        %4702 = vst.msk [vmem:[%s137 + $0x84] sm:$0x3] %vm4635, %v984
        %4703 = vst.msk [vmem:[%s137 + $0x86] sm:$0x3] %vm4635, %v1002
        %4704 = vst.msk [vmem:[%s137 + $0x88] sm:$0x3] %vm4635, %v993
        %4705 = vst.msk [vmem:[%s137 + $0x8a] sm:$0x3] %vm4635, %v1003
        %4706 = vst.msk [vmem:[%s137 + $0x8c] sm:$0x3] %vm4635, %v1000
        %4707 = vst.msk [vmem:[%s137 + $0x8e] sm:$0x3] %vm4635, %v1004
        %4708 = vst.msk [vmem:[%s137 + $0x90] sm:$0x3] %vm4635, %v1043
        %4709 = vst.msk [vmem:[%s137 + $0x92] sm:$0x3] %vm4635, %v1067
        %4710 = vst.msk [vmem:[%s137 + $0x94] sm:$0x3] %vm4635, %v1050
        %4711 = vst.msk [vmem:[%s137 + $0x96] sm:$0x3] %vm4635, %v1068
        %4712 = vst.msk [vmem:[%s137 + $0x98] sm:$0x3] %vm4635, %v1059
        %4713 = vst.msk [vmem:[%s137 + $0x9a] sm:$0x3] %vm4635, %v1069
        %4714 = vst.msk [vmem:[%s137 + $0x9c] sm:$0x3] %vm4635, %v1066
        %4715 = vst.msk [vmem:[%s137 + $0x9e] sm:$0x3] %vm4635, %v1070
        %4716 = vst.msk [vmem:[%s137 + $0xa0] sm:$0x3] %vm4635, %v1109
        %4717 = vst.msk [vmem:[%s137 + $0xa2] sm:$0x3] %vm4635, %v1133
        %4718 = vst.msk [vmem:[%s137 + $0xa4] sm:$0x3] %vm4635, %v1116
        %4719 = vst.msk [vmem:[%s137 + $0xa6] sm:$0x3] %vm4635, %v1134
        %4720 = vst.msk [vmem:[%s137 + $0xa8] sm:$0x3] %vm4635, %v1125
        %4721 = vst.msk [vmem:[%s137 + $0xaa] sm:$0x3] %vm4635, %v1135
        %4722 = vst.msk [vmem:[%s137 + $0xac] sm:$0x3] %vm4635, %v1132
        %4723 = vst.msk [vmem:[%s137 + $0xae] sm:$0x3] %vm4635, %v1136
        %4724 = vst.msk [vmem:[%s137 + $0xb0] sm:$0x3] %vm4635, %v1175
        %4725 = vst.msk [vmem:[%s137 + $0xb2] sm:$0x3] %vm4635, %v1199
        %4726 = vst.msk [vmem:[%s137 + $0xb4] sm:$0x3] %vm4635, %v1182
        %4727 = vst.msk [vmem:[%s137 + $0xb6] sm:$0x3] %vm4635, %v1200
        %4728 = vst.msk [vmem:[%s137 + $0xb8] sm:$0x3] %vm4635, %v1191
        %4729 = vst.msk [vmem:[%s137 + $0xba] sm:$0x3] %vm4635, %v1201
        %4730 = vst.msk [vmem:[%s137 + $0xbc] sm:$0x3] %vm4635, %v1198
        %4731 = vst.msk [vmem:[%s137 + $0xbe] sm:$0x3] %vm4635, %v1202
        %4732 = vst.msk [vmem:[%s137 + $0xc0] sm:$0x3] %vm4635, %v1241
        %4733 = vst.msk [vmem:[%s137 + $0xc2] sm:$0x3] %vm4635, %v1265
        %4734 = vst.msk [vmem:[%s137 + $0xc4] sm:$0x3] %vm4635, %v1248
        %4735 = vst.msk [vmem:[%s137 + $0xc6] sm:$0x3] %vm4635, %v1266
        %4736 = vst.msk [vmem:[%s137 + $0xc8] sm:$0x3] %vm4635, %v1257
        %4737 = vst.msk [vmem:[%s137 + $0xca] sm:$0x3] %vm4635, %v1267
        %4738 = vst.msk [vmem:[%s137 + $0xcc] sm:$0x3] %vm4635, %v1264
        %4739 = vst.msk [vmem:[%s137 + $0xce] sm:$0x3] %vm4635, %v1268
        %4740 = vst.msk [vmem:[%s137 + $0xd0] sm:$0x3] %vm4635, %v1307
        %4741 = vst.msk [vmem:[%s137 + $0xd2] sm:$0x3] %vm4635, %v1331
        %4742 = vst.msk [vmem:[%s137 + $0xd4] sm:$0x3] %vm4635, %v1314
        %4743 = vst.msk [vmem:[%s137 + $0xd6] sm:$0x3] %vm4635, %v1332
        %4744 = vst.msk [vmem:[%s137 + $0xd8] sm:$0x3] %vm4635, %v1323
        %4745 = vst.msk [vmem:[%s137 + $0xda] sm:$0x3] %vm4635, %v1333
        %4746 = vst.msk [vmem:[%s137 + $0xdc] sm:$0x3] %vm4635, %v1330
        %4747 = vst.msk [vmem:[%s137 + $0xde] sm:$0x3] %vm4635, %v1334
        %4748 = vst.msk [vmem:[%s137 + $0xe0] sm:$0x3] %vm4635, %v1373
        %4749 = vst.msk [vmem:[%s137 + $0xe2] sm:$0x3] %vm4635, %v1397
        %4750 = vst.msk [vmem:[%s137 + $0xe4] sm:$0x3] %vm4635, %v1380
        %4751 = vst.msk [vmem:[%s137 + $0xe6] sm:$0x3] %vm4635, %v1398
        %4752 = vst.msk [vmem:[%s137 + $0xe8] sm:$0x3] %vm4635, %v1389
        %4753 = vst.msk [vmem:[%s137 + $0xea] sm:$0x3] %vm4635, %v1399
        %4754 = vst.msk [vmem:[%s137 + $0xec] sm:$0x3] %vm4635, %v1396
        %4755 = vst.msk [vmem:[%s137 + $0xee] sm:$0x3] %vm4635, %v1400
        %4756 = vst.msk [vmem:[%s137 + $0xf0] sm:$0x3] %vm4635, %v1439
        %4757 = vst.msk [vmem:[%s137 + $0xf2] sm:$0x3] %vm4635, %v1463
        %4758 = vst.msk [vmem:[%s137 + $0xf4] sm:$0x3] %vm4635, %v1446
        %4759 = vst.msk [vmem:[%s137 + $0xf6] sm:$0x3] %vm4635, %v1464
        %4760 = vst.msk [vmem:[%s137 + $0xf8] sm:$0x3] %vm4635, %v1455
        %4761 = vst.msk [vmem:[%s137 + $0xfa] sm:$0x3] %vm4635, %v1465
        %4762 = vst.msk [vmem:[%s137 + $0xfc] sm:$0x3] %vm4635, %v1462
        %4763 = vst.msk [vmem:[%s137 + $0xfe] sm:$0x3] %vm4635, %v1466
        %4764 = vst.msk [vmem:[%s137 + $0x100] sm:$0x3] %vm4635, %v1505
        %4765 = vst.msk [vmem:[%s137 + $0x102] sm:$0x3] %vm4635, %v1529
        %4766 = vst.msk [vmem:[%s137 + $0x104] sm:$0x3] %vm4635, %v1512
        %4767 = vst.msk [vmem:[%s137 + $0x106] sm:$0x3] %vm4635, %v1530
        %4768 = vst.msk [vmem:[%s137 + $0x108] sm:$0x3] %vm4635, %v1521
        %4769 = vst.msk [vmem:[%s137 + $0x10a] sm:$0x3] %vm4635, %v1531
        %4770 = vst.msk [vmem:[%s137 + $0x10c] sm:$0x3] %vm4635, %v1528
        %4771 = vst.msk [vmem:[%s137 + $0x10e] sm:$0x3] %vm4635, %v1532
        %4772 = vst.msk [vmem:[%s137 + $0x110] sm:$0x3] %vm4635, %v1571
        %4773 = vst.msk [vmem:[%s137 + $0x112] sm:$0x3] %vm4635, %v1595
        %4774 = vst.msk [vmem:[%s137 + $0x114] sm:$0x3] %vm4635, %v1578
        %4775 = vst.msk [vmem:[%s137 + $0x116] sm:$0x3] %vm4635, %v1596
        %4776 = vst.msk [vmem:[%s137 + $0x118] sm:$0x3] %vm4635, %v1587
        %4777 = vst.msk [vmem:[%s137 + $0x11a] sm:$0x3] %vm4635, %v1597
        %4778 = vst.msk [vmem:[%s137 + $0x11c] sm:$0x3] %vm4635, %v1594
        %4779 = vst.msk [vmem:[%s137 + $0x11e] sm:$0x3] %vm4635, %v1598
        %4780 = vst.msk [vmem:[%s137 + $0x120] sm:$0x3] %vm4635, %v1637
        %4781 = vst.msk [vmem:[%s137 + $0x122] sm:$0x3] %vm4635, %v1661
        %4782 = vst.msk [vmem:[%s137 + $0x124] sm:$0x3] %vm4635, %v1644
        %4783 = vst.msk [vmem:[%s137 + $0x126] sm:$0x3] %vm4635, %v1662
        %4784 = vst.msk [vmem:[%s137 + $0x128] sm:$0x3] %vm4635, %v1653
        %4785 = vst.msk [vmem:[%s137 + $0x12a] sm:$0x3] %vm4635, %v1663
        %4786 = vst.msk [vmem:[%s137 + $0x12c] sm:$0x3] %vm4635, %v1660
        %4787 = vst.msk [vmem:[%s137 + $0x12e] sm:$0x3] %vm4635, %v1664
        %4788 = vst.msk [vmem:[%s137 + $0x130] sm:$0x3] %vm4635, %v1703
        %4789 = vst.msk [vmem:[%s137 + $0x132] sm:$0x3] %vm4635, %v1727
        %4790 = vst.msk [vmem:[%s137 + $0x134] sm:$0x3] %vm4635, %v1710
        %4791 = vst.msk [vmem:[%s137 + $0x136] sm:$0x3] %vm4635, %v1728
        %4792 = vst.msk [vmem:[%s137 + $0x138] sm:$0x3] %vm4635, %v1719
        %4793 = vst.msk [vmem:[%s137 + $0x13a] sm:$0x3] %vm4635, %v1729
        %4794 = vst.msk [vmem:[%s137 + $0x13c] sm:$0x3] %vm4635, %v1726
        %4795 = vst.msk [vmem:[%s137 + $0x13e] sm:$0x3] %vm4635, %v1730
        %4796 = vst.msk [vmem:[%s137 + $0x140] sm:$0x3] %vm4635, %v1769
        %4797 = vst.msk [vmem:[%s137 + $0x142] sm:$0x3] %vm4635, %v1793
        %4798 = vst.msk [vmem:[%s137 + $0x144] sm:$0x3] %vm4635, %v1776
        %4799 = vst.msk [vmem:[%s137 + $0x146] sm:$0x3] %vm4635, %v1794
        %4800 = vst.msk [vmem:[%s137 + $0x148] sm:$0x3] %vm4635, %v1785
        %4801 = vst.msk [vmem:[%s137 + $0x14a] sm:$0x3] %vm4635, %v1795
        %4802 = vst.msk [vmem:[%s137 + $0x14c] sm:$0x3] %vm4635, %v1792
        %4803 = vst.msk [vmem:[%s137 + $0x14e] sm:$0x3] %vm4635, %v1796
        %4804 = vst.msk [vmem:[%s137 + $0x150] sm:$0x3] %vm4635, %v1835
        %4805 = vst.msk [vmem:[%s137 + $0x152] sm:$0x3] %vm4635, %v1859
        %4806 = vst.msk [vmem:[%s137 + $0x154] sm:$0x3] %vm4635, %v1842
        %4807 = vst.msk [vmem:[%s137 + $0x156] sm:$0x3] %vm4635, %v1860
        %4808 = vst.msk [vmem:[%s137 + $0x158] sm:$0x3] %vm4635, %v1851
        %4809 = vst.msk [vmem:[%s137 + $0x15a] sm:$0x3] %vm4635, %v1861
        %4810 = vst.msk [vmem:[%s137 + $0x15c] sm:$0x3] %vm4635, %v1858
        %4811 = vst.msk [vmem:[%s137 + $0x15e] sm:$0x3] %vm4635, %v1862
        %4812 = vst.msk [vmem:[%s137 + $0x160] sm:$0x3] %vm4635, %v1901
        %4813 = vst.msk [vmem:[%s137 + $0x162] sm:$0x3] %vm4635, %v1925
        %4814 = vst.msk [vmem:[%s137 + $0x164] sm:$0x3] %vm4635, %v1908
        %4815 = vst.msk [vmem:[%s137 + $0x166] sm:$0x3] %vm4635, %v1926
        %4816 = vst.msk [vmem:[%s137 + $0x168] sm:$0x3] %vm4635, %v1917
        %4817 = vst.msk [vmem:[%s137 + $0x16a] sm:$0x3] %vm4635, %v1927
        %4818 = vst.msk [vmem:[%s137 + $0x16c] sm:$0x3] %vm4635, %v1924
        %4819 = vst.msk [vmem:[%s137 + $0x16e] sm:$0x3] %vm4635, %v1928
        %4820 = vst.msk [vmem:[%s137 + $0x170] sm:$0x3] %vm4635, %v1967
        %4821 = vst.msk [vmem:[%s137 + $0x172] sm:$0x3] %vm4635, %v1991
        %4822 = vst.msk [vmem:[%s137 + $0x174] sm:$0x3] %vm4635, %v1974
        %4823 = vst.msk [vmem:[%s137 + $0x176] sm:$0x3] %vm4635, %v1992
        %4824 = vst.msk [vmem:[%s137 + $0x178] sm:$0x3] %vm4635, %v1983
        %4825 = vst.msk [vmem:[%s137 + $0x17a] sm:$0x3] %vm4635, %v1993
        %4826 = vst.msk [vmem:[%s137 + $0x17c] sm:$0x3] %vm4635, %v1990
        %4827 = vst.msk [vmem:[%s137 + $0x17e] sm:$0x3] %vm4635, %v1994
        %4828 = vst.msk [vmem:[%s137 + $0x180] sm:$0x3] %vm4635, %v2033
        %4829 = vst.msk [vmem:[%s137 + $0x182] sm:$0x3] %vm4635, %v2057
        %4830 = vst.msk [vmem:[%s137 + $0x184] sm:$0x3] %vm4635, %v2040
        %4831 = vst.msk [vmem:[%s137 + $0x186] sm:$0x3] %vm4635, %v2058
        %4832 = vst.msk [vmem:[%s137 + $0x188] sm:$0x3] %vm4635, %v2049
        %4833 = vst.msk [vmem:[%s137 + $0x18a] sm:$0x3] %vm4635, %v2059
        %4834 = vst.msk [vmem:[%s137 + $0x18c] sm:$0x3] %vm4635, %v2056
        %4835 = vst.msk [vmem:[%s137 + $0x18e] sm:$0x3] %vm4635, %v2060
        %4836 = vst.msk [vmem:[%s137 + $0x190] sm:$0x3] %vm4635, %v2099
        %4837 = vst.msk [vmem:[%s137 + $0x192] sm:$0x3] %vm4635, %v2123
        %4838 = vst.msk [vmem:[%s137 + $0x194] sm:$0x3] %vm4635, %v2106
        %4839 = vst.msk [vmem:[%s137 + $0x196] sm:$0x3] %vm4635, %v2124
        %4840 = vst.msk [vmem:[%s137 + $0x198] sm:$0x3] %vm4635, %v2115
        %4841 = vst.msk [vmem:[%s137 + $0x19a] sm:$0x3] %vm4635, %v2125
        %4842 = vst.msk [vmem:[%s137 + $0x19c] sm:$0x3] %vm4635, %v2122
        %4843 = vst.msk [vmem:[%s137 + $0x19e] sm:$0x3] %vm4635, %v2126
        %4844 = vst.msk [vmem:[%s137 + $0x1a0] sm:$0x3] %vm4635, %v2165
        %4845 = vst.msk [vmem:[%s137 + $0x1a2] sm:$0x3] %vm4635, %v2189
        %4846 = vst.msk [vmem:[%s137 + $0x1a4] sm:$0x3] %vm4635, %v2172
        %4847 = vst.msk [vmem:[%s137 + $0x1a6] sm:$0x3] %vm4635, %v2190
        %4848 = vst.msk [vmem:[%s137 + $0x1a8] sm:$0x3] %vm4635, %v2181
        %4849 = vst.msk [vmem:[%s137 + $0x1aa] sm:$0x3] %vm4635, %v2191
        %4850 = vst.msk [vmem:[%s137 + $0x1ac] sm:$0x3] %vm4635, %v2188
        %4851 = vst.msk [vmem:[%s137 + $0x1ae] sm:$0x3] %vm4635, %v2192
        %4852 = vst.msk [vmem:[%s137 + $0x1b0] sm:$0x3] %vm4635, %v2231
        %4853 = vst.msk [vmem:[%s137 + $0x1b2] sm:$0x3] %vm4635, %v2255
        %4854 = vst.msk [vmem:[%s137 + $0x1b4] sm:$0x3] %vm4635, %v2238
        %4855 = vst.msk [vmem:[%s137 + $0x1b6] sm:$0x3] %vm4635, %v2256
        %4856 = vst.msk [vmem:[%s137 + $0x1b8] sm:$0x3] %vm4635, %v2247
        %4857 = vst.msk [vmem:[%s137 + $0x1ba] sm:$0x3] %vm4635, %v2257
        %4858 = vst.msk [vmem:[%s137 + $0x1bc] sm:$0x3] %vm4635, %v2254
        %4859 = vst.msk [vmem:[%s137 + $0x1be] sm:$0x3] %vm4635, %v2258
        %4860 = vst.msk [vmem:[%s137 + $0x1c0] sm:$0x3] %vm4635, %v2297
        %4861 = vst.msk [vmem:[%s137 + $0x1c2] sm:$0x3] %vm4635, %v2321
        %4862 = vst.msk [vmem:[%s137 + $0x1c4] sm:$0x3] %vm4635, %v2304
        %4863 = vst.msk [vmem:[%s137 + $0x1c6] sm:$0x3] %vm4635, %v2322
        %4864 = vst.msk [vmem:[%s137 + $0x1c8] sm:$0x3] %vm4635, %v2313
        %4865 = vst.msk [vmem:[%s137 + $0x1ca] sm:$0x3] %vm4635, %v2323
        %4866 = vst.msk [vmem:[%s137 + $0x1cc] sm:$0x3] %vm4635, %v2320
        %4867 = vst.msk [vmem:[%s137 + $0x1ce] sm:$0x3] %vm4635, %v2324
        %4868 = vst.msk [vmem:[%s137 + $0x1d0] sm:$0x3] %vm4635, %v2363
        %4869 = vst.msk [vmem:[%s137 + $0x1d2] sm:$0x3] %vm4635, %v2387
        %4870 = vst.msk [vmem:[%s137 + $0x1d4] sm:$0x3] %vm4635, %v2370
        %4871 = vst.msk [vmem:[%s137 + $0x1d6] sm:$0x3] %vm4635, %v2388
        %4872 = vst.msk [vmem:[%s137 + $0x1d8] sm:$0x3] %vm4635, %v2379
        %4873 = vst.msk [vmem:[%s137 + $0x1da] sm:$0x3] %vm4635, %v2389
        %4874 = vst.msk [vmem:[%s137 + $0x1dc] sm:$0x3] %vm4635, %v2386
        %4875 = vst.msk [vmem:[%s137 + $0x1de] sm:$0x3] %vm4635, %v2390
        %4876 = vst.msk [vmem:[%s137 + $0x1e0] sm:$0x3] %vm4635, %v2429
        %4877 = vst.msk [vmem:[%s137 + $0x1e2] sm:$0x3] %vm4635, %v2453
        %4878 = vst.msk [vmem:[%s137 + $0x1e4] sm:$0x3] %vm4635, %v2436
        %4879 = vst.msk [vmem:[%s137 + $0x1e6] sm:$0x3] %vm4635, %v2454
        %4880 = vst.msk [vmem:[%s137 + $0x1e8] sm:$0x3] %vm4635, %v2445
        %4881 = vst.msk [vmem:[%s137 + $0x1ea] sm:$0x3] %vm4635, %v2455
        %4882 = vst.msk [vmem:[%s137 + $0x1ec] sm:$0x3] %vm4635, %v2452
        %4883 = vst.msk [vmem:[%s137 + $0x1ee] sm:$0x3] %vm4635, %v2456
        %4884 = vst.msk [vmem:[%s137 + $0x1f0] sm:$0x3] %vm4635, %v2495
        %4885 = vst.msk [vmem:[%s137 + $0x1f2] sm:$0x3] %vm4635, %v2519
        %4886 = vst.msk [vmem:[%s137 + $0x1f4] sm:$0x3] %vm4635, %v2502
        %4887 = vst.msk [vmem:[%s137 + $0x1f6] sm:$0x3] %vm4635, %v2520
        %4888 = vst.msk [vmem:[%s137 + $0x1f8] sm:$0x3] %vm4635, %v2511
        %4889 = vst.msk [vmem:[%s137 + $0x1fa] sm:$0x3] %vm4635, %v2521
        %4890 = vst.msk [vmem:[%s137 + $0x1fc] sm:$0x3] %vm4635, %v2518
        %4891 = vst.msk [vmem:[%s137 + $0x1fe] sm:$0x3] %vm4635, %v2522
        %4892 = vst.msk [vmem:[%s137 + $0x200] sm:$0x3] %vm4635, %v2561
        %4893 = vst.msk [vmem:[%s137 + $0x202] sm:$0x3] %vm4635, %v2585
        %4894 = vst.msk [vmem:[%s137 + $0x204] sm:$0x3] %vm4635, %v2568
        %4895 = vst.msk [vmem:[%s137 + $0x206] sm:$0x3] %vm4635, %v2586
        %4896 = vst.msk [vmem:[%s137 + $0x208] sm:$0x3] %vm4635, %v2577
        %4897 = vst.msk [vmem:[%s137 + $0x20a] sm:$0x3] %vm4635, %v2587
        %4898 = vst.msk [vmem:[%s137 + $0x20c] sm:$0x3] %vm4635, %v2584
        %4899 = vst.msk [vmem:[%s137 + $0x20e] sm:$0x3] %vm4635, %v2588
        %4900 = vst.msk [vmem:[%s137 + $0x210] sm:$0x3] %vm4635, %v2627
        %4901 = vst.msk [vmem:[%s137 + $0x212] sm:$0x3] %vm4635, %v2651
        %4902 = vst.msk [vmem:[%s137 + $0x214] sm:$0x3] %vm4635, %v2634
        %4903 = vst.msk [vmem:[%s137 + $0x216] sm:$0x3] %vm4635, %v2652
        %4904 = vst.msk [vmem:[%s137 + $0x218] sm:$0x3] %vm4635, %v2643
        %4905 = vst.msk [vmem:[%s137 + $0x21a] sm:$0x3] %vm4635, %v2653
        %4906 = vst.msk [vmem:[%s137 + $0x21c] sm:$0x3] %vm4635, %v2650
        %4907 = vst.msk [vmem:[%s137 + $0x21e] sm:$0x3] %vm4635, %v2654
        %4908 = vst.msk [vmem:[%s137 + $0x220] sm:$0x3] %vm4635, %v2693
        %4909 = vst.msk [vmem:[%s137 + $0x222] sm:$0x3] %vm4635, %v2717
        %4910 = vst.msk [vmem:[%s137 + $0x224] sm:$0x3] %vm4635, %v2700
        %4911 = vst.msk [vmem:[%s137 + $0x226] sm:$0x3] %vm4635, %v2718
        %4912 = vst.msk [vmem:[%s137 + $0x228] sm:$0x3] %vm4635, %v2709
        %4913 = vst.msk [vmem:[%s137 + $0x22a] sm:$0x3] %vm4635, %v2719
        %4914 = vst.msk [vmem:[%s137 + $0x22c] sm:$0x3] %vm4635, %v2716
        %4915 = vst.msk [vmem:[%s137 + $0x22e] sm:$0x3] %vm4635, %v2720
        %4916 = vst.msk [vmem:[%s137 + $0x230] sm:$0x3] %vm4635, %v2759
        %4917 = vst.msk [vmem:[%s137 + $0x232] sm:$0x3] %vm4635, %v2783
        %4918 = vst.msk [vmem:[%s137 + $0x234] sm:$0x3] %vm4635, %v2766
        %4919 = vst.msk [vmem:[%s137 + $0x236] sm:$0x3] %vm4635, %v2784
        %4920 = vst.msk [vmem:[%s137 + $0x238] sm:$0x3] %vm4635, %v2775
        %4921 = vst.msk [vmem:[%s137 + $0x23a] sm:$0x3] %vm4635, %v2785
        %4922 = vst.msk [vmem:[%s137 + $0x23c] sm:$0x3] %vm4635, %v2782
        %4923 = vst.msk [vmem:[%s137 + $0x23e] sm:$0x3] %vm4635, %v2786
        %4924 = vst.msk [vmem:[%s137 + $0x240] sm:$0x3] %vm4635, %v2825
        %4925 = vst.msk [vmem:[%s137 + $0x242] sm:$0x3] %vm4635, %v2849
        %4926 = vst.msk [vmem:[%s137 + $0x244] sm:$0x3] %vm4635, %v2832
        %4927 = vst.msk [vmem:[%s137 + $0x246] sm:$0x3] %vm4635, %v2850
        %4928 = vst.msk [vmem:[%s137 + $0x248] sm:$0x3] %vm4635, %v2841
        %4929 = vst.msk [vmem:[%s137 + $0x24a] sm:$0x3] %vm4635, %v2851
        %4930 = vst.msk [vmem:[%s137 + $0x24c] sm:$0x3] %vm4635, %v2848
        %4931 = vst.msk [vmem:[%s137 + $0x24e] sm:$0x3] %vm4635, %v2852
        %4932 = vst.msk [vmem:[%s137 + $0x250] sm:$0x3] %vm4635, %v2891
        %4933 = vst.msk [vmem:[%s137 + $0x252] sm:$0x3] %vm4635, %v2915
        %4934 = vst.msk [vmem:[%s137 + $0x254] sm:$0x3] %vm4635, %v2898
        %4935 = vst.msk [vmem:[%s137 + $0x256] sm:$0x3] %vm4635, %v2916
        %4936 = vst.msk [vmem:[%s137 + $0x258] sm:$0x3] %vm4635, %v2907
        %4937 = vst.msk [vmem:[%s137 + $0x25a] sm:$0x3] %vm4635, %v2917
        %4938 = vst.msk [vmem:[%s137 + $0x25c] sm:$0x3] %vm4635, %v2914
        %4939 = vst.msk [vmem:[%s137 + $0x25e] sm:$0x3] %vm4635, %v2918
        %4940 = vst.msk [vmem:[%s137 + $0x260] sm:$0x3] %vm4635, %v2957
        %4941 = vst.msk [vmem:[%s137 + $0x262] sm:$0x3] %vm4635, %v2981
        %4942 = vst.msk [vmem:[%s137 + $0x264] sm:$0x3] %vm4635, %v2964
        %4943 = vst.msk [vmem:[%s137 + $0x266] sm:$0x3] %vm4635, %v2982
        %4944 = vst.msk [vmem:[%s137 + $0x268] sm:$0x3] %vm4635, %v2973
        %4945 = vst.msk [vmem:[%s137 + $0x26a] sm:$0x3] %vm4635, %v2983
        %4946 = vst.msk [vmem:[%s137 + $0x26c] sm:$0x3] %vm4635, %v2980
        %4947 = vst.msk [vmem:[%s137 + $0x26e] sm:$0x3] %vm4635, %v2984
        %4948 = vst.msk [vmem:[%s137 + $0x270] sm:$0x3] %vm4635, %v3023
        %4949 = vst.msk [vmem:[%s137 + $0x272] sm:$0x3] %vm4635, %v3047
        %4950 = vst.msk [vmem:[%s137 + $0x274] sm:$0x3] %vm4635, %v3030
        %4951 = vst.msk [vmem:[%s137 + $0x276] sm:$0x3] %vm4635, %v3048
        %4952 = vst.msk [vmem:[%s137 + $0x278] sm:$0x3] %vm4635, %v3039
        %4953 = vst.msk [vmem:[%s137 + $0x27a] sm:$0x3] %vm4635, %v3049
        %4954 = vst.msk [vmem:[%s137 + $0x27c] sm:$0x3] %vm4635, %v3046
        %4955 = vst.msk [vmem:[%s137 + $0x27e] sm:$0x3] %vm4635, %v3050
        %4956 = vst.msk [vmem:[%s137 + $0x280] sm:$0x3] %vm4635, %v3089
        %4957 = vst.msk [vmem:[%s137 + $0x282] sm:$0x3] %vm4635, %v3113
        %4958 = vst.msk [vmem:[%s137 + $0x284] sm:$0x3] %vm4635, %v3096
        %4959 = vst.msk [vmem:[%s137 + $0x286] sm:$0x3] %vm4635, %v3114
        %4960 = vst.msk [vmem:[%s137 + $0x288] sm:$0x3] %vm4635, %v3105
        %4961 = vst.msk [vmem:[%s137 + $0x28a] sm:$0x3] %vm4635, %v3115
        %4962 = vst.msk [vmem:[%s137 + $0x28c] sm:$0x3] %vm4635, %v3112
        %4963 = vst.msk [vmem:[%s137 + $0x28e] sm:$0x3] %vm4635, %v3116
        %4964 = vst.msk [vmem:[%s137 + $0x290] sm:$0x3] %vm4635, %v3155
        %4965 = vst.msk [vmem:[%s137 + $0x292] sm:$0x3] %vm4635, %v3179
        %4966 = vst.msk [vmem:[%s137 + $0x294] sm:$0x3] %vm4635, %v3162
        %4967 = vst.msk [vmem:[%s137 + $0x296] sm:$0x3] %vm4635, %v3180
        %4968 = vst.msk [vmem:[%s137 + $0x298] sm:$0x3] %vm4635, %v3171
        %4969 = vst.msk [vmem:[%s137 + $0x29a] sm:$0x3] %vm4635, %v3181
        %4970 = vst.msk [vmem:[%s137 + $0x29c] sm:$0x3] %vm4635, %v3178
        %4971 = vst.msk [vmem:[%s137 + $0x29e] sm:$0x3] %vm4635, %v3182
        %4972 = vst.msk [vmem:[%s137 + $0x2a0] sm:$0x3] %vm4635, %v3221
        %4973 = vst.msk [vmem:[%s137 + $0x2a2] sm:$0x3] %vm4635, %v3245
        %4974 = vst.msk [vmem:[%s137 + $0x2a4] sm:$0x3] %vm4635, %v3228
        %4975 = vst.msk [vmem:[%s137 + $0x2a6] sm:$0x3] %vm4635, %v3246
        %4976 = vst.msk [vmem:[%s137 + $0x2a8] sm:$0x3] %vm4635, %v3237
        %4977 = vst.msk [vmem:[%s137 + $0x2aa] sm:$0x3] %vm4635, %v3247
        %4978 = vst.msk [vmem:[%s137 + $0x2ac] sm:$0x3] %vm4635, %v3244
        %4979 = vst.msk [vmem:[%s137 + $0x2ae] sm:$0x3] %vm4635, %v3248
        %4980 = vst.msk [vmem:[%s137 + $0x2b0] sm:$0x3] %vm4635, %v3287
        %4981 = vst.msk [vmem:[%s137 + $0x2b2] sm:$0x3] %vm4635, %v3311
        %4982 = vst.msk [vmem:[%s137 + $0x2b4] sm:$0x3] %vm4635, %v3294
        %4983 = vst.msk [vmem:[%s137 + $0x2b6] sm:$0x3] %vm4635, %v3312
        %4984 = vst.msk [vmem:[%s137 + $0x2b8] sm:$0x3] %vm4635, %v3303
        %4985 = vst.msk [vmem:[%s137 + $0x2ba] sm:$0x3] %vm4635, %v3313
        %4986 = vst.msk [vmem:[%s137 + $0x2bc] sm:$0x3] %vm4635, %v3310
        %4987 = vst.msk [vmem:[%s137 + $0x2be] sm:$0x3] %vm4635, %v3314
        %4988 = vst.msk [vmem:[%s137 + $0x2c0] sm:$0x3] %vm4635, %v3353
        %4989 = vst.msk [vmem:[%s137 + $0x2c2] sm:$0x3] %vm4635, %v3377
        %4990 = vst.msk [vmem:[%s137 + $0x2c4] sm:$0x3] %vm4635, %v3360
        %4991 = vst.msk [vmem:[%s137 + $0x2c6] sm:$0x3] %vm4635, %v3378
        %4992 = vst.msk [vmem:[%s137 + $0x2c8] sm:$0x3] %vm4635, %v3369
        %4993 = vst.msk [vmem:[%s137 + $0x2ca] sm:$0x3] %vm4635, %v3379
        %4994 = vst.msk [vmem:[%s137 + $0x2cc] sm:$0x3] %vm4635, %v3376
        %4995 = vst.msk [vmem:[%s137 + $0x2ce] sm:$0x3] %vm4635, %v3380
        %4996 = vst.msk [vmem:[%s137 + $0x2d0] sm:$0x3] %vm4635, %v3419
        %4997 = vst.msk [vmem:[%s137 + $0x2d2] sm:$0x3] %vm4635, %v3443
        %4998 = vst.msk [vmem:[%s137 + $0x2d4] sm:$0x3] %vm4635, %v3426
        %4999 = vst.msk [vmem:[%s137 + $0x2d6] sm:$0x3] %vm4635, %v3444
        %5000 = vst.msk [vmem:[%s137 + $0x2d8] sm:$0x3] %vm4635, %v3435
        %5001 = vst.msk [vmem:[%s137 + $0x2da] sm:$0x3] %vm4635, %v3445
        %5002 = vst.msk [vmem:[%s137 + $0x2dc] sm:$0x3] %vm4635, %v3442
        %5003 = vst.msk [vmem:[%s137 + $0x2de] sm:$0x3] %vm4635, %v3446
        %5004 = vst.msk [vmem:[%s137 + $0x2e0] sm:$0x3] %vm4635, %v3485
        %5005 = vst.msk [vmem:[%s137 + $0x2e2] sm:$0x3] %vm4635, %v3509
        %5006 = vst.msk [vmem:[%s137 + $0x2e4] sm:$0x3] %vm4635, %v3492
        %5007 = vst.msk [vmem:[%s137 + $0x2e6] sm:$0x3] %vm4635, %v3510
        %5008 = vst.msk [vmem:[%s137 + $0x2e8] sm:$0x3] %vm4635, %v3501
        %5009 = vst.msk [vmem:[%s137 + $0x2ea] sm:$0x3] %vm4635, %v3511
        %5010 = vst.msk [vmem:[%s137 + $0x2ec] sm:$0x3] %vm4635, %v3508
        %5011 = vst.msk [vmem:[%s137 + $0x2ee] sm:$0x3] %vm4635, %v3512
        %5012 = vst.msk [vmem:[%s137 + $0x2f0] sm:$0x3] %vm4635, %v3551
        %5013 = vst.msk [vmem:[%s137 + $0x2f2] sm:$0x3] %vm4635, %v3575
        %5014 = vst.msk [vmem:[%s137 + $0x2f4] sm:$0x3] %vm4635, %v3558
        %5015 = vst.msk [vmem:[%s137 + $0x2f6] sm:$0x3] %vm4635, %v3576
        %5016 = vst.msk [vmem:[%s137 + $0x2f8] sm:$0x3] %vm4635, %v3567
        %5017 = vst.msk [vmem:[%s137 + $0x2fa] sm:$0x3] %vm4635, %v3577
        %5018 = vst.msk [vmem:[%s137 + $0x2fc] sm:$0x3] %vm4635, %v3574
        %5019 = vst.msk [vmem:[%s137 + $0x2fe] sm:$0x3] %vm4635, %v3578
        %5020 = vst.msk [vmem:[%s137 + $0x300] sm:$0x3] %vm4635, %v3617
        %5021 = vst.msk [vmem:[%s137 + $0x302] sm:$0x3] %vm4635, %v3641
        %5022 = vst.msk [vmem:[%s137 + $0x304] sm:$0x3] %vm4635, %v3624
        %5023 = vst.msk [vmem:[%s137 + $0x306] sm:$0x3] %vm4635, %v3642
        %5024 = vst.msk [vmem:[%s137 + $0x308] sm:$0x3] %vm4635, %v3633
        %5025 = vst.msk [vmem:[%s137 + $0x30a] sm:$0x3] %vm4635, %v3643
        %5026 = vst.msk [vmem:[%s137 + $0x30c] sm:$0x3] %vm4635, %v3640
        %5027 = vst.msk [vmem:[%s137 + $0x30e] sm:$0x3] %vm4635, %v3644
        %5028 = vst.msk [vmem:[%s137 + $0x310] sm:$0x3] %vm4635, %v3683
        %5029 = vst.msk [vmem:[%s137 + $0x312] sm:$0x3] %vm4635, %v3707
        %5030 = vst.msk [vmem:[%s137 + $0x314] sm:$0x3] %vm4635, %v3690
        %5031 = vst.msk [vmem:[%s137 + $0x316] sm:$0x3] %vm4635, %v3708
        %5032 = vst.msk [vmem:[%s137 + $0x318] sm:$0x3] %vm4635, %v3699
        %5033 = vst.msk [vmem:[%s137 + $0x31a] sm:$0x3] %vm4635, %v3709
        %5034 = vst.msk [vmem:[%s137 + $0x31c] sm:$0x3] %vm4635, %v3706
        %5035 = vst.msk [vmem:[%s137 + $0x31e] sm:$0x3] %vm4635, %v3710
        %5036 = vst.msk [vmem:[%s137 + $0x320] sm:$0x3] %vm4635, %v3749
        %5037 = vst.msk [vmem:[%s137 + $0x322] sm:$0x3] %vm4635, %v3773
        %5038 = vst.msk [vmem:[%s137 + $0x324] sm:$0x3] %vm4635, %v3756
        %5039 = vst.msk [vmem:[%s137 + $0x326] sm:$0x3] %vm4635, %v3774
        %5040 = vst.msk [vmem:[%s137 + $0x328] sm:$0x3] %vm4635, %v3765
        %5041 = vst.msk [vmem:[%s137 + $0x32a] sm:$0x3] %vm4635, %v3775
        %5042 = vst.msk [vmem:[%s137 + $0x32c] sm:$0x3] %vm4635, %v3772
        %5043 = vst.msk [vmem:[%s137 + $0x32e] sm:$0x3] %vm4635, %v3776
        %5044 = vst.msk [vmem:[%s137 + $0x330] sm:$0x3] %vm4635, %v3815
        %5045 = vst.msk [vmem:[%s137 + $0x332] sm:$0x3] %vm4635, %v3839
        %5046 = vst.msk [vmem:[%s137 + $0x334] sm:$0x3] %vm4635, %v3822
        %5047 = vst.msk [vmem:[%s137 + $0x336] sm:$0x3] %vm4635, %v3840
        %5048 = vst.msk [vmem:[%s137 + $0x338] sm:$0x3] %vm4635, %v3831
        %5049 = vst.msk [vmem:[%s137 + $0x33a] sm:$0x3] %vm4635, %v3841
        %5050 = vst.msk [vmem:[%s137 + $0x33c] sm:$0x3] %vm4635, %v3838
        %5051 = vst.msk [vmem:[%s137 + $0x33e] sm:$0x3] %vm4635, %v3842
        %5052 = vst.msk [vmem:[%s137 + $0x340] sm:$0x3] %vm4635, %v3881
        %5053 = vst.msk [vmem:[%s137 + $0x342] sm:$0x3] %vm4635, %v3905
        %5054 = vst.msk [vmem:[%s137 + $0x344] sm:$0x3] %vm4635, %v3888
        %5055 = vst.msk [vmem:[%s137 + $0x346] sm:$0x3] %vm4635, %v3906
        %5056 = vst.msk [vmem:[%s137 + $0x348] sm:$0x3] %vm4635, %v3897
        %5057 = vst.msk [vmem:[%s137 + $0x34a] sm:$0x3] %vm4635, %v3907
        %5058 = vst.msk [vmem:[%s137 + $0x34c] sm:$0x3] %vm4635, %v3904
        %5059 = vst.msk [vmem:[%s137 + $0x34e] sm:$0x3] %vm4635, %v3908
        %5060 = vst.msk [vmem:[%s137 + $0x350] sm:$0x3] %vm4635, %v3947
        %5061 = vst.msk [vmem:[%s137 + $0x352] sm:$0x3] %vm4635, %v3971
        %5062 = vst.msk [vmem:[%s137 + $0x354] sm:$0x3] %vm4635, %v3954
        %5063 = vst.msk [vmem:[%s137 + $0x356] sm:$0x3] %vm4635, %v3972
        %5064 = vst.msk [vmem:[%s137 + $0x358] sm:$0x3] %vm4635, %v3963
        %5065 = vst.msk [vmem:[%s137 + $0x35a] sm:$0x3] %vm4635, %v3973
        %5066 = vst.msk [vmem:[%s137 + $0x35c] sm:$0x3] %vm4635, %v3970
        %5067 = vst.msk [vmem:[%s137 + $0x35e] sm:$0x3] %vm4635, %v3974
        %5068 = vst.msk [vmem:[%s137 + $0x360] sm:$0x3] %vm4635, %v4013
        %5069 = vst.msk [vmem:[%s137 + $0x362] sm:$0x3] %vm4635, %v4037
        %5070 = vst.msk [vmem:[%s137 + $0x364] sm:$0x3] %vm4635, %v4020
        %5071 = vst.msk [vmem:[%s137 + $0x366] sm:$0x3] %vm4635, %v4038
        %5072 = vst.msk [vmem:[%s137 + $0x368] sm:$0x3] %vm4635, %v4029
        %5073 = vst.msk [vmem:[%s137 + $0x36a] sm:$0x3] %vm4635, %v4039
        %5074 = vst.msk [vmem:[%s137 + $0x36c] sm:$0x3] %vm4635, %v4036
        %5075 = vst.msk [vmem:[%s137 + $0x36e] sm:$0x3] %vm4635, %v4040
        %5076 = vst.msk [vmem:[%s137 + $0x370] sm:$0x3] %vm4635, %v4079
        %5077 = vst.msk [vmem:[%s137 + $0x372] sm:$0x3] %vm4635, %v4103
        %5078 = vst.msk [vmem:[%s137 + $0x374] sm:$0x3] %vm4635, %v4086
        %5079 = vst.msk [vmem:[%s137 + $0x376] sm:$0x3] %vm4635, %v4104
        %5080 = vst.msk [vmem:[%s137 + $0x378] sm:$0x3] %vm4635, %v4095
        %5081 = vst.msk [vmem:[%s137 + $0x37a] sm:$0x3] %vm4635, %v4105
        %5082 = vst.msk [vmem:[%s137 + $0x37c] sm:$0x3] %vm4635, %v4102
        %5083 = vst.msk [vmem:[%s137 + $0x37e] sm:$0x3] %vm4635, %v4106
        %5084 = vst.msk [vmem:[%s137 + $0x380] sm:$0x3] %vm4635, %v4145
        %5085 = vst.msk [vmem:[%s137 + $0x382] sm:$0x3] %vm4635, %v4169
        %5086 = vst.msk [vmem:[%s137 + $0x384] sm:$0x3] %vm4635, %v4152
        %5087 = vst.msk [vmem:[%s137 + $0x386] sm:$0x3] %vm4635, %v4170
        %5088 = vst.msk [vmem:[%s137 + $0x388] sm:$0x3] %vm4635, %v4161
        %5089 = vst.msk [vmem:[%s137 + $0x38a] sm:$0x3] %vm4635, %v4171
        %5090 = vst.msk [vmem:[%s137 + $0x38c] sm:$0x3] %vm4635, %v4168
        %5091 = vst.msk [vmem:[%s137 + $0x38e] sm:$0x3] %vm4635, %v4172
        %5092 = vst.msk [vmem:[%s137 + $0x390] sm:$0x3] %vm4635, %v4211
        %5093 = vst.msk [vmem:[%s137 + $0x392] sm:$0x3] %vm4635, %v4235
        %5094 = vst.msk [vmem:[%s137 + $0x394] sm:$0x3] %vm4635, %v4218
        %5095 = vst.msk [vmem:[%s137 + $0x396] sm:$0x3] %vm4635, %v4236
        %5096 = vst.msk [vmem:[%s137 + $0x398] sm:$0x3] %vm4635, %v4227
        %5097 = vst.msk [vmem:[%s137 + $0x39a] sm:$0x3] %vm4635, %v4237
        %5098 = vst.msk [vmem:[%s137 + $0x39c] sm:$0x3] %vm4635, %v4234
        %5099 = vst.msk [vmem:[%s137 + $0x39e] sm:$0x3] %vm4635, %v4238
        %5100 = vst.msk [vmem:[%s137 + $0x3a0] sm:$0x3] %vm4635, %v4277
        %5101 = vst.msk [vmem:[%s137 + $0x3a2] sm:$0x3] %vm4635, %v4301
        %5102 = vst.msk [vmem:[%s137 + $0x3a4] sm:$0x3] %vm4635, %v4284
        %5103 = vst.msk [vmem:[%s137 + $0x3a6] sm:$0x3] %vm4635, %v4302
        %5104 = vst.msk [vmem:[%s137 + $0x3a8] sm:$0x3] %vm4635, %v4293
        %5105 = vst.msk [vmem:[%s137 + $0x3aa] sm:$0x3] %vm4635, %v4303
        %5106 = vst.msk [vmem:[%s137 + $0x3ac] sm:$0x3] %vm4635, %v4300
        %5107 = vst.msk [vmem:[%s137 + $0x3ae] sm:$0x3] %vm4635, %v4304
        %5108 = vst.msk [vmem:[%s137 + $0x3b0] sm:$0x3] %vm4635, %v4343
        %5109 = vst.msk [vmem:[%s137 + $0x3b2] sm:$0x3] %vm4635, %v4367
        %5110 = vst.msk [vmem:[%s137 + $0x3b4] sm:$0x3] %vm4635, %v4350
        %5111 = vst.msk [vmem:[%s137 + $0x3b6] sm:$0x3] %vm4635, %v4368
        %5112 = vst.msk [vmem:[%s137 + $0x3b8] sm:$0x3] %vm4635, %v4359
        %5113 = vst.msk [vmem:[%s137 + $0x3ba] sm:$0x3] %vm4635, %v4369
        %5114 = vst.msk [vmem:[%s137 + $0x3bc] sm:$0x3] %vm4635, %v4366
        %5115 = vst.msk [vmem:[%s137 + $0x3be] sm:$0x3] %vm4635, %v4370
        %5116 = vst.msk [vmem:[%s137 + $0x3c0] sm:$0x3] %vm4635, %v4409
        %5117 = vst.msk [vmem:[%s137 + $0x3c2] sm:$0x3] %vm4635, %v4433
        %5118 = vst.msk [vmem:[%s137 + $0x3c4] sm:$0x3] %vm4635, %v4416
        %5119 = vst.msk [vmem:[%s137 + $0x3c6] sm:$0x3] %vm4635, %v4434
        %5120 = vst.msk [vmem:[%s137 + $0x3c8] sm:$0x3] %vm4635, %v4425
        %5121 = vst.msk [vmem:[%s137 + $0x3ca] sm:$0x3] %vm4635, %v4435
        %5122 = vst.msk [vmem:[%s137 + $0x3cc] sm:$0x3] %vm4635, %v4432
        %5123 = vst.msk [vmem:[%s137 + $0x3ce] sm:$0x3] %vm4635, %v4436
        %5124 = vst.msk [vmem:[%s137 + $0x3d0] sm:$0x3] %vm4635, %v4475
        %5125 = vst.msk [vmem:[%s137 + $0x3d2] sm:$0x3] %vm4635, %v4499
        %5126 = vst.msk [vmem:[%s137 + $0x3d4] sm:$0x3] %vm4635, %v4482
        %5127 = vst.msk [vmem:[%s137 + $0x3d6] sm:$0x3] %vm4635, %v4500
        %5128 = vst.msk [vmem:[%s137 + $0x3d8] sm:$0x3] %vm4635, %v4491
        %5129 = vst.msk [vmem:[%s137 + $0x3da] sm:$0x3] %vm4635, %v4501
        %5130 = vst.msk [vmem:[%s137 + $0x3dc] sm:$0x3] %vm4635, %v4498
        %5131 = vst.msk [vmem:[%s137 + $0x3de] sm:$0x3] %vm4635, %v4502
        %5132 = vst.msk [vmem:[%s137 + $0x3e0] sm:$0x3] %vm4635, %v4541
        %5133 = vst.msk [vmem:[%s137 + $0x3e2] sm:$0x3] %vm4635, %v4565
        %5134 = vst.msk [vmem:[%s137 + $0x3e4] sm:$0x3] %vm4635, %v4548
        %5135 = vst.msk [vmem:[%s137 + $0x3e6] sm:$0x3] %vm4635, %v4566
        %5136 = vst.msk [vmem:[%s137 + $0x3e8] sm:$0x3] %vm4635, %v4557
        %5137 = vst.msk [vmem:[%s137 + $0x3ea] sm:$0x3] %vm4635, %v4567
        %5138 = vst.msk [vmem:[%s137 + $0x3ec] sm:$0x3] %vm4635, %v4564
        %5139 = vst.msk [vmem:[%s137 + $0x3ee] sm:$0x3] %vm4635, %v4568
        %5140 = vst.msk [vmem:[%s137 + $0x3f0] sm:$0x3] %vm4635, %v4607
        %5141 = vst.msk [vmem:[%s137 + $0x3f2] sm:$0x3] %vm4635, %v4631
        %5142 = vst.msk [vmem:[%s137 + $0x3f4] sm:$0x3] %vm4635, %v4614
        %5143 = vst.msk [vmem:[%s137 + $0x3f6] sm:$0x3] %vm4635, %v4632
        %5144 = vst.msk [vmem:[%s137 + $0x3f8] sm:$0x3] %vm4635, %v4623
        %5145 = vst.msk [vmem:[%s137 + $0x3fa] sm:$0x3] %vm4635, %v4633
        %5146 = vst.msk [vmem:[%s137 + $0x3fc] sm:$0x3] %vm4635, %v4630
        %5147 = vst.msk [vmem:[%s137 + $0x3fe] sm:$0x3] %vm4635, %v4634
        %s5148 = smul.u32 512, %s15
        %p5149 = scmp.lt.s32.totalorder %s5148, 1023
        %s5150 = scalar_select %p5149, %s5148, 1023
        %s5151 = smul.addr %s5150, 2
        %s5152 = scalar_lea.vmem %s1, %s5151
        // Predicated region
        $region29: #{tpu_custom_call.1} parent=23 // pred_check
          %p5153 = pneg %p59
        $region30: #{tpu_custom_call.1} parent=23 // pred_check_branch
          %5155 = sbr.rel (%p5153) target = $region32
        $region31: #{tpu_custom_call.1} parent=23 // pred_region
          %s5156 = smul.u32 512, %s15
        $region32: #{tpu_custom_call.1} parent=23 // pred_fallthru
          _
      $region24: #{tpu_custom_call.1} parent=5 // pred_fallthru
        _
      %p5157 = scmp.le.s32.totalorder 2, %s10
      // Predicated region
      $region33: #{tpu_custom_call.1} parent=5 // pred_check
        %p5158 = pneg %p5157
      $region34: #{tpu_custom_call.1} parent=5 // pred_check_branch
        %5160 = sbr.rel (%p5158) target = $region36
      $region35: #{tpu_custom_call.1} parent=5 // pred_region
        %s5161 = ssub.s32 %s10, 2
        // Predicated region
        $region37: #{tpu_custom_call.1} parent=35 // pred_check
          %p5162 = pneg %p65
        $region38: #{tpu_custom_call.1} parent=35 // pred_check_branch
          %5164 = sbr.rel (%p5162) target = $region40
        $region39: #{tpu_custom_call.1} parent=35 // pred_region
          %s5165 = smul.u32 512, %s16
          %p5166 = scmp.lt.s32.totalorder %s5165, 1023
          %s5167 = scalar_select %p5166, %s5165, 1023
          %s5168 = smul.addr %s5167, 2
          %s5169 = scalar_lea.vmem %s1, %s5168
        $region40: #{tpu_custom_call.1} parent=35 // pred_fallthru
          _
      $region36: #{tpu_custom_call.1} parent=5 // pred_fallthru
        _
    $region6: #{tpu_custom_call.1} parent=1 // loop_footer
      %s14 = sadd.s32 1, %s10
    $region7: #{tpu_custom_call.1} parent=1 // loop_footer_branch
      %9 = sbr.rel target = $region3
    $region8: #{tpu_custom_call.1} parent=1 // loop_exit
      _
    %5170 = vsyncpa [#allocation3], 1
    %s5171 = scalar_lea.sflag [#allocation3], 1
    %5172 = vsyncpa %s5171, 1

</llo_original>
